<compile_context>
chip_gen: v6e
topology: v6e:2x2x1
jax: 0.10.0
libtpu: 0.0.40
codegen_flags: <defaults>
</compile_context>

<pallas_src>
import functools

import jax
import jax.numpy as jnp
from jax.experimental import pallas as pl
from jax.experimental.pallas import tpu as pltpu  # noqa: F401  (kept for TPU-specific tuning hooks)

EMBEDDING_SIZE_FIRST = 128
HIDDEN_SHAPE_SECOND = 64
HIDDEN_DIM = 64
LAYER_DIM = 2


# ----------------------------------------------------------------------------
# Fused kernel
# ----------------------------------------------------------------------------
def _gru_layer_scan(gi_all, wh, bh, h, *, T, B, H):
    """Recurrence for one GRU layer.

    gi_all: (T*B, 3H) precomputed x-side projections (x@Wi + bi), time-major.
    wh:     (H, 3H) concatenated hidden weights [r|z|n].
    bh:     (1, 3H) concatenated hidden biases.
    h:      (B, H) initial hidden state.
    Returns (y, hT) where y is the (T*B, H) output sequence and hT the final
    hidden state.
    """
    bh_b = jnp.broadcast_to(bh, (B, 3 * H))  # hoisted broadcast (no per-step CSE)
    ys = []
    for t in range(T):  # small static T -> fully unrolled inside the kernel
        gi = gi_all[t * B:(t + 1) * B, :]                      # (B, 3H)
        gh = jnp.dot(h, wh, preferred_element_type=jnp.float32) + bh_b
        r = jax.nn.sigmoid(gi[:, :H] + gh[:, :H])
        z = jax.nn.sigmoid(gi[:, H:2 * H] + gh[:, H:2 * H])
        n = jnp.tanh(gi[:, 2 * H:] + r * gh[:, 2 * H:])
        h = (1.0 - z) * n + z * h
        ys.append(h)
    return jnp.concatenate(ys, axis=0), h


def fused_gru_forward_kernel(
    x_ref, w1_ref, b1_ref, w2_ref, b2_ref,
    wi0_ref, wh0_ref, bi0_ref, bh0_ref,
    wi1_ref, wh1_ref, bi1_ref, bh1_ref,
    wfc_ref, bfc_ref, h0_ref,
    out_ref, hT_ref,
    *, T, B, H,
):
    # ---- Embedding MLP on all packed rows: (T*B, d_in) -> (T*B, H) ----
    x = x_ref[...]
    e = jnp.maximum(
        jnp.dot(x, w1_ref[...], preferred_element_type=jnp.float32) + b1_ref[...],
        0.0,
    )
    e = jnp.dot(e, w2_ref[...], preferred_element_type=jnp.float32) + b2_ref[...]

    # ---- GRU layer 0: batched input projections, then serial recurrence ----
    gi0 = (
        jnp.dot(e, wi0_ref[...], preferred_element_type=jnp.float32) + bi0_ref[...]
    )  # (T*B, 3H)
    y0, h_l0 = _gru_layer_scan(gi0, wh0_ref[...], bh0_ref[...], h0_ref[0],
                               T=T, B=B, H=H)

    # ---- GRU layer 1 ----
    gi1 = (
        jnp.dot(y0, wi1_ref[...], preferred_element_type=jnp.float32) + bi1_ref[...]
    )  # (T*B, 3H)
    _, h_l1 = _gru_layer_scan(gi1, wh1_ref[...], bh1_ref[...], h0_ref[1],
                              T=T, B=B, H=H)

    # ---- Outputs ----
    hT_ref[0] = h_l0
    hT_ref[1] = h_l1
    out_ref[...] = (
        jnp.dot(h_l1, wfc_ref[...], preferred_element_type=jnp.float32) + bfc_ref[...]
    )


# ----------------------------------------------------------------------------
# Wrapper
# ----------------------------------------------------------------------------
@jax.jit
def gru_model_forward(x, h0, params):
    """x: (T, B, input_dim) time-major; h0: (LAYER_DIM, B, HIDDEN_DIM)."""
    T, B, d_in = x.shape
    n_actions = params["wfc"].shape[1]
    g0, g1 = params["gru"]

    kernel = functools.partial(fused_gru_forward_kernel, T=T, B=B, H=HIDDEN_DIM)
    out, h_new = pl.pallas_call(
        kernel,
        out_shape=(
            jax.ShapeDtypeStruct((B, n_actions), jnp.float32),
            jax.ShapeDtypeStruct((LAYER_DIM, B, HIDDEN_DIM), jnp.float32),
        ),
    )(
        x.reshape(T * B, d_in),
        params["w1"], params["b1"], params["w2"], params["b2"],
        g0["wi"], g0["wh"], g0["bi"], g0["bh"],
        g1["wi"], g1["wh"], g1["bi"], g1["bh"],
        params["wfc"], params["bfc"],
        h0,
    )
    return out, h_new


# ----------------------------------------------------------------------------
# Deterministic parameter init (PyTorch-style uniform(-1/sqrt(fan_in), ...))
# Gate weights are stored concatenated: wi=(d_in,3H), wh=(H,3H), bi/bh=(1,3H)
# with column order [r | z | n] (same ordering as torch.nn.GRU).
# ----------------------------------------------------------------------------
def init_params(key, input_dim, n_actions):
    keys = iter(jax.random.split(key, 64))

    def unif(shape, fan_in):
        bound = 1.0 / float(fan_in) ** 0.5
        return jax.random.uniform(next(keys), shape, jnp.float32, -bound, bound)

    params = {
        "w1": unif((input_dim, EMBEDDING_SIZE_FIRST), input_dim),
        "b1": unif((1, EMBEDDING_SIZE_FIRST), input_dim),
        "w2": unif((EMBEDDING_SIZE_FIRST, HIDDEN_SHAPE_SECOND), EMBEDDING_SIZE_FIRST),
        "b2": unif((1, HIDDEN_SHAPE_SECOND), EMBEDDING_SIZE_FIRST),
        "wfc": unif((HIDDEN_DIM, n_actions), HIDDEN_DIM),
        "bfc": unif((1, n_actions), HIDDEN_DIM),
        "gru": [],
    }
    H = HIDDEN_DIM
    for layer in range(LAYER_DIM):
        d_in = HIDDEN_SHAPE_SECOND if layer == 0 else HIDDEN_DIM
        p = {
            "wi": unif((d_in, 3 * H), H),
            "wh": unif((H, 3 * H), H),
            "bi": unif((1, 3 * H), H),
            "bh": unif((1, 3 * H), H),
        }
        params["gru"].append(p)
    return params


# ----------------------------------------------------------------------------
# Pure-JAX reference (mirrors torch.nn.GRU equations)
# ----------------------------------------------------------------------------
def ref_forward(x, h0, params):
    T, B, d_in = x.shape
    H = HIDDEN_DIM
    e = jnp.maximum(x.reshape(T * B, d_in) @ params["w1"] + params["b1"], 0.0)
    e = (e @ params["w2"] + params["b2"]).reshape(T, B, HIDDEN_SHAPE_SECOND)
    inp = e
    h_layers = []
    for layer in range(LAYER_DIM):
        p = params["gru"][layer]
        hl = h0[layer]
        outs = []
        for t in range(T):
            xt = inp[t]
            gi = xt @ p["wi"] + p["bi"]
            gh = hl @ p["wh"] + p["bh"]
            r = jax.nn.sigmoid(gi[:, :H] + gh[:, :H])
            z = jax.nn.sigmoid(gi[:, H:2 * H] + gh[:, H:2 * H])
            n = jnp.tanh(gi[:, 2 * H:] + r * gh[:, 2 * H:])
            hl = (1.0 - z) * n + z * hl
            outs.append(hl)
        inp = jnp.stack(outs, axis=0)
        h_layers.append(hl)
    hT = jnp.stack(h_layers, axis=0)
    out = h_layers[-1] @ params["wfc"] + params["bfc"]
    return out, hT


# ----------------------------------------------------------------------------
if __name__ == "__main__":
    T, B = 8, 2
    input_dim, n_actions = 16, 4

    key = jax.random.PRNGKey(0)
    kp, kx = jax.random.split(key)
    params = init_params(kp, input_dim, n_actions)

    x = jax.random.normal(kx, (T, B, input_dim), jnp.float32)
    h0 = jnp.zeros((LAYER_DIM, B, HIDDEN_DIM), jnp.float32)  # init_hidden()

    out, h_new = gru_model_forward(x, h0, params)
    out = jax.block_until_ready(out)
    h_new = jax.block_until_ready(h_new)

    out_ref, h_ref = ref_forward(x, h0, params)
    assert out.shape == (B, n_actions) and h_new.shape == (LAYER_DIM, B, HIDDEN_DIM)
    assert jnp.allclose(out, out_ref, rtol=1e-4, atol=1e-4)
    assert jnp.allclose(h_new, h_ref, rtol=1e-4, atol=1e-4)

    print("KERNEL_OK")
</pallas_src>

<mosaic_0001>
module attributes {stable_mosaic.version = 11 : i64} {
  func.func @fused_gru_forward_kernel(%arg0: memref<16x16xf32, #tpu.memory_space<vmem>>, %arg1: memref<16x128xf32, #tpu.memory_space<vmem>>, %arg2: memref<1x128xf32, #tpu.memory_space<vmem>>, %arg3: memref<128x64xf32, #tpu.memory_space<vmem>>, %arg4: memref<1x64xf32, #tpu.memory_space<vmem>>, %arg5: memref<64x192xf32, #tpu.memory_space<vmem>>, %arg6: memref<64x192xf32, #tpu.memory_space<vmem>>, %arg7: memref<1x192xf32, #tpu.memory_space<vmem>>, %arg8: memref<1x192xf32, #tpu.memory_space<vmem>>, %arg9: memref<64x192xf32, #tpu.memory_space<vmem>>, %arg10: memref<64x192xf32, #tpu.memory_space<vmem>>, %arg11: memref<1x192xf32, #tpu.memory_space<vmem>>, %arg12: memref<1x192xf32, #tpu.memory_space<vmem>>, %arg13: memref<64x4xf32, #tpu.memory_space<vmem>>, %arg14: memref<1x4xf32, #tpu.memory_space<vmem>>, %arg15: memref<2x2x64xf32, #tpu.memory_space<vmem>>, %arg16: memref<2x4xf32, #tpu.memory_space<vmem>>, %arg17: memref<2x2x64xf32, #tpu.memory_space<vmem>>) attributes {dimension_semantics = [], scalar_prefetch = 0 : i64, scratch_operands = 0 : i64, tpu.core_type = #tpu.core_type<tc>} {
    %c0 = arith.constant 0 : index
    %c0_0 = arith.constant 0 : index
    %0 = vector.load %arg0[%c0, %c0_0] : memref<16x16xf32, #tpu.memory_space<vmem>>, vector<16x16xf32>
    %c0_1 = arith.constant 0 : index
    %c0_2 = arith.constant 0 : index
    %1 = vector.load %arg1[%c0_1, %c0_2] : memref<16x128xf32, #tpu.memory_space<vmem>>, vector<16x128xf32>
    %cst = arith.constant dense<0.000000e+00> : vector<16x128xf32>
    %2 = tpu.matmul %0, %1, %cst {dimension_numbers = #tpu.dot_dimension_numbers<[1], [0], [0], [1], [0, 0, 1, 1], [], []>} : vector<16x16xf32>, vector<16x128xf32>, vector<16x128xf32> -> vector<16x128xf32>
    %c0_3 = arith.constant 0 : index
    %c0_4 = arith.constant 0 : index
    %3 = vector.load %arg2[%c0_3, %c0_4] : memref<1x128xf32, #tpu.memory_space<vmem>>, vector<1x128xf32>
    %4 = vector.broadcast %3 : vector<1x128xf32> to vector<16x128xf32>
    %5 = arith.addf %2, %4 : vector<16x128xf32>
    %cst_5 = arith.constant 0.000000e+00 : f32
    %6 = vector.broadcast %cst_5 : f32 to vector<16x128xf32>
    %7 = arith.maximumf %5, %6 : vector<16x128xf32>
    %c0_6 = arith.constant 0 : index
    %c0_7 = arith.constant 0 : index
    %8 = vector.load %arg3[%c0_6, %c0_7] : memref<128x64xf32, #tpu.memory_space<vmem>>, vector<128x64xf32>
    %cst_8 = arith.constant dense<0.000000e+00> : vector<16x64xf32>
    %9 = tpu.matmul %7, %8, %cst_8 {dimension_numbers = #tpu.dot_dimension_numbers<[1], [0], [0], [1], [0, 0, 1, 1], [], []>} : vector<16x128xf32>, vector<128x64xf32>, vector<16x64xf32> -> vector<16x64xf32>
    %c0_9 = arith.constant 0 : index
    %c0_10 = arith.constant 0 : index
    %10 = vector.load %arg4[%c0_9, %c0_10] : memref<1x64xf32, #tpu.memory_space<vmem>>, vector<1x64xf32>
    %11 = vector.broadcast %10 : vector<1x64xf32> to vector<16x64xf32>
    %12 = arith.addf %9, %11 : vector<16x64xf32>
    %c0_11 = arith.constant 0 : index
    %c0_12 = arith.constant 0 : index
    %13 = vector.load %arg5[%c0_11, %c0_12] : memref<64x192xf32, #tpu.memory_space<vmem>>, vector<64x192xf32>
    %cst_13 = arith.constant dense<0.000000e+00> : vector<16x192xf32>
    %14 = tpu.matmul %12, %13, %cst_13 {dimension_numbers = #tpu.dot_dimension_numbers<[1], [0], [0], [1], [0, 0, 1, 1], [], []>} : vector<16x64xf32>, vector<64x192xf32>, vector<16x192xf32> -> vector<16x192xf32>
    %c0_14 = arith.constant 0 : index
    %c0_15 = arith.constant 0 : index
    %15 = vector.load %arg7[%c0_14, %c0_15] : memref<1x192xf32, #tpu.memory_space<vmem>>, vector<1x192xf32>
    %16 = vector.broadcast %15 : vector<1x192xf32> to vector<16x192xf32>
    %17 = arith.addf %14, %16 : vector<16x192xf32>
    %c0_16 = arith.constant 0 : index
    %c0_17 = arith.constant 0 : index
    %18 = vector.load %arg6[%c0_16, %c0_17] : memref<64x192xf32, #tpu.memory_space<vmem>>, vector<64x192xf32>
    %c0_18 = arith.constant 0 : index
    %c0_19 = arith.constant 0 : index
    %19 = vector.load %arg8[%c0_18, %c0_19] : memref<1x192xf32, #tpu.memory_space<vmem>>, vector<1x192xf32>
    %c0_20 = arith.constant 0 : index
    %c0_21 = arith.constant 0 : index
    %c0_22 = arith.constant 0 : index
    %20 = vector.load %arg15[%c0_20, %c0_21, %c0_22] : memref<2x2x64xf32, #tpu.memory_space<vmem>>, vector<1x2x64xf32>
    %21 = vector.shape_cast %20 : vector<1x2x64xf32> to vector<2x64xf32>
    %22 = vector.shape_cast %19 : vector<1x192xf32> to vector<1x192xf32>
    %23 = vector.broadcast %22 : vector<1x192xf32> to vector<2x192xf32>
    %24 = vector.extract_strided_slice %17 {offsets = [0, 0], sizes = [2, 192], strides = [1, 1]} : vector<16x192xf32> to vector<2x192xf32>
    %cst_23 = arith.constant dense<0.000000e+00> : vector<2x192xf32>
    %25 = tpu.matmul %21, %18, %cst_23 {dimension_numbers = #tpu.dot_dimension_numbers<[1], [0], [0], [1], [0, 0, 1, 1], [], []>} : vector<2x64xf32>, vector<64x192xf32>, vector<2x192xf32> -> vector<2x192xf32>
    %26 = arith.addf %25, %23 : vector<2x192xf32>
    %27 = vector.extract_strided_slice %24 {offsets = [0, 0], sizes = [2, 64], strides = [1, 1]} : vector<2x192xf32> to vector<2x64xf32>
    %28 = vector.extract_strided_slice %26 {offsets = [0, 0], sizes = [2, 64], strides = [1, 1]} : vector<2x192xf32> to vector<2x64xf32>
    %29 = arith.addf %27, %28 : vector<2x64xf32>
    %30 = arith.negf %29 : vector<2x64xf32>
    %31 = math.exp %30 : vector<2x64xf32>
    %cst_24 = arith.constant 1.000000e+00 : f32
    %32 = vector.broadcast %cst_24 : f32 to vector<2x64xf32>
    %33 = arith.addf %32, %31 : vector<2x64xf32>
    %34 = arith.divf %32, %33 : vector<2x64xf32>
    %35 = vector.extract_strided_slice %24 {offsets = [0, 64], sizes = [2, 64], strides = [1, 1]} : vector<2x192xf32> to vector<2x64xf32>
    %36 = vector.extract_strided_slice %26 {offsets = [0, 64], sizes = [2, 64], strides = [1, 1]} : vector<2x192xf32> to vector<2x64xf32>
    %37 = arith.addf %35, %36 : vector<2x64xf32>
    %38 = arith.negf %37 : vector<2x64xf32>
    %39 = math.exp %38 : vector<2x64xf32>
    %cst_25 = arith.constant 1.000000e+00 : f32
    %40 = vector.broadcast %cst_25 : f32 to vector<2x64xf32>
    %41 = arith.addf %40, %39 : vector<2x64xf32>
    %42 = arith.divf %40, %41 : vector<2x64xf32>
    %43 = vector.extract_strided_slice %24 {offsets = [0, 128], sizes = [2, 64], strides = [1, 1]} : vector<2x192xf32> to vector<2x64xf32>
    %44 = vector.extract_strided_slice %26 {offsets = [0, 128], sizes = [2, 64], strides = [1, 1]} : vector<2x192xf32> to vector<2x64xf32>
    %45 = arith.mulf %34, %44 : vector<2x64xf32>
    %46 = arith.addf %43, %45 : vector<2x64xf32>
    %47 = math.tanh %46 : vector<2x64xf32>
    %cst_26 = arith.constant 1.000000e+00 : f32
    %48 = vector.broadcast %cst_26 : f32 to vector<2x64xf32>
    %49 = arith.subf %48, %42 : vector<2x64xf32>
    %50 = arith.mulf %49, %47 : vector<2x64xf32>
    %51 = arith.mulf %42, %21 : vector<2x64xf32>
    %52 = arith.addf %50, %51 : vector<2x64xf32>
    %53 = vector.extract_strided_slice %17 {offsets = [2, 0], sizes = [2, 192], strides = [1, 1]} : vector<16x192xf32> to vector<2x192xf32>
    %cst_27 = arith.constant dense<0.000000e+00> : vector<2x192xf32>
    %54 = tpu.matmul %52, %18, %cst_27 {dimension_numbers = #tpu.dot_dimension_numbers<[1], [0], [0], [1], [0, 0, 1, 1], [], []>} : vector<2x64xf32>, vector<64x192xf32>, vector<2x192xf32> -> vector<2x192xf32>
    %55 = arith.addf %54, %23 : vector<2x192xf32>
    %56 = vector.extract_strided_slice %53 {offsets = [0, 0], sizes = [2, 64], strides = [1, 1]} : vector<2x192xf32> to vector<2x64xf32>
    %57 = vector.extract_strided_slice %55 {offsets = [0, 0], sizes = [2, 64], strides = [1, 1]} : vector<2x192xf32> to vector<2x64xf32>
    %58 = arith.addf %56, %57 : vector<2x64xf32>
    %59 = arith.negf %58 : vector<2x64xf32>
    %60 = math.exp %59 : vector<2x64xf32>
    %cst_28 = arith.constant 1.000000e+00 : f32
    %61 = vector.broadcast %cst_28 : f32 to vector<2x64xf32>
    %62 = arith.addf %61, %60 : vector<2x64xf32>
    %63 = arith.divf %61, %62 : vector<2x64xf32>
    %64 = vector.extract_strided_slice %53 {offsets = [0, 64], sizes = [2, 64], strides = [1, 1]} : vector<2x192xf32> to vector<2x64xf32>
    %65 = vector.extract_strided_slice %55 {offsets = [0, 64], sizes = [2, 64], strides = [1, 1]} : vector<2x192xf32> to vector<2x64xf32>
    %66 = arith.addf %64, %65 : vector<2x64xf32>
    %67 = arith.negf %66 : vector<2x64xf32>
    %68 = math.exp %67 : vector<2x64xf32>
    %cst_29 = arith.constant 1.000000e+00 : f32
    %69 = vector.broadcast %cst_29 : f32 to vector<2x64xf32>
    %70 = arith.addf %69, %68 : vector<2x64xf32>
    %71 = arith.divf %69, %70 : vector<2x64xf32>
    %72 = vector.extract_strided_slice %53 {offsets = [0, 128], sizes = [2, 64], strides = [1, 1]} : vector<2x192xf32> to vector<2x64xf32>
    %73 = vector.extract_strided_slice %55 {offsets = [0, 128], sizes = [2, 64], strides = [1, 1]} : vector<2x192xf32> to vector<2x64xf32>
    %74 = arith.mulf %63, %73 : vector<2x64xf32>
    %75 = arith.addf %72, %74 : vector<2x64xf32>
    %76 = math.tanh %75 : vector<2x64xf32>
    %cst_30 = arith.constant 1.000000e+00 : f32
    %77 = vector.broadcast %cst_30 : f32 to vector<2x64xf32>
    %78 = arith.subf %77, %71 : vector<2x64xf32>
    %79 = arith.mulf %78, %76 : vector<2x64xf32>
    %80 = arith.mulf %71, %52 : vector<2x64xf32>
    %81 = arith.addf %79, %80 : vector<2x64xf32>
    %82 = vector.extract_strided_slice %17 {offsets = [4, 0], sizes = [2, 192], strides = [1, 1]} : vector<16x192xf32> to vector<2x192xf32>
    %cst_31 = arith.constant dense<0.000000e+00> : vector<2x192xf32>
    %83 = tpu.matmul %81, %18, %cst_31 {dimension_numbers = #tpu.dot_dimension_numbers<[1], [0], [0], [1], [0, 0, 1, 1], [], []>} : vector<2x64xf32>, vector<64x192xf32>, vector<2x192xf32> -> vector<2x192xf32>
    %84 = arith.addf %83, %23 : vector<2x192xf32>
    %85 = vector.extract_strided_slice %82 {offsets = [0, 0], sizes = [2, 64], strides = [1, 1]} : vector<2x192xf32> to vector<2x64xf32>
    %86 = vector.extract_strided_slice %84 {offsets = [0, 0], sizes = [2, 64], strides = [1, 1]} : vector<2x192xf32> to vector<2x64xf32>
    %87 = arith.addf %85, %86 : vector<2x64xf32>
    %88 = arith.negf %87 : vector<2x64xf32>
    %89 = math.exp %88 : vector<2x64xf32>
    %cst_32 = arith.constant 1.000000e+00 : f32
    %90 = vector.broadcast %cst_32 : f32 to vector<2x64xf32>
    %91 = arith.addf %90, %89 : vector<2x64xf32>
    %92 = arith.divf %90, %91 : vector<2x64xf32>
    %93 = vector.extract_strided_slice %82 {offsets = [0, 64], sizes = [2, 64], strides = [1, 1]} : vector<2x192xf32> to vector<2x64xf32>
    %94 = vector.extract_strided_slice %84 {offsets = [0, 64], sizes = [2, 64], strides = [1, 1]} : vector<2x192xf32> to vector<2x64xf32>
    %95 = arith.addf %93, %94 : vector<2x64xf32>
    %96 = arith.negf %95 : vector<2x64xf32>
    %97 = math.exp %96 : vector<2x64xf32>
    %cst_33 = arith.constant 1.000000e+00 : f32
    %98 = vector.broadcast %cst_33 : f32 to vector<2x64xf32>
    %99 = arith.addf %98, %97 : vector<2x64xf32>
    %100 = arith.divf %98, %99 : vector<2x64xf32>
    %101 = vector.extract_strided_slice %82 {offsets = [0, 128], sizes = [2, 64], strides = [1, 1]} : vector<2x192xf32> to vector<2x64xf32>
    %102 = vector.extract_strided_slice %84 {offsets = [0, 128], sizes = [2, 64], strides = [1, 1]} : vector<2x192xf32> to vector<2x64xf32>
    %103 = arith.mulf %92, %102 : vector<2x64xf32>
    %104 = arith.addf %101, %103 : vector<2x64xf32>
    %105 = math.tanh %104 : vector<2x64xf32>
    %cst_34 = arith.constant 1.000000e+00 : f32
    %106 = vector.broadcast %cst_34 : f32 to vector<2x64xf32>
    %107 = arith.subf %106, %100 : vector<2x64xf32>
    %108 = arith.mulf %107, %105 : vector<2x64xf32>
    %109 = arith.mulf %100, %81 : vector<2x64xf32>
    %110 = arith.addf %108, %109 : vector<2x64xf32>
    %111 = vector.extract_strided_slice %17 {offsets = [6, 0], sizes = [2, 192], strides = [1, 1]} : vector<16x192xf32> to vector<2x192xf32>
    %cst_35 = arith.constant dense<0.000000e+00> : vector<2x192xf32>
    %112 = tpu.matmul %110, %18, %cst_35 {dimension_numbers = #tpu.dot_dimension_numbers<[1], [0], [0], [1], [0, 0, 1, 1], [], []>} : vector<2x64xf32>, vector<64x192xf32>, vector<2x192xf32> -> vector<2x192xf32>
    %113 = arith.addf %112, %23 : vector<2x192xf32>
    %114 = vector.extract_strided_slice %111 {offsets = [0, 0], sizes = [2, 64], strides = [1, 1]} : vector<2x192xf32> to vector<2x64xf32>
    %115 = vector.extract_strided_slice %113 {offsets = [0, 0], sizes = [2, 64], strides = [1, 1]} : vector<2x192xf32> to vector<2x64xf32>
    %116 = arith.addf %114, %115 : vector<2x64xf32>
    %117 = arith.negf %116 : vector<2x64xf32>
    %118 = math.exp %117 : vector<2x64xf32>
    %cst_36 = arith.constant 1.000000e+00 : f32
    %119 = vector.broadcast %cst_36 : f32 to vector<2x64xf32>
    %120 = arith.addf %119, %118 : vector<2x64xf32>
    %121 = arith.divf %119, %120 : vector<2x64xf32>
    %122 = vector.extract_strided_slice %111 {offsets = [0, 64], sizes = [2, 64], strides = [1, 1]} : vector<2x192xf32> to vector<2x64xf32>
    %123 = vector.extract_strided_slice %113 {offsets = [0, 64], sizes = [2, 64], strides = [1, 1]} : vector<2x192xf32> to vector<2x64xf32>
    %124 = arith.addf %122, %123 : vector<2x64xf32>
    %125 = arith.negf %124 : vector<2x64xf32>
    %126 = math.exp %125 : vector<2x64xf32>
    %cst_37 = arith.constant 1.000000e+00 : f32
    %127 = vector.broadcast %cst_37 : f32 to vector<2x64xf32>
    %128 = arith.addf %127, %126 : vector<2x64xf32>
    %129 = arith.divf %127, %128 : vector<2x64xf32>
    %130 = vector.extract_strided_slice %111 {offsets = [0, 128], sizes = [2, 64], strides = [1, 1]} : vector<2x192xf32> to vector<2x64xf32>
    %131 = vector.extract_strided_slice %113 {offsets = [0, 128], sizes = [2, 64], strides = [1, 1]} : vector<2x192xf32> to vector<2x64xf32>
    %132 = arith.mulf %121, %131 : vector<2x64xf32>
    %133 = arith.addf %130, %132 : vector<2x64xf32>
    %134 = math.tanh %133 : vector<2x64xf32>
    %cst_38 = arith.constant 1.000000e+00 : f32
    %135 = vector.broadcast %cst_38 : f32 to vector<2x64xf32>
    %136 = arith.subf %135, %129 : vector<2x64xf32>
    %137 = arith.mulf %136, %134 : vector<2x64xf32>
    %138 = arith.mulf %129, %110 : vector<2x64xf32>
    %139 = arith.addf %137, %138 : vector<2x64xf32>
    %140 = vector.extract_strided_slice %17 {offsets = [8, 0], sizes = [2, 192], strides = [1, 1]} : vector<16x192xf32> to vector<2x192xf32>
    %cst_39 = arith.constant dense<0.000000e+00> : vector<2x192xf32>
    %141 = tpu.matmul %139, %18, %cst_39 {dimension_numbers = #tpu.dot_dimension_numbers<[1], [0], [0], [1], [0, 0, 1, 1], [], []>} : vector<2x64xf32>, vector<64x192xf32>, vector<2x192xf32> -> vector<2x192xf32>
    %142 = arith.addf %141, %23 : vector<2x192xf32>
    %143 = vector.extract_strided_slice %140 {offsets = [0, 0], sizes = [2, 64], strides = [1, 1]} : vector<2x192xf32> to vector<2x64xf32>
    %144 = vector.extract_strided_slice %142 {offsets = [0, 0], sizes = [2, 64], strides = [1, 1]} : vector<2x192xf32> to vector<2x64xf32>
    %145 = arith.addf %143, %144 : vector<2x64xf32>
    %146 = arith.negf %145 : vector<2x64xf32>
    %147 = math.exp %146 : vector<2x64xf32>
    %cst_40 = arith.constant 1.000000e+00 : f32
    %148 = vector.broadcast %cst_40 : f32 to vector<2x64xf32>
    %149 = arith.addf %148, %147 : vector<2x64xf32>
    %150 = arith.divf %148, %149 : vector<2x64xf32>
    %151 = vector.extract_strided_slice %140 {offsets = [0, 64], sizes = [2, 64], strides = [1, 1]} : vector<2x192xf32> to vector<2x64xf32>
    %152 = vector.extract_strided_slice %142 {offsets = [0, 64], sizes = [2, 64], strides = [1, 1]} : vector<2x192xf32> to vector<2x64xf32>
    %153 = arith.addf %151, %152 : vector<2x64xf32>
    %154 = arith.negf %153 : vector<2x64xf32>
    %155 = math.exp %154 : vector<2x64xf32>
    %cst_41 = arith.constant 1.000000e+00 : f32
    %156 = vector.broadcast %cst_41 : f32 to vector<2x64xf32>
    %157 = arith.addf %156, %155 : vector<2x64xf32>
    %158 = arith.divf %156, %157 : vector<2x64xf32>
    %159 = vector.extract_strided_slice %140 {offsets = [0, 128], sizes = [2, 64], strides = [1, 1]} : vector<2x192xf32> to vector<2x64xf32>
    %160 = vector.extract_strided_slice %142 {offsets = [0, 128], sizes = [2, 64], strides = [1, 1]} : vector<2x192xf32> to vector<2x64xf32>
    %161 = arith.mulf %150, %160 : vector<2x64xf32>
    %162 = arith.addf %159, %161 : vector<2x64xf32>
    %163 = math.tanh %162 : vector<2x64xf32>
    %cst_42 = arith.constant 1.000000e+00 : f32
    %164 = vector.broadcast %cst_42 : f32 to vector<2x64xf32>
    %165 = arith.subf %164, %158 : vector<2x64xf32>
    %166 = arith.mulf %165, %163 : vector<2x64xf32>
    %167 = arith.mulf %158, %139 : vector<2x64xf32>
    %168 = arith.addf %166, %167 : vector<2x64xf32>
    %169 = vector.extract_strided_slice %17 {offsets = [10, 0], sizes = [2, 192], strides = [1, 1]} : vector<16x192xf32> to vector<2x192xf32>
    %cst_43 = arith.constant dense<0.000000e+00> : vector<2x192xf32>
    %170 = tpu.matmul %168, %18, %cst_43 {dimension_numbers = #tpu.dot_dimension_numbers<[1], [0], [0], [1], [0, 0, 1, 1], [], []>} : vector<2x64xf32>, vector<64x192xf32>, vector<2x192xf32> -> vector<2x192xf32>
    %171 = arith.addf %170, %23 : vector<2x192xf32>
    %172 = vector.extract_strided_slice %169 {offsets = [0, 0], sizes = [2, 64], strides = [1, 1]} : vector<2x192xf32> to vector<2x64xf32>
    %173 = vector.extract_strided_slice %171 {offsets = [0, 0], sizes = [2, 64], strides = [1, 1]} : vector<2x192xf32> to vector<2x64xf32>
    %174 = arith.addf %172, %173 : vector<2x64xf32>
    %175 = arith.negf %174 : vector<2x64xf32>
    %176 = math.exp %175 : vector<2x64xf32>
    %cst_44 = arith.constant 1.000000e+00 : f32
    %177 = vector.broadcast %cst_44 : f32 to vector<2x64xf32>
    %178 = arith.addf %177, %176 : vector<2x64xf32>
    %179 = arith.divf %177, %178 : vector<2x64xf32>
    %180 = vector.extract_strided_slice %169 {offsets = [0, 64], sizes = [2, 64], strides = [1, 1]} : vector<2x192xf32> to vector<2x64xf32>
    %181 = vector.extract_strided_slice %171 {offsets = [0, 64], sizes = [2, 64], strides = [1, 1]} : vector<2x192xf32> to vector<2x64xf32>
    %182 = arith.addf %180, %181 : vector<2x64xf32>
    %183 = arith.negf %182 : vector<2x64xf32>
    %184 = math.exp %183 : vector<2x64xf32>
    %cst_45 = arith.constant 1.000000e+00 : f32
    %185 = vector.broadcast %cst_45 : f32 to vector<2x64xf32>
    %186 = arith.addf %185, %184 : vector<2x64xf32>
    %187 = arith.divf %185, %186 : vector<2x64xf32>
    %188 = vector.extract_strided_slice %169 {offsets = [0, 128], sizes = [2, 64], strides = [1, 1]} : vector<2x192xf32> to vector<2x64xf32>
    %189 = vector.extract_strided_slice %171 {offsets = [0, 128], sizes = [2, 64], strides = [1, 1]} : vector<2x192xf32> to vector<2x64xf32>
    %190 = arith.mulf %179, %189 : vector<2x64xf32>
    %191 = arith.addf %188, %190 : vector<2x64xf32>
    %192 = math.tanh %191 : vector<2x64xf32>
    %cst_46 = arith.constant 1.000000e+00 : f32
    %193 = vector.broadcast %cst_46 : f32 to vector<2x64xf32>
    %194 = arith.subf %193, %187 : vector<2x64xf32>
    %195 = arith.mulf %194, %192 : vector<2x64xf32>
    %196 = arith.mulf %187, %168 : vector<2x64xf32>
    %197 = arith.addf %195, %196 : vector<2x64xf32>
    %198 = vector.extract_strided_slice %17 {offsets = [12, 0], sizes = [2, 192], strides = [1, 1]} : vector<16x192xf32> to vector<2x192xf32>
    %cst_47 = arith.constant dense<0.000000e+00> : vector<2x192xf32>
    %199 = tpu.matmul %197, %18, %cst_47 {dimension_numbers = #tpu.dot_dimension_numbers<[1], [0], [0], [1], [0, 0, 1, 1], [], []>} : vector<2x64xf32>, vector<64x192xf32>, vector<2x192xf32> -> vector<2x192xf32>
    %200 = arith.addf %199, %23 : vector<2x192xf32>
    %201 = vector.extract_strided_slice %198 {offsets = [0, 0], sizes = [2, 64], strides = [1, 1]} : vector<2x192xf32> to vector<2x64xf32>
    %202 = vector.extract_strided_slice %200 {offsets = [0, 0], sizes = [2, 64], strides = [1, 1]} : vector<2x192xf32> to vector<2x64xf32>
    %203 = arith.addf %201, %202 : vector<2x64xf32>
    %204 = arith.negf %203 : vector<2x64xf32>
    %205 = math.exp %204 : vector<2x64xf32>
    %cst_48 = arith.constant 1.000000e+00 : f32
    %206 = vector.broadcast %cst_48 : f32 to vector<2x64xf32>
    %207 = arith.addf %206, %205 : vector<2x64xf32>
    %208 = arith.divf %206, %207 : vector<2x64xf32>
    %209 = vector.extract_strided_slice %198 {offsets = [0, 64], sizes = [2, 64], strides = [1, 1]} : vector<2x192xf32> to vector<2x64xf32>
    %210 = vector.extract_strided_slice %200 {offsets = [0, 64], sizes = [2, 64], strides = [1, 1]} : vector<2x192xf32> to vector<2x64xf32>
    %211 = arith.addf %209, %210 : vector<2x64xf32>
    %212 = arith.negf %211 : vector<2x64xf32>
    %213 = math.exp %212 : vector<2x64xf32>
    %cst_49 = arith.constant 1.000000e+00 : f32
    %214 = vector.broadcast %cst_49 : f32 to vector<2x64xf32>
    %215 = arith.addf %214, %213 : vector<2x64xf32>
    %216 = arith.divf %214, %215 : vector<2x64xf32>
    %217 = vector.extract_strided_slice %198 {offsets = [0, 128], sizes = [2, 64], strides = [1, 1]} : vector<2x192xf32> to vector<2x64xf32>
    %218 = vector.extract_strided_slice %200 {offsets = [0, 128], sizes = [2, 64], strides = [1, 1]} : vector<2x192xf32> to vector<2x64xf32>
    %219 = arith.mulf %208, %218 : vector<2x64xf32>
    %220 = arith.addf %217, %219 : vector<2x64xf32>
    %221 = math.tanh %220 : vector<2x64xf32>
    %cst_50 = arith.constant 1.000000e+00 : f32
    %222 = vector.broadcast %cst_50 : f32 to vector<2x64xf32>
    %223 = arith.subf %222, %216 : vector<2x64xf32>
    %224 = arith.mulf %223, %221 : vector<2x64xf32>
    %225 = arith.mulf %216, %197 : vector<2x64xf32>
    %226 = arith.addf %224, %225 : vector<2x64xf32>
    %227 = vector.extract_strided_slice %17 {offsets = [14, 0], sizes = [2, 192], strides = [1, 1]} : vector<16x192xf32> to vector<2x192xf32>
    %cst_51 = arith.constant dense<0.000000e+00> : vector<2x192xf32>
    %228 = tpu.matmul %226, %18, %cst_51 {dimension_numbers = #tpu.dot_dimension_numbers<[1], [0], [0], [1], [0, 0, 1, 1], [], []>} : vector<2x64xf32>, vector<64x192xf32>, vector<2x192xf32> -> vector<2x192xf32>
    %229 = arith.addf %228, %23 : vector<2x192xf32>
    %230 = vector.extract_strided_slice %227 {offsets = [0, 0], sizes = [2, 64], strides = [1, 1]} : vector<2x192xf32> to vector<2x64xf32>
    %231 = vector.extract_strided_slice %229 {offsets = [0, 0], sizes = [2, 64], strides = [1, 1]} : vector<2x192xf32> to vector<2x64xf32>
    %232 = arith.addf %230, %231 : vector<2x64xf32>
    %233 = arith.negf %232 : vector<2x64xf32>
    %234 = math.exp %233 : vector<2x64xf32>
    %cst_52 = arith.constant 1.000000e+00 : f32
    %235 = vector.broadcast %cst_52 : f32 to vector<2x64xf32>
    %236 = arith.addf %235, %234 : vector<2x64xf32>
    %237 = arith.divf %235, %236 : vector<2x64xf32>
    %238 = vector.extract_strided_slice %227 {offsets = [0, 64], sizes = [2, 64], strides = [1, 1]} : vector<2x192xf32> to vector<2x64xf32>
    %239 = vector.extract_strided_slice %229 {offsets = [0, 64], sizes = [2, 64], strides = [1, 1]} : vector<2x192xf32> to vector<2x64xf32>
    %240 = arith.addf %238, %239 : vector<2x64xf32>
    %241 = arith.negf %240 : vector<2x64xf32>
    %242 = math.exp %241 : vector<2x64xf32>
    %cst_53 = arith.constant 1.000000e+00 : f32
    %243 = vector.broadcast %cst_53 : f32 to vector<2x64xf32>
    %244 = arith.addf %243, %242 : vector<2x64xf32>
    %245 = arith.divf %243, %244 : vector<2x64xf32>
    %246 = vector.extract_strided_slice %227 {offsets = [0, 128], sizes = [2, 64], strides = [1, 1]} : vector<2x192xf32> to vector<2x64xf32>
    %247 = vector.extract_strided_slice %229 {offsets = [0, 128], sizes = [2, 64], strides = [1, 1]} : vector<2x192xf32> to vector<2x64xf32>
    %248 = arith.mulf %237, %247 : vector<2x64xf32>
    %249 = arith.addf %246, %248 : vector<2x64xf32>
    %250 = math.tanh %249 : vector<2x64xf32>
    %cst_54 = arith.constant 1.000000e+00 : f32
    %251 = vector.broadcast %cst_54 : f32 to vector<2x64xf32>
    %252 = arith.subf %251, %245 : vector<2x64xf32>
    %253 = arith.mulf %252, %250 : vector<2x64xf32>
    %254 = arith.mulf %245, %226 : vector<2x64xf32>
    %255 = arith.addf %253, %254 : vector<2x64xf32>
    %256 = tpu.concatenate %52, %81, %110, %139, %168, %197, %226, %255 in 0 : vector<2x64xf32>, vector<2x64xf32>, vector<2x64xf32>, vector<2x64xf32>, vector<2x64xf32>, vector<2x64xf32>, vector<2x64xf32>, vector<2x64xf32> -> vector<16x64xf32>
    %c0_55 = arith.constant 0 : index
    %c0_56 = arith.constant 0 : index
    %257 = vector.load %arg9[%c0_55, %c0_56] : memref<64x192xf32, #tpu.memory_space<vmem>>, vector<64x192xf32>
    %cst_57 = arith.constant dense<0.000000e+00> : vector<16x192xf32>
    %258 = tpu.matmul %256, %257, %cst_57 {dimension_numbers = #tpu.dot_dimension_numbers<[1], [0], [0], [1], [0, 0, 1, 1], [], []>} : vector<16x64xf32>, vector<64x192xf32>, vector<16x192xf32> -> vector<16x192xf32>
    %c0_58 = arith.constant 0 : index
    %c0_59 = arith.constant 0 : index
    %259 = vector.load %arg11[%c0_58, %c0_59] : memref<1x192xf32, #tpu.memory_space<vmem>>, vector<1x192xf32>
    %260 = vector.broadcast %259 : vector<1x192xf32> to vector<16x192xf32>
    %261 = arith.addf %258, %260 : vector<16x192xf32>
    %c0_60 = arith.constant 0 : index
    %c0_61 = arith.constant 0 : index
    %262 = vector.load %arg10[%c0_60, %c0_61] : memref<64x192xf32, #tpu.memory_space<vmem>>, vector<64x192xf32>
    %c0_62 = arith.constant 0 : index
    %c0_63 = arith.constant 0 : index
    %263 = vector.load %arg12[%c0_62, %c0_63] : memref<1x192xf32, #tpu.memory_space<vmem>>, vector<1x192xf32>
    %c1 = arith.constant 1 : index
    %c0_64 = arith.constant 0 : index
    %c0_65 = arith.constant 0 : index
    %264 = vector.load %arg15[%c1, %c0_64, %c0_65] : memref<2x2x64xf32, #tpu.memory_space<vmem>>, vector<1x2x64xf32>
    %265 = vector.shape_cast %264 : vector<1x2x64xf32> to vector<2x64xf32>
    %266 = vector.shape_cast %263 : vector<1x192xf32> to vector<1x192xf32>
    %267 = vector.broadcast %266 : vector<1x192xf32> to vector<2x192xf32>
    %268 = vector.extract_strided_slice %261 {offsets = [0, 0], sizes = [2, 192], strides = [1, 1]} : vector<16x192xf32> to vector<2x192xf32>
    %cst_66 = arith.constant dense<0.000000e+00> : vector<2x192xf32>
    %269 = tpu.matmul %265, %262, %cst_66 {dimension_numbers = #tpu.dot_dimension_numbers<[1], [0], [0], [1], [0, 0, 1, 1], [], []>} : vector<2x64xf32>, vector<64x192xf32>, vector<2x192xf32> -> vector<2x192xf32>
    %270 = arith.addf %269, %267 : vector<2x192xf32>
    %271 = vector.extract_strided_slice %268 {offsets = [0, 0], sizes = [2, 64], strides = [1, 1]} : vector<2x192xf32> to vector<2x64xf32>
    %272 = vector.extract_strided_slice %270 {offsets = [0, 0], sizes = [2, 64], strides = [1, 1]} : vector<2x192xf32> to vector<2x64xf32>
    %273 = arith.addf %271, %272 : vector<2x64xf32>
    %274 = arith.negf %273 : vector<2x64xf32>
    %275 = math.exp %274 : vector<2x64xf32>
    %cst_67 = arith.constant 1.000000e+00 : f32
    %276 = vector.broadcast %cst_67 : f32 to vector<2x64xf32>
    %277 = arith.addf %276, %275 : vector<2x64xf32>
    %278 = arith.divf %276, %277 : vector<2x64xf32>
    %279 = vector.extract_strided_slice %268 {offsets = [0, 64], sizes = [2, 64], strides = [1, 1]} : vector<2x192xf32> to vector<2x64xf32>
    %280 = vector.extract_strided_slice %270 {offsets = [0, 64], sizes = [2, 64], strides = [1, 1]} : vector<2x192xf32> to vector<2x64xf32>
    %281 = arith.addf %279, %280 : vector<2x64xf32>
    %282 = arith.negf %281 : vector<2x64xf32>
    %283 = math.exp %282 : vector<2x64xf32>
    %cst_68 = arith.constant 1.000000e+00 : f32
    %284 = vector.broadcast %cst_68 : f32 to vector<2x64xf32>
    %285 = arith.addf %284, %283 : vector<2x64xf32>
    %286 = arith.divf %284, %285 : vector<2x64xf32>
    %287 = vector.extract_strided_slice %268 {offsets = [0, 128], sizes = [2, 64], strides = [1, 1]} : vector<2x192xf32> to vector<2x64xf32>
    %288 = vector.extract_strided_slice %270 {offsets = [0, 128], sizes = [2, 64], strides = [1, 1]} : vector<2x192xf32> to vector<2x64xf32>
    %289 = arith.mulf %278, %288 : vector<2x64xf32>
    %290 = arith.addf %287, %289 : vector<2x64xf32>
    %291 = math.tanh %290 : vector<2x64xf32>
    %cst_69 = arith.constant 1.000000e+00 : f32
    %292 = vector.broadcast %cst_69 : f32 to vector<2x64xf32>
    %293 = arith.subf %292, %286 : vector<2x64xf32>
    %294 = arith.mulf %293, %291 : vector<2x64xf32>
    %295 = arith.mulf %286, %265 : vector<2x64xf32>
    %296 = arith.addf %294, %295 : vector<2x64xf32>
    %297 = vector.extract_strided_slice %261 {offsets = [2, 0], sizes = [2, 192], strides = [1, 1]} : vector<16x192xf32> to vector<2x192xf32>
    %cst_70 = arith.constant dense<0.000000e+00> : vector<2x192xf32>
    %298 = tpu.matmul %296, %262, %cst_70 {dimension_numbers = #tpu.dot_dimension_numbers<[1], [0], [0], [1], [0, 0, 1, 1], [], []>} : vector<2x64xf32>, vector<64x192xf32>, vector<2x192xf32> -> vector<2x192xf32>
    %299 = arith.addf %298, %267 : vector<2x192xf32>
    %300 = vector.extract_strided_slice %297 {offsets = [0, 0], sizes = [2, 64], strides = [1, 1]} : vector<2x192xf32> to vector<2x64xf32>
    %301 = vector.extract_strided_slice %299 {offsets = [0, 0], sizes = [2, 64], strides = [1, 1]} : vector<2x192xf32> to vector<2x64xf32>
    %302 = arith.addf %300, %301 : vector<2x64xf32>
    %303 = arith.negf %302 : vector<2x64xf32>
    %304 = math.exp %303 : vector<2x64xf32>
    %cst_71 = arith.constant 1.000000e+00 : f32
    %305 = vector.broadcast %cst_71 : f32 to vector<2x64xf32>
    %306 = arith.addf %305, %304 : vector<2x64xf32>
    %307 = arith.divf %305, %306 : vector<2x64xf32>
    %308 = vector.extract_strided_slice %297 {offsets = [0, 64], sizes = [2, 64], strides = [1, 1]} : vector<2x192xf32> to vector<2x64xf32>
    %309 = vector.extract_strided_slice %299 {offsets = [0, 64], sizes = [2, 64], strides = [1, 1]} : vector<2x192xf32> to vector<2x64xf32>
    %310 = arith.addf %308, %309 : vector<2x64xf32>
    %311 = arith.negf %310 : vector<2x64xf32>
    %312 = math.exp %311 : vector<2x64xf32>
    %cst_72 = arith.constant 1.000000e+00 : f32
    %313 = vector.broadcast %cst_72 : f32 to vector<2x64xf32>
    %314 = arith.addf %313, %312 : vector<2x64xf32>
    %315 = arith.divf %313, %314 : vector<2x64xf32>
    %316 = vector.extract_strided_slice %297 {offsets = [0, 128], sizes = [2, 64], strides = [1, 1]} : vector<2x192xf32> to vector<2x64xf32>
    %317 = vector.extract_strided_slice %299 {offsets = [0, 128], sizes = [2, 64], strides = [1, 1]} : vector<2x192xf32> to vector<2x64xf32>
    %318 = arith.mulf %307, %317 : vector<2x64xf32>
    %319 = arith.addf %316, %318 : vector<2x64xf32>
    %320 = math.tanh %319 : vector<2x64xf32>
    %cst_73 = arith.constant 1.000000e+00 : f32
    %321 = vector.broadcast %cst_73 : f32 to vector<2x64xf32>
    %322 = arith.subf %321, %315 : vector<2x64xf32>
    %323 = arith.mulf %322, %320 : vector<2x64xf32>
    %324 = arith.mulf %315, %296 : vector<2x64xf32>
    %325 = arith.addf %323, %324 : vector<2x64xf32>
    %326 = vector.extract_strided_slice %261 {offsets = [4, 0], sizes = [2, 192], strides = [1, 1]} : vector<16x192xf32> to vector<2x192xf32>
    %cst_74 = arith.constant dense<0.000000e+00> : vector<2x192xf32>
    %327 = tpu.matmul %325, %262, %cst_74 {dimension_numbers = #tpu.dot_dimension_numbers<[1], [0], [0], [1], [0, 0, 1, 1], [], []>} : vector<2x64xf32>, vector<64x192xf32>, vector<2x192xf32> -> vector<2x192xf32>
    %328 = arith.addf %327, %267 : vector<2x192xf32>
    %329 = vector.extract_strided_slice %326 {offsets = [0, 0], sizes = [2, 64], strides = [1, 1]} : vector<2x192xf32> to vector<2x64xf32>
    %330 = vector.extract_strided_slice %328 {offsets = [0, 0], sizes = [2, 64], strides = [1, 1]} : vector<2x192xf32> to vector<2x64xf32>
    %331 = arith.addf %329, %330 : vector<2x64xf32>
    %332 = arith.negf %331 : vector<2x64xf32>
    %333 = math.exp %332 : vector<2x64xf32>
    %cst_75 = arith.constant 1.000000e+00 : f32
    %334 = vector.broadcast %cst_75 : f32 to vector<2x64xf32>
    %335 = arith.addf %334, %333 : vector<2x64xf32>
    %336 = arith.divf %334, %335 : vector<2x64xf32>
    %337 = vector.extract_strided_slice %326 {offsets = [0, 64], sizes = [2, 64], strides = [1, 1]} : vector<2x192xf32> to vector<2x64xf32>
    %338 = vector.extract_strided_slice %328 {offsets = [0, 64], sizes = [2, 64], strides = [1, 1]} : vector<2x192xf32> to vector<2x64xf32>
    %339 = arith.addf %337, %338 : vector<2x64xf32>
    %340 = arith.negf %339 : vector<2x64xf32>
    %341 = math.exp %340 : vector<2x64xf32>
    %cst_76 = arith.constant 1.000000e+00 : f32
    %342 = vector.broadcast %cst_76 : f32 to vector<2x64xf32>
    %343 = arith.addf %342, %341 : vector<2x64xf32>
    %344 = arith.divf %342, %343 : vector<2x64xf32>
    %345 = vector.extract_strided_slice %326 {offsets = [0, 128], sizes = [2, 64], strides = [1, 1]} : vector<2x192xf32> to vector<2x64xf32>
    %346 = vector.extract_strided_slice %328 {offsets = [0, 128], sizes = [2, 64], strides = [1, 1]} : vector<2x192xf32> to vector<2x64xf32>
    %347 = arith.mulf %336, %346 : vector<2x64xf32>
    %348 = arith.addf %345, %347 : vector<2x64xf32>
    %349 = math.tanh %348 : vector<2x64xf32>
    %cst_77 = arith.constant 1.000000e+00 : f32
    %350 = vector.broadcast %cst_77 : f32 to vector<2x64xf32>
    %351 = arith.subf %350, %344 : vector<2x64xf32>
    %352 = arith.mulf %351, %349 : vector<2x64xf32>
    %353 = arith.mulf %344, %325 : vector<2x64xf32>
    %354 = arith.addf %352, %353 : vector<2x64xf32>
    %355 = vector.extract_strided_slice %261 {offsets = [6, 0], sizes = [2, 192], strides = [1, 1]} : vector<16x192xf32> to vector<2x192xf32>
    %cst_78 = arith.constant dense<0.000000e+00> : vector<2x192xf32>
    %356 = tpu.matmul %354, %262, %cst_78 {dimension_numbers = #tpu.dot_dimension_numbers<[1], [0], [0], [1], [0, 0, 1, 1], [], []>} : vector<2x64xf32>, vector<64x192xf32>, vector<2x192xf32> -> vector<2x192xf32>
    %357 = arith.addf %356, %267 : vector<2x192xf32>
    %358 = vector.extract_strided_slice %355 {offsets = [0, 0], sizes = [2, 64], strides = [1, 1]} : vector<2x192xf32> to vector<2x64xf32>
    %359 = vector.extract_strided_slice %357 {offsets = [0, 0], sizes = [2, 64], strides = [1, 1]} : vector<2x192xf32> to vector<2x64xf32>
    %360 = arith.addf %358, %359 : vector<2x64xf32>
    %361 = arith.negf %360 : vector<2x64xf32>
    %362 = math.exp %361 : vector<2x64xf32>
    %cst_79 = arith.constant 1.000000e+00 : f32
    %363 = vector.broadcast %cst_79 : f32 to vector<2x64xf32>
    %364 = arith.addf %363, %362 : vector<2x64xf32>
    %365 = arith.divf %363, %364 : vector<2x64xf32>
    %366 = vector.extract_strided_slice %355 {offsets = [0, 64], sizes = [2, 64], strides = [1, 1]} : vector<2x192xf32> to vector<2x64xf32>
    %367 = vector.extract_strided_slice %357 {offsets = [0, 64], sizes = [2, 64], strides = [1, 1]} : vector<2x192xf32> to vector<2x64xf32>
    %368 = arith.addf %366, %367 : vector<2x64xf32>
    %369 = arith.negf %368 : vector<2x64xf32>
    %370 = math.exp %369 : vector<2x64xf32>
    %cst_80 = arith.constant 1.000000e+00 : f32
    %371 = vector.broadcast %cst_80 : f32 to vector<2x64xf32>
    %372 = arith.addf %371, %370 : vector<2x64xf32>
    %373 = arith.divf %371, %372 : vector<2x64xf32>
    %374 = vector.extract_strided_slice %355 {offsets = [0, 128], sizes = [2, 64], strides = [1, 1]} : vector<2x192xf32> to vector<2x64xf32>
    %375 = vector.extract_strided_slice %357 {offsets = [0, 128], sizes = [2, 64], strides = [1, 1]} : vector<2x192xf32> to vector<2x64xf32>
    %376 = arith.mulf %365, %375 : vector<2x64xf32>
    %377 = arith.addf %374, %376 : vector<2x64xf32>
    %378 = math.tanh %377 : vector<2x64xf32>
    %cst_81 = arith.constant 1.000000e+00 : f32
    %379 = vector.broadcast %cst_81 : f32 to vector<2x64xf32>
    %380 = arith.subf %379, %373 : vector<2x64xf32>
    %381 = arith.mulf %380, %378 : vector<2x64xf32>
    %382 = arith.mulf %373, %354 : vector<2x64xf32>
    %383 = arith.addf %381, %382 : vector<2x64xf32>
    %384 = vector.extract_strided_slice %261 {offsets = [8, 0], sizes = [2, 192], strides = [1, 1]} : vector<16x192xf32> to vector<2x192xf32>
    %cst_82 = arith.constant dense<0.000000e+00> : vector<2x192xf32>
    %385 = tpu.matmul %383, %262, %cst_82 {dimension_numbers = #tpu.dot_dimension_numbers<[1], [0], [0], [1], [0, 0, 1, 1], [], []>} : vector<2x64xf32>, vector<64x192xf32>, vector<2x192xf32> -> vector<2x192xf32>
    %386 = arith.addf %385, %267 : vector<2x192xf32>
    %387 = vector.extract_strided_slice %384 {offsets = [0, 0], sizes = [2, 64], strides = [1, 1]} : vector<2x192xf32> to vector<2x64xf32>
    %388 = vector.extract_strided_slice %386 {offsets = [0, 0], sizes = [2, 64], strides = [1, 1]} : vector<2x192xf32> to vector<2x64xf32>
    %389 = arith.addf %387, %388 : vector<2x64xf32>
    %390 = arith.negf %389 : vector<2x64xf32>
    %391 = math.exp %390 : vector<2x64xf32>
    %cst_83 = arith.constant 1.000000e+00 : f32
    %392 = vector.broadcast %cst_83 : f32 to vector<2x64xf32>
    %393 = arith.addf %392, %391 : vector<2x64xf32>
    %394 = arith.divf %392, %393 : vector<2x64xf32>
    %395 = vector.extract_strided_slice %384 {offsets = [0, 64], sizes = [2, 64], strides = [1, 1]} : vector<2x192xf32> to vector<2x64xf32>
    %396 = vector.extract_strided_slice %386 {offsets = [0, 64], sizes = [2, 64], strides = [1, 1]} : vector<2x192xf32> to vector<2x64xf32>
    %397 = arith.addf %395, %396 : vector<2x64xf32>
    %398 = arith.negf %397 : vector<2x64xf32>
    %399 = math.exp %398 : vector<2x64xf32>
    %cst_84 = arith.constant 1.000000e+00 : f32
    %400 = vector.broadcast %cst_84 : f32 to vector<2x64xf32>
    %401 = arith.addf %400, %399 : vector<2x64xf32>
    %402 = arith.divf %400, %401 : vector<2x64xf32>
    %403 = vector.extract_strided_slice %384 {offsets = [0, 128], sizes = [2, 64], strides = [1, 1]} : vector<2x192xf32> to vector<2x64xf32>
    %404 = vector.extract_strided_slice %386 {offsets = [0, 128], sizes = [2, 64], strides = [1, 1]} : vector<2x192xf32> to vector<2x64xf32>
    %405 = arith.mulf %394, %404 : vector<2x64xf32>
    %406 = arith.addf %403, %405 : vector<2x64xf32>
    %407 = math.tanh %406 : vector<2x64xf32>
    %cst_85 = arith.constant 1.000000e+00 : f32
    %408 = vector.broadcast %cst_85 : f32 to vector<2x64xf32>
    %409 = arith.subf %408, %402 : vector<2x64xf32>
    %410 = arith.mulf %409, %407 : vector<2x64xf32>
    %411 = arith.mulf %402, %383 : vector<2x64xf32>
    %412 = arith.addf %410, %411 : vector<2x64xf32>
    %413 = vector.extract_strided_slice %261 {offsets = [10, 0], sizes = [2, 192], strides = [1, 1]} : vector<16x192xf32> to vector<2x192xf32>
    %cst_86 = arith.constant dense<0.000000e+00> : vector<2x192xf32>
    %414 = tpu.matmul %412, %262, %cst_86 {dimension_numbers = #tpu.dot_dimension_numbers<[1], [0], [0], [1], [0, 0, 1, 1], [], []>} : vector<2x64xf32>, vector<64x192xf32>, vector<2x192xf32> -> vector<2x192xf32>
    %415 = arith.addf %414, %267 : vector<2x192xf32>
    %416 = vector.extract_strided_slice %413 {offsets = [0, 0], sizes = [2, 64], strides = [1, 1]} : vector<2x192xf32> to vector<2x64xf32>
    %417 = vector.extract_strided_slice %415 {offsets = [0, 0], sizes = [2, 64], strides = [1, 1]} : vector<2x192xf32> to vector<2x64xf32>
    %418 = arith.addf %416, %417 : vector<2x64xf32>
    %419 = arith.negf %418 : vector<2x64xf32>
    %420 = math.exp %419 : vector<2x64xf32>
    %cst_87 = arith.constant 1.000000e+00 : f32
    %421 = vector.broadcast %cst_87 : f32 to vector<2x64xf32>
    %422 = arith.addf %421, %420 : vector<2x64xf32>
    %423 = arith.divf %421, %422 : vector<2x64xf32>
    %424 = vector.extract_strided_slice %413 {offsets = [0, 64], sizes = [2, 64], strides = [1, 1]} : vector<2x192xf32> to vector<2x64xf32>
    %425 = vector.extract_strided_slice %415 {offsets = [0, 64], sizes = [2, 64], strides = [1, 1]} : vector<2x192xf32> to vector<2x64xf32>
    %426 = arith.addf %424, %425 : vector<2x64xf32>
    %427 = arith.negf %426 : vector<2x64xf32>
    %428 = math.exp %427 : vector<2x64xf32>
    %cst_88 = arith.constant 1.000000e+00 : f32
    %429 = vector.broadcast %cst_88 : f32 to vector<2x64xf32>
    %430 = arith.addf %429, %428 : vector<2x64xf32>
    %431 = arith.divf %429, %430 : vector<2x64xf32>
    %432 = vector.extract_strided_slice %413 {offsets = [0, 128], sizes = [2, 64], strides = [1, 1]} : vector<2x192xf32> to vector<2x64xf32>
    %433 = vector.extract_strided_slice %415 {offsets = [0, 128], sizes = [2, 64], strides = [1, 1]} : vector<2x192xf32> to vector<2x64xf32>
    %434 = arith.mulf %423, %433 : vector<2x64xf32>
    %435 = arith.addf %432, %434 : vector<2x64xf32>
    %436 = math.tanh %435 : vector<2x64xf32>
    %cst_89 = arith.constant 1.000000e+00 : f32
    %437 = vector.broadcast %cst_89 : f32 to vector<2x64xf32>
    %438 = arith.subf %437, %431 : vector<2x64xf32>
    %439 = arith.mulf %438, %436 : vector<2x64xf32>
    %440 = arith.mulf %431, %412 : vector<2x64xf32>
    %441 = arith.addf %439, %440 : vector<2x64xf32>
    %442 = vector.extract_strided_slice %261 {offsets = [12, 0], sizes = [2, 192], strides = [1, 1]} : vector<16x192xf32> to vector<2x192xf32>
    %cst_90 = arith.constant dense<0.000000e+00> : vector<2x192xf32>
    %443 = tpu.matmul %441, %262, %cst_90 {dimension_numbers = #tpu.dot_dimension_numbers<[1], [0], [0], [1], [0, 0, 1, 1], [], []>} : vector<2x64xf32>, vector<64x192xf32>, vector<2x192xf32> -> vector<2x192xf32>
    %444 = arith.addf %443, %267 : vector<2x192xf32>
    %445 = vector.extract_strided_slice %442 {offsets = [0, 0], sizes = [2, 64], strides = [1, 1]} : vector<2x192xf32> to vector<2x64xf32>
    %446 = vector.extract_strided_slice %444 {offsets = [0, 0], sizes = [2, 64], strides = [1, 1]} : vector<2x192xf32> to vector<2x64xf32>
    %447 = arith.addf %445, %446 : vector<2x64xf32>
    %448 = arith.negf %447 : vector<2x64xf32>
    %449 = math.exp %448 : vector<2x64xf32>
    %cst_91 = arith.constant 1.000000e+00 : f32
    %450 = vector.broadcast %cst_91 : f32 to vector<2x64xf32>
    %451 = arith.addf %450, %449 : vector<2x64xf32>
    %452 = arith.divf %450, %451 : vector<2x64xf32>
    %453 = vector.extract_strided_slice %442 {offsets = [0, 64], sizes = [2, 64], strides = [1, 1]} : vector<2x192xf32> to vector<2x64xf32>
    %454 = vector.extract_strided_slice %444 {offsets = [0, 64], sizes = [2, 64], strides = [1, 1]} : vector<2x192xf32> to vector<2x64xf32>
    %455 = arith.addf %453, %454 : vector<2x64xf32>
    %456 = arith.negf %455 : vector<2x64xf32>
    %457 = math.exp %456 : vector<2x64xf32>
    %cst_92 = arith.constant 1.000000e+00 : f32
    %458 = vector.broadcast %cst_92 : f32 to vector<2x64xf32>
    %459 = arith.addf %458, %457 : vector<2x64xf32>
    %460 = arith.divf %458, %459 : vector<2x64xf32>
    %461 = vector.extract_strided_slice %442 {offsets = [0, 128], sizes = [2, 64], strides = [1, 1]} : vector<2x192xf32> to vector<2x64xf32>
    %462 = vector.extract_strided_slice %444 {offsets = [0, 128], sizes = [2, 64], strides = [1, 1]} : vector<2x192xf32> to vector<2x64xf32>
    %463 = arith.mulf %452, %462 : vector<2x64xf32>
    %464 = arith.addf %461, %463 : vector<2x64xf32>
    %465 = math.tanh %464 : vector<2x64xf32>
    %cst_93 = arith.constant 1.000000e+00 : f32
    %466 = vector.broadcast %cst_93 : f32 to vector<2x64xf32>
    %467 = arith.subf %466, %460 : vector<2x64xf32>
    %468 = arith.mulf %467, %465 : vector<2x64xf32>
    %469 = arith.mulf %460, %441 : vector<2x64xf32>
    %470 = arith.addf %468, %469 : vector<2x64xf32>
    %471 = vector.extract_strided_slice %261 {offsets = [14, 0], sizes = [2, 192], strides = [1, 1]} : vector<16x192xf32> to vector<2x192xf32>
    %cst_94 = arith.constant dense<0.000000e+00> : vector<2x192xf32>
    %472 = tpu.matmul %470, %262, %cst_94 {dimension_numbers = #tpu.dot_dimension_numbers<[1], [0], [0], [1], [0, 0, 1, 1], [], []>} : vector<2x64xf32>, vector<64x192xf32>, vector<2x192xf32> -> vector<2x192xf32>
    %473 = arith.addf %472, %267 : vector<2x192xf32>
    %474 = vector.extract_strided_slice %471 {offsets = [0, 0], sizes = [2, 64], strides = [1, 1]} : vector<2x192xf32> to vector<2x64xf32>
    %475 = vector.extract_strided_slice %473 {offsets = [0, 0], sizes = [2, 64], strides = [1, 1]} : vector<2x192xf32> to vector<2x64xf32>
    %476 = arith.addf %474, %475 : vector<2x64xf32>
    %477 = arith.negf %476 : vector<2x64xf32>
    %478 = math.exp %477 : vector<2x64xf32>
    %cst_95 = arith.constant 1.000000e+00 : f32
    %479 = vector.broadcast %cst_95 : f32 to vector<2x64xf32>
    %480 = arith.addf %479, %478 : vector<2x64xf32>
    %481 = arith.divf %479, %480 : vector<2x64xf32>
    %482 = vector.extract_strided_slice %471 {offsets = [0, 64], sizes = [2, 64], strides = [1, 1]} : vector<2x192xf32> to vector<2x64xf32>
    %483 = vector.extract_strided_slice %473 {offsets = [0, 64], sizes = [2, 64], strides = [1, 1]} : vector<2x192xf32> to vector<2x64xf32>
    %484 = arith.addf %482, %483 : vector<2x64xf32>
    %485 = arith.negf %484 : vector<2x64xf32>
    %486 = math.exp %485 : vector<2x64xf32>
    %cst_96 = arith.constant 1.000000e+00 : f32
    %487 = vector.broadcast %cst_96 : f32 to vector<2x64xf32>
    %488 = arith.addf %487, %486 : vector<2x64xf32>
    %489 = arith.divf %487, %488 : vector<2x64xf32>
    %490 = vector.extract_strided_slice %471 {offsets = [0, 128], sizes = [2, 64], strides = [1, 1]} : vector<2x192xf32> to vector<2x64xf32>
    %491 = vector.extract_strided_slice %473 {offsets = [0, 128], sizes = [2, 64], strides = [1, 1]} : vector<2x192xf32> to vector<2x64xf32>
    %492 = arith.mulf %481, %491 : vector<2x64xf32>
    %493 = arith.addf %490, %492 : vector<2x64xf32>
    %494 = math.tanh %493 : vector<2x64xf32>
    %cst_97 = arith.constant 1.000000e+00 : f32
    %495 = vector.broadcast %cst_97 : f32 to vector<2x64xf32>
    %496 = arith.subf %495, %489 : vector<2x64xf32>
    %497 = arith.mulf %496, %494 : vector<2x64xf32>
    %498 = arith.mulf %489, %470 : vector<2x64xf32>
    %499 = arith.addf %497, %498 : vector<2x64xf32>
    %c0_98 = arith.constant 0 : index
    %c0_99 = arith.constant 0 : index
    %c0_100 = arith.constant 0 : index
    %500 = vector.load %arg17[%c0_98, %c0_99, %c0_100] : memref<2x2x64xf32, #tpu.memory_space<vmem>>, vector<1x2x64xf32>
    %501 = vector.shape_cast %500 : vector<1x2x64xf32> to vector<2x64xf32>
    %502 = vector.shape_cast %255 : vector<2x64xf32> to vector<1x2x64xf32>
    tpu.vector_store %arg17[%c0_98, %c0_99, %c0_100], %502 {strides = array<i32>} : memref<2x2x64xf32, #tpu.memory_space<vmem>>, vector<1x2x64xf32>,
    %c1_101 = arith.constant 1 : index
    %c0_102 = arith.constant 0 : index
    %c0_103 = arith.constant 0 : index
    %503 = vector.load %arg17[%c1_101, %c0_102, %c0_103] : memref<2x2x64xf32, #tpu.memory_space<vmem>>, vector<1x2x64xf32>
    %504 = vector.shape_cast %503 : vector<1x2x64xf32> to vector<2x64xf32>
    %505 = vector.shape_cast %499 : vector<2x64xf32> to vector<1x2x64xf32>
    tpu.vector_store %arg17[%c1_101, %c0_102, %c0_103], %505 {strides = array<i32>} : memref<2x2x64xf32, #tpu.memory_space<vmem>>, vector<1x2x64xf32>,
    %c0_104 = arith.constant 0 : index
    %c0_105 = arith.constant 0 : index
    %506 = vector.load %arg13[%c0_104, %c0_105] : memref<64x4xf32, #tpu.memory_space<vmem>>, vector<64x4xf32>
    %cst_106 = arith.constant dense<0.000000e+00> : vector<2x4xf32>
    %507 = tpu.matmul %499, %506, %cst_106 {dimension_numbers = #tpu.dot_dimension_numbers<[1], [0], [0], [1], [0, 0, 1, 1], [], []>} : vector<2x64xf32>, vector<64x4xf32>, vector<2x4xf32> -> vector<2x4xf32>
    %c0_107 = arith.constant 0 : index
    %c0_108 = arith.constant 0 : index
    %508 = vector.load %arg14[%c0_107, %c0_108] : memref<1x4xf32, #tpu.memory_space<vmem>>, vector<1x4xf32>
    %509 = vector.broadcast %508 : vector<1x4xf32> to vector<2x4xf32>
    %510 = arith.addf %507, %509 : vector<2x4xf32>
    %c0_109 = arith.constant 0 : index
    %c0_110 = arith.constant 0 : index
    %511 = vector.load %arg16[%c0_109, %c0_110] : memref<2x4xf32, #tpu.memory_space<vmem>>, vector<2x4xf32>
    tpu.vector_store %arg16[%c0_109, %c0_110], %510 {strides = array<i32>} : memref<2x4xf32, #tpu.memory_space<vmem>>, vector<2x4xf32>,
    return
  }
}

</mosaic_0001>

<llo_original>
// kernel: gru_model_forward.1
$region0: #{gru_model_forward.1}
  #allocation0 [shape = 'u32[]', space=smem, size = 0x4, offset = 0x4, fixed_abs, tag = 'smem constant byte address 0x4 - core index']
  #allocation1 [shape = 'u32[144,128]{1,0:T(1,128)}', space=vmem, size = 0x12000, scoped, tag = 'internal scratch']
  %s0 = inlined_call_operand.hbm [shape: f32[16,16], index: 0, kind: input, shape index: {}]
  %s1 = inlined_call_operand.vmem [shape: f32[16,128], index: 1, kind: input, shape index: {}]
  %s2 = inlined_call_operand.hbm [shape: f32[1,128], index: 2, kind: input, shape index: {}]
  %s3 = inlined_call_operand.vmem [shape: f32[128,64], index: 3, kind: input, shape index: {}]
  %s4 = inlined_call_operand.hbm [shape: f32[1,64], index: 4, kind: input, shape index: {}]
  %s5 = inlined_call_operand.vmem [shape: f32[64,192], index: 5, kind: input, shape index: {}]
  %s6 = inlined_call_operand.vmem [shape: f32[64,192], index: 6, kind: input, shape index: {}]
  %s7 = inlined_call_operand.hbm [shape: f32[1,192], index: 7, kind: input, shape index: {}]
  %s8 = inlined_call_operand.hbm [shape: f32[1,192], index: 8, kind: input, shape index: {}]
  %s9 = inlined_call_operand.hbm [shape: f32[64,192], index: 9, kind: input, shape index: {}]
  %s10 = inlined_call_operand.hbm [shape: f32[64,192], index: 10, kind: input, shape index: {}]
  %s11 = inlined_call_operand.vmem [shape: f32[1,192], index: 11, kind: input, shape index: {}]
  %s12 = inlined_call_operand.hbm [shape: f32[1,192], index: 12, kind: input, shape index: {}]
  %s13 = inlined_call_operand.vmem [shape: f32[64,4], index: 13, kind: input, shape index: {}]
  %s14 = inlined_call_operand.hbm [shape: f32[1,4], index: 14, kind: input, shape index: {}]
  %s15 = inlined_call_operand.hbm [shape: f32[2,2,64], index: 15, kind: input, shape index: {}]
  %s16 = inlined_call_operand.hbm [shape: f32[2,4], index: 16, kind: output, shape index: {0}]
  %s17 = inlined_call_operand.hbm [shape: f32[2,2,64], index: 17, kind: output, shape index: {1}]
  %18 = xla_tuple %s16, %s17
  %s19 = sld [smem:[#allocation0]]
  $region122: #{gru_model_forward.1} parent=0
    _
  %s21 = ssub.s32 1, %s19
  %s22 = scalar_select 0, %s21, %s19
  $region1: #{gru_model_forward.1} parent=0
    #allocation2 [shape = 'u8[8192]{0}', space=vmem, size = 0x2000, scoped, tag = 'input window, operand 0, single buffered']
    #allocation3 [shape = 's32[1]{0}', space=sflag, size = 0x4, scoped, tag = 'scoped memory for gru_model_forward.1']
    #allocation4 [shape = 's32[1]{0}', space=sflag, size = 0x4, scoped, tag = 'scoped memory for gru_model_forward.1']
    #allocation5 [shape = 'u8[512]{0}', space=vmem, size = 0x400, scoped, tag = 'input window, operand 2, single buffered']
    #allocation6 [shape = 's32[1]{0}', space=sflag, size = 0x4, scoped, tag = 'scoped memory for gru_model_forward.1']
    #allocation7 [shape = 'u8[512]{0}', space=vmem, size = 0x400, scoped, tag = 'input window, operand 4, single buffered']
    #allocation8 [shape = 'u8[1024]{0}', space=vmem, size = 0x400, scoped, tag = 'input window, operand 7, single buffered']
    #allocation9 [shape = 's32[1]{0}', space=sflag, size = 0x4, scoped, tag = 'scoped memory for gru_model_forward.1']
    #allocation10 [shape = 'u8[1024]{0}', space=vmem, size = 0x400, scoped, tag = 'input window, operand 8, single buffered']
    #allocation11 [shape = 'u8[65536]{0}', space=vmem, size = 0x10000, scoped, tag = 'input window, operand 9, single buffered']
    #allocation12 [shape = 's32[1]{0}', space=sflag, size = 0x4, scoped, tag = 'scoped memory for gru_model_forward.1']
    #allocation13 [shape = 'u8[65536]{0}', space=vmem, size = 0x10000, scoped, tag = 'input window, operand 10, single buffered']
    #allocation14 [shape = 'u8[1024]{0}', space=vmem, size = 0x400, scoped, tag = 'input window, operand 12, single buffered']
    #allocation15 [shape = 's32[1]{0}', space=sflag, size = 0x4, scoped, tag = 'scoped memory for gru_model_forward.1']
    #allocation16 [shape = 'u8[512]{0}', space=vmem, size = 0x400, scoped, tag = 'input window, operand 14, single buffered']
    #allocation17 [shape = 'u8[2048]{0}', space=vmem, size = 0x800, scoped, tag = 'input window, operand 15, single buffered']
    #allocation18 [shape = 's32[1]{0}', space=sflag, size = 0x4, scoped, tag = 'scoped memory for gru_model_forward.1']
    #allocation19 [shape = 'u8[1024]{0}', space=vmem, size = 0x400, scoped, tag = 'output window, operand 0, single buffered']
    #allocation20 [shape = 'u8[2048]{0}', space=vmem, size = 0x800, scoped, tag = 'output window, operand 1, single buffered']
    #allocation21 [shape = 's32[1]{0}', space=sflag, size = 0x4, scoped, tag = 'scoped memory for gru_model_forward.1']
    %23 = vsyncpa [#allocation3], 0
    %24 = vsyncpa [#allocation6], 0
    %25 = vsyncpa [#allocation9], 0
    %26 = vsyncpa [#allocation12], 0
    %27 = vsyncpa [#allocation15], 0
    %28 = vsyncpa [#allocation18], 0
    %29 = vsyncpa [#allocation4], 0
    %30 = vsyncpa [#allocation21], 0
    // Predicated region
    $region2: #{gru_model_forward.1} parent=1 // pred_check
      _
    $region3: #{gru_model_forward.1} parent=1 // pred_check_branch
      %32 = sbr.rel (0) target = $region5
    $region4: #{gru_model_forward.1} parent=1 // pred_region
      %s34 = ssub.s32 256, 256
      %35 = vsyncadd [#allocation3], %s34
      %s36 = sshll.u32 [#allocation2], 4
      %s37 = int_to_ptr.vmem [resolvable:$true] %s36
      %42 = dma.hbm_to_vmem [thread:$0]  %s0, 256, %s37, [#allocation3], 128, 128, 8
    $region5: #{gru_model_forward.1} parent=1 // pred_fallthru
      _
    // Predicated region
    $region6: #{gru_model_forward.1} parent=1 // pred_check
      _
    $region7: #{gru_model_forward.1} parent=1 // pred_check_branch
      %44 = sbr.rel (0) target = $region9
    $region8: #{gru_model_forward.1} parent=1 // pred_region
      _
    $region9: #{gru_model_forward.1} parent=1 // pred_fallthru
      _
    // Predicated region
    $region10: #{gru_model_forward.1} parent=1 // pred_check
      _
    $region11: #{gru_model_forward.1} parent=1 // pred_check_branch
      %46 = sbr.rel (0) target = $region13
    $region12: #{gru_model_forward.1} parent=1 // pred_region
      %s48 = ssub.s32 16, 16
      %49 = vsyncadd [#allocation6], %s48
      %s51 = sshll.u32 [#allocation5], 4
      %s52 = int_to_ptr.vmem [resolvable:$true] %s51
      %54 = dma.hbm_to_vmem [thread:$0]  %s2, 16, %s52, [#allocation6]
    $region13: #{gru_model_forward.1} parent=1 // pred_fallthru
      _
    // Predicated region
    $region14: #{gru_model_forward.1} parent=1 // pred_check
      _
    $region15: #{gru_model_forward.1} parent=1 // pred_check_branch
      %56 = sbr.rel (0) target = $region17
    $region16: #{gru_model_forward.1} parent=1 // pred_region
      _
    $region17: #{gru_model_forward.1} parent=1 // pred_fallthru
      _
    // Predicated region
    $region18: #{gru_model_forward.1} parent=1 // pred_check
      _
    $region19: #{gru_model_forward.1} parent=1 // pred_check_branch
      %58 = sbr.rel (0) target = $region21
    $region20: #{gru_model_forward.1} parent=1 // pred_region
      %s60 = ssub.s32 16, 16
      %61 = vsyncadd [#allocation6], %s60
      %s63 = sshll.u32 [#allocation7], 4
      %s64 = int_to_ptr.vmem [resolvable:$true] %s63
      %66 = dma.hbm_to_vmem [thread:$0]  %s4, 16, %s64, [#allocation6]
    $region21: #{gru_model_forward.1} parent=1 // pred_fallthru
      _
    // Predicated region
    $region22: #{gru_model_forward.1} parent=1 // pred_check
      _
    $region23: #{gru_model_forward.1} parent=1 // pred_check_branch
      %68 = sbr.rel (0) target = $region25
    $region24: #{gru_model_forward.1} parent=1 // pred_region
      _
    $region25: #{gru_model_forward.1} parent=1 // pred_fallthru
      _
    // Predicated region
    $region26: #{gru_model_forward.1} parent=1 // pred_check
      _
    $region27: #{gru_model_forward.1} parent=1 // pred_check_branch
      %70 = sbr.rel (0) target = $region29
    $region28: #{gru_model_forward.1} parent=1 // pred_region
      _
    $region29: #{gru_model_forward.1} parent=1 // pred_fallthru
      _
    // Predicated region
    $region30: #{gru_model_forward.1} parent=1 // pred_check
      _
    $region31: #{gru_model_forward.1} parent=1 // pred_check_branch
      %72 = sbr.rel (0) target = $region33
    $region32: #{gru_model_forward.1} parent=1 // pred_region
      %s74 = ssub.s32 32, 32
      %75 = vsyncadd [#allocation9], %s74
      %s77 = sshll.u32 [#allocation8], 4
      %s78 = int_to_ptr.vmem [resolvable:$true] %s77
      %80 = dma.hbm_to_vmem [thread:$0]  %s7, 32, %s78, [#allocation9]
    $region33: #{gru_model_forward.1} parent=1 // pred_fallthru
      _
    // Predicated region
    $region34: #{gru_model_forward.1} parent=1 // pred_check
      _
    $region35: #{gru_model_forward.1} parent=1 // pred_check_branch
      %82 = sbr.rel (0) target = $region37
    $region36: #{gru_model_forward.1} parent=1 // pred_region
      %s84 = ssub.s32 32, 32
      %85 = vsyncadd [#allocation9], %s84
      %s87 = sshll.u32 [#allocation10], 4
      %s88 = int_to_ptr.vmem [resolvable:$true] %s87
      %90 = dma.hbm_to_vmem [thread:$0]  %s8, 32, %s88, [#allocation9]
    $region37: #{gru_model_forward.1} parent=1 // pred_fallthru
      _
    // Predicated region
    $region38: #{gru_model_forward.1} parent=1 // pred_check
      _
    $region39: #{gru_model_forward.1} parent=1 // pred_check_branch
      %92 = sbr.rel (0) target = $region41
    $region40: #{gru_model_forward.1} parent=1 // pred_region
      %s94 = ssub.s32 2048, 2048
      %95 = vsyncadd [#allocation12], %s94
      %s96 = sshll.u32 [#allocation11], 4
      %s97 = int_to_ptr.vmem [resolvable:$true] %s96
      %102 = dma.hbm_to_vmem [thread:$0]  %s9, 2048, %s97, [#allocation12], 256, 256, 16
    $region41: #{gru_model_forward.1} parent=1 // pred_fallthru
      _
    // Predicated region
    $region42: #{gru_model_forward.1} parent=1 // pred_check
      _
    $region43: #{gru_model_forward.1} parent=1 // pred_check_branch
      %104 = sbr.rel (0) target = $region45
    $region44: #{gru_model_forward.1} parent=1 // pred_region
      %s106 = ssub.s32 2048, 2048
      %107 = vsyncadd [#allocation12], %s106
      %s108 = sshll.u32 [#allocation13], 4
      %s109 = int_to_ptr.vmem [resolvable:$true] %s108
      %114 = dma.hbm_to_vmem [thread:$0]  %s10, 2048, %s109, [#allocation12], 256, 256, 16
    $region45: #{gru_model_forward.1} parent=1 // pred_fallthru
      _
    // Predicated region
    $region46: #{gru_model_forward.1} parent=1 // pred_check
      _
    $region47: #{gru_model_forward.1} parent=1 // pred_check_branch
      %116 = sbr.rel (0) target = $region49
    $region48: #{gru_model_forward.1} parent=1 // pred_region
      _
    $region49: #{gru_model_forward.1} parent=1 // pred_fallthru
      _
    // Predicated region
    $region50: #{gru_model_forward.1} parent=1 // pred_check
      _
    $region51: #{gru_model_forward.1} parent=1 // pred_check_branch
      %118 = sbr.rel (0) target = $region53
    $region52: #{gru_model_forward.1} parent=1 // pred_region
      %s120 = ssub.s32 32, 32
      %121 = vsyncadd [#allocation15], %s120
      %s123 = sshll.u32 [#allocation14], 4
      %s124 = int_to_ptr.vmem [resolvable:$true] %s123
      %126 = dma.hbm_to_vmem [thread:$0]  %s12, 32, %s124, [#allocation15]
    $region53: #{gru_model_forward.1} parent=1 // pred_fallthru
      _
    // Predicated region
    $region54: #{gru_model_forward.1} parent=1 // pred_check
      _
    $region55: #{gru_model_forward.1} parent=1 // pred_check_branch
      %128 = sbr.rel (0) target = $region57
    $region56: #{gru_model_forward.1} parent=1 // pred_region
      _
    $region57: #{gru_model_forward.1} parent=1 // pred_fallthru
      _
    // Predicated region
    $region58: #{gru_model_forward.1} parent=1 // pred_check
      _
    $region59: #{gru_model_forward.1} parent=1 // pred_check_branch
      %130 = sbr.rel (0) target = $region61
    $region60: #{gru_model_forward.1} parent=1 // pred_region
      %s132 = ssub.s32 16, 16
      %133 = vsyncadd [#allocation15], %s132
      %s135 = sshll.u32 [#allocation16], 4
      %s136 = int_to_ptr.vmem [resolvable:$true] %s135
      %138 = dma.hbm_to_vmem [thread:$0]  %s14, 16, %s136, [#allocation15]
    $region61: #{gru_model_forward.1} parent=1 // pred_fallthru
      _
    // Predicated region
    $region62: #{gru_model_forward.1} parent=1 // pred_check
      _
    $region63: #{gru_model_forward.1} parent=1 // pred_check_branch
      %140 = sbr.rel (0) target = $region65
    $region64: #{gru_model_forward.1} parent=1 // pred_region
      %s142 = ssub.s32 64, 64
      %143 = vsyncadd [#allocation18], %s142
      %s144 = sshll.u32 [#allocation17], 4
      %s145 = int_to_ptr.vmem [resolvable:$true] %s144
      %150 = dma.hbm_to_vmem [thread:$0]  %s15, 64, %s145, [#allocation18], 32, 32, 2
    $region65: #{gru_model_forward.1} parent=1 // pred_fallthru
      _
    // Predicated region
    $region66: #{gru_model_forward.1} parent=1 // pred_check
      _
    $region67: #{gru_model_forward.1} parent=1 // pred_check_branch
      %152 = sbr.rel (0) target = $region69
    $region68: #{gru_model_forward.1} parent=1 // pred_region
      %153 = dma.done [#allocation3], 256
    $region69: #{gru_model_forward.1} parent=1 // pred_fallthru
      _
    // Predicated region
    $region70: #{gru_model_forward.1} parent=1 // pred_check
      _
    $region71: #{gru_model_forward.1} parent=1 // pred_check_branch
      %155 = sbr.rel (0) target = $region73
    $region72: #{gru_model_forward.1} parent=1 // pred_region
      %156 = dma.done [#allocation6], 16
    $region73: #{gru_model_forward.1} parent=1 // pred_fallthru
      _
    // Predicated region
    $region74: #{gru_model_forward.1} parent=1 // pred_check
      _
    $region75: #{gru_model_forward.1} parent=1 // pred_check_branch
      %158 = sbr.rel (0) target = $region77
    $region76: #{gru_model_forward.1} parent=1 // pred_region
      %159 = dma.done [#allocation6], 16
    $region77: #{gru_model_forward.1} parent=1 // pred_fallthru
      _
    // Predicated region
    $region78: #{gru_model_forward.1} parent=1 // pred_check
      _
    $region79: #{gru_model_forward.1} parent=1 // pred_check_branch
      %161 = sbr.rel (0) target = $region81
    $region80: #{gru_model_forward.1} parent=1 // pred_region
      %162 = dma.done [#allocation9], 32
    $region81: #{gru_model_forward.1} parent=1 // pred_fallthru
      _
    // Predicated region
    $region82: #{gru_model_forward.1} parent=1 // pred_check
      _
    $region83: #{gru_model_forward.1} parent=1 // pred_check_branch
      %164 = sbr.rel (0) target = $region85
    $region84: #{gru_model_forward.1} parent=1 // pred_region
      %165 = dma.done [#allocation9], 32
    $region85: #{gru_model_forward.1} parent=1 // pred_fallthru
      _
    // Predicated region
    $region86: #{gru_model_forward.1} parent=1 // pred_check
      _
    $region87: #{gru_model_forward.1} parent=1 // pred_check_branch
      %167 = sbr.rel (0) target = $region89
    $region88: #{gru_model_forward.1} parent=1 // pred_region
      %168 = dma.done [#allocation12], 2048
    $region89: #{gru_model_forward.1} parent=1 // pred_fallthru
      _
    // Predicated region
    $region90: #{gru_model_forward.1} parent=1 // pred_check
      _
    $region91: #{gru_model_forward.1} parent=1 // pred_check_branch
      %170 = sbr.rel (0) target = $region93
    $region92: #{gru_model_forward.1} parent=1 // pred_region
      %171 = dma.done [#allocation12], 2048
    $region93: #{gru_model_forward.1} parent=1 // pred_fallthru
      _
    // Predicated region
    $region94: #{gru_model_forward.1} parent=1 // pred_check
      _
    $region95: #{gru_model_forward.1} parent=1 // pred_check_branch
      %173 = sbr.rel (0) target = $region97
    $region96: #{gru_model_forward.1} parent=1 // pred_region
      %174 = dma.done [#allocation15], 32
    $region97: #{gru_model_forward.1} parent=1 // pred_fallthru
      _
    // Predicated region
    $region98: #{gru_model_forward.1} parent=1 // pred_check
      _
    $region99: #{gru_model_forward.1} parent=1 // pred_check_branch
      %176 = sbr.rel (0) target = $region101
    $region100: #{gru_model_forward.1} parent=1 // pred_region
      %177 = dma.done [#allocation15], 16
    $region101: #{gru_model_forward.1} parent=1 // pred_fallthru
      _
    // Predicated region
    $region102: #{gru_model_forward.1} parent=1 // pred_check
      _
    $region103: #{gru_model_forward.1} parent=1 // pred_check_branch
      %179 = sbr.rel (0) target = $region105
    $region104: #{gru_model_forward.1} parent=1 // pred_region
      %180 = dma.done [#allocation18], 64
    $region105: #{gru_model_forward.1} parent=1 // pred_fallthru
      _
    %v181 = vld [vmem:[#allocation2] sm:$0xff]
    %v182 = vld [vmem:[#allocation2 + $0x8] sm:$0xff]
    %v183 = vld [vmem:[%s1] sm:$0xff]
    %v184 = vld [vmem:[%s1 + $0x8] sm:$0xff]
    %v185 = vld [vmem:[#allocation5] sm:$0x1]
    %v187 = vlaneseq
    %v188 = vshrl.u32 %v187, 7
    %v189 = vsub.s32 0, %v188
    %v190 = vrot.slane %v185, %v189
    %vm192 = vcmask 130048
    %v194 = vsel %vm192, %v181, 0
    %v197 = vsel %vm192, %v182, 0
    %199 = vmatprep.subr.mxu0 0.0
    %200 = vmatpush1.msra.mxu0 0.0
    %201 = vmatprep.subr.mxu0 0.0
    %202 = vmatpush1.msra.mxu0 0.0
    %203 = vmatprep.subr.mxu0 0.0
    %204 = vmatpush1.msra.mxu0 0.0
    %205 = vmatprep.subr.mxu0 0.0
    %206 = vmatpush1.msra.mxu0 0.0
    %207 = vmatprep.subr.mxu0 0.0
    %208 = vmatpush1.msra.mxu0 0.0
    %209 = vmatprep.subr.mxu0 0.0
    %210 = vmatpush1.msra.mxu0 0.0
    %211 = vmatprep.subr.mxu0 0.0
    %212 = vmatpush1.msra.mxu0 0.0
    %213 = vmatprep.subr.mxu0 0.0
    %214 = vmatpush1.msra.mxu0 0.0
    %215 = vmatprep.subr.mxu0 0.0
    %216 = vmatpush1.msra.mxu0 0.0
    %217 = vmatprep.subr.mxu0 0.0
    %218 = vmatpush1.msra.mxu0 0.0
    %219 = vmatprep.subr.mxu0 0.0
    %220 = vmatpush1.msra.mxu0 0.0
    %221 = vmatprep.subr.mxu0 0.0
    %222 = vmatpush1.msra.mxu0 0.0
    %223 = vmatprep.subr.mxu0 0.0
    %224 = vmatpush1.msra.mxu0 0.0
    %225 = vmatprep.subr.mxu0 0.0
    %226 = vmatpush1.msra.mxu0 0.0
    %227 = vmatprep.subr.mxu0 0.0
    %228 = vmatpush1.msra.mxu0 %v184
    %229 = vmatprep.subr.mxu0 0.0
    %230 = vmatpush1.msra.mxu0 %v183
    %231 = vmatprep.subr.mxu0 0.0
    %232 = vmatpush2.msra.mxu0 0.0
    %233 = vmatprep.subr.mxu0 0.0
    %234 = vmatpush2.msra.mxu0 0.0
    %235 = vmatprep.subr.mxu0 0.0
    %236 = vmatpush2.msra.mxu0 0.0
    %237 = vmatprep.subr.mxu0 0.0
    %238 = vmatpush2.msra.mxu0 0.0
    %239 = vmatprep.subr.mxu0 0.0
    %240 = vmatpush2.msra.mxu0 0.0
    %241 = vmatprep.subr.mxu0 0.0
    %242 = vmatpush2.msra.mxu0 0.0
    %243 = vmatprep.subr.mxu0 0.0
    %244 = vmatpush2.msra.mxu0 0.0
    %245 = vmatprep.subr.mxu0 0.0
    %246 = vmatpush2.msra.mxu0 0.0
    %247 = vmatprep.subr.mxu0 0.0
    %248 = vmatpush2.msra.mxu0 0.0
    %249 = vmatprep.subr.mxu0 0.0
    %250 = vmatpush2.msra.mxu0 0.0
    %251 = vmatprep.subr.mxu0 0.0
    %252 = vmatpush2.msra.mxu0 0.0
    %253 = vmatprep.subr.mxu0 0.0
    %254 = vmatpush2.msra.mxu0 0.0
    %255 = vmatprep.subr.mxu0 0.0
    %256 = vmatpush2.msra.mxu0 0.0
    %257 = vmatprep.subr.mxu0 0.0
    %258 = vmatpush2.msra.mxu0 0.0
    %259 = vmatprep.subr.mxu0 0.0
    %260 = vmatpush2.msra.mxu0 0.0
    %261 = vmatprep.subr.mxu0 0.0
    %262 = vmatpush2.msra.mxu0 0.0
    %263 = vmatprep.mubr.f32.mxu0 0.0
    %264 = vmatmul.mubr.f32.gmra.mxu0 %v194
    %v265 = vpop.f32.mrf.mxu0
    %v266 = vadd.f32 %v190, %v265
    %v267 = vpop.f32.mrf.mxu0
    %268 = vmatprep.mubr.f32.mxu0 0.0
    %269 = vmatmul.mubr.f32.gmra.mxu0 %v197
    %v270 = vpop.f32.mrf.mxu0
    %v271 = vadd.f32 %v190, %v270
    %v272 = vpop.f32.mrf.mxu0
    %273 = vdwg.mxu0
    %v274 = vmax.f32 %v266, 0.0
    %v275 = vmax.f32 %v271, 0.0
    %v276 = vld [vmem:[%s3] sm:$0xff]
    %v277 = vld [vmem:[%s3 + $0x8] sm:$0xff]
    %v278 = vld [vmem:[%s3 + $0x10] sm:$0xff]
    %v279 = vld [vmem:[%s3 + $0x18] sm:$0xff]
    %v280 = vld [vmem:[%s3 + $0x20] sm:$0xff]
    %v281 = vld [vmem:[%s3 + $0x28] sm:$0xff]
    %v282 = vld [vmem:[%s3 + $0x30] sm:$0xff]
    %v283 = vld [vmem:[%s3 + $0x38] sm:$0xff]
    %v284 = vld [vmem:[%s3 + $0x40] sm:$0xff]
    %v285 = vld [vmem:[%s3 + $0x48] sm:$0xff]
    %v286 = vld [vmem:[%s3 + $0x50] sm:$0xff]
    %v287 = vld [vmem:[%s3 + $0x58] sm:$0xff]
    %v288 = vld [vmem:[%s3 + $0x60] sm:$0xff]
    %v289 = vld [vmem:[%s3 + $0x68] sm:$0xff]
    %v290 = vld [vmem:[%s3 + $0x70] sm:$0xff]
    %v291 = vld [vmem:[%s3 + $0x78] sm:$0xff]
    %v292 = vld [vmem:[#allocation7] sm:$0x1]
    %v294 = vlaneseq
    %v295 = vshrl.u32 %v294, 7
    %v296 = vsub.s32 0, %v295
    %v297 = vrot.slane %v292, %v296
    %299 = vmatprep.subr.mxu0 0.0
    %300 = vmatpush1.msra.mxu0 %v291
    %301 = vmatprep.subr.mxu0 0.0
    %302 = vmatpush1.msra.mxu0 %v290
    %303 = vmatprep.subr.mxu0 0.0
    %304 = vmatpush1.msra.mxu0 %v289
    %305 = vmatprep.subr.mxu0 0.0
    %306 = vmatpush1.msra.mxu0 %v288
    %307 = vmatprep.subr.mxu0 0.0
    %308 = vmatpush1.msra.mxu0 %v287
    %309 = vmatprep.subr.mxu0 0.0
    %310 = vmatpush1.msra.mxu0 %v286
    %311 = vmatprep.subr.mxu0 0.0
    %312 = vmatpush1.msra.mxu0 %v285
    %313 = vmatprep.subr.mxu0 0.0
    %314 = vmatpush1.msra.mxu0 %v284
    %315 = vmatprep.subr.mxu0 0.0
    %316 = vmatpush1.msra.mxu0 %v283
    %317 = vmatprep.subr.mxu0 0.0
    %318 = vmatpush1.msra.mxu0 %v282
    %319 = vmatprep.subr.mxu0 0.0
    %320 = vmatpush1.msra.mxu0 %v281
    %321 = vmatprep.subr.mxu0 0.0
    %322 = vmatpush1.msra.mxu0 %v280
    %323 = vmatprep.subr.mxu0 0.0
    %324 = vmatpush1.msra.mxu0 %v279
    %325 = vmatprep.subr.mxu0 0.0
    %326 = vmatpush1.msra.mxu0 %v278
    %327 = vmatprep.subr.mxu0 0.0
    %328 = vmatpush1.msra.mxu0 %v277
    %329 = vmatprep.subr.mxu0 0.0
    %330 = vmatpush1.msra.mxu0 %v276
    %331 = vmatprep.subr.mxu0 0.0
    %332 = vmatpush2.msra.mxu0 0.0
    %333 = vmatprep.subr.mxu0 0.0
    %334 = vmatpush2.msra.mxu0 0.0
    %335 = vmatprep.subr.mxu0 0.0
    %336 = vmatpush2.msra.mxu0 0.0
    %337 = vmatprep.subr.mxu0 0.0
    %338 = vmatpush2.msra.mxu0 0.0
    %339 = vmatprep.subr.mxu0 0.0
    %340 = vmatpush2.msra.mxu0 0.0
    %341 = vmatprep.subr.mxu0 0.0
    %342 = vmatpush2.msra.mxu0 0.0
    %343 = vmatprep.subr.mxu0 0.0
    %344 = vmatpush2.msra.mxu0 0.0
    %345 = vmatprep.subr.mxu0 0.0
    %346 = vmatpush2.msra.mxu0 0.0
    %347 = vmatprep.subr.mxu0 0.0
    %348 = vmatpush2.msra.mxu0 0.0
    %349 = vmatprep.subr.mxu0 0.0
    %350 = vmatpush2.msra.mxu0 0.0
    %351 = vmatprep.subr.mxu0 0.0
    %352 = vmatpush2.msra.mxu0 0.0
    %353 = vmatprep.subr.mxu0 0.0
    %354 = vmatpush2.msra.mxu0 0.0
    %355 = vmatprep.subr.mxu0 0.0
    %356 = vmatpush2.msra.mxu0 0.0
    %357 = vmatprep.subr.mxu0 0.0
    %358 = vmatpush2.msra.mxu0 0.0
    %359 = vmatprep.subr.mxu0 0.0
    %360 = vmatpush2.msra.mxu0 0.0
    %361 = vmatprep.subr.mxu0 0.0
    %362 = vmatpush2.msra.mxu0 0.0
    %363 = vmatprep.mubr.f32.mxu0 0.0
    %364 = vmatmul.mubr.f32.gmra.mxu0 %v274
    %v365 = vpop.f32.mrf.mxu0
    %v366 = vadd.f32 %v297, %v365
    %v367 = vpop.f32.mrf.mxu0
    %368 = vmatprep.mubr.f32.mxu0 0.0
    %369 = vmatmul.mubr.f32.gmra.mxu0 %v275
    %v370 = vpop.f32.mrf.mxu0
    %v371 = vadd.f32 %v297, %v370
    %v372 = vpop.f32.mrf.mxu0
    %373 = vdwg.mxu0
    %v374 = vld [vmem:[%s5] sm:$0xff]
    %v375 = vld [vmem:[%s5 + $0x8] sm:$0xff]
    %v376 = vld [vmem:[%s5 + $0x10] sm:$0xff]
    %v377 = vld [vmem:[%s5 + $0x18] sm:$0xff]
    %v378 = vld [vmem:[%s5 + $0x20] sm:$0xff]
    %v379 = vld [vmem:[%s5 + $0x28] sm:$0xff]
    %v380 = vld [vmem:[%s5 + $0x30] sm:$0xff]
    %v381 = vld [vmem:[%s5 + $0x38] sm:$0xff]
    %v382 = vld [vmem:[%s5 + $0x40] sm:$0xff]
    %v383 = vld [vmem:[%s5 + $0x48] sm:$0xff]
    %v384 = vld [vmem:[%s5 + $0x50] sm:$0xff]
    %v385 = vld [vmem:[%s5 + $0x58] sm:$0xff]
    %v386 = vld [vmem:[%s5 + $0x60] sm:$0xff]
    %v387 = vld [vmem:[%s5 + $0x68] sm:$0xff]
    %v388 = vld [vmem:[%s5 + $0x70] sm:$0xff]
    %v389 = vld [vmem:[%s5 + $0x78] sm:$0xff]
    %v390 = vld [vmem:[#allocation8] sm:$0x3]
    %v392 = vlaneseq
    %v393 = vshrl.u32 %v392, 7
    %v394 = vsub.s32 0, %v393
    %v395 = vrot.slane %v390, %v394
    %v396 = vlaneseq
    %v397 = vshrl.u32 %v396, 7
    %v398 = vsub.s32 1, %v397
    %v399 = vrot.slane %v390, %v398
    %vm402 = vcmask 523264
    %v404 = vsel %vm402, %v366, 0
    %v407 = vsel %vm402, %v371, 0
    %409 = vmatprep.subr.mxu0 0.0
    %410 = vmatpush1.msra.mxu0 0.0
    %411 = vmatprep.subr.mxu0 0.0
    %412 = vmatpush1.msra.mxu0 0.0
    %413 = vmatprep.subr.mxu0 0.0
    %414 = vmatpush1.msra.mxu0 0.0
    %415 = vmatprep.subr.mxu0 0.0
    %416 = vmatpush1.msra.mxu0 0.0
    %417 = vmatprep.subr.mxu0 0.0
    %418 = vmatpush1.msra.mxu0 0.0
    %419 = vmatprep.subr.mxu0 0.0
    %420 = vmatpush1.msra.mxu0 0.0
    %421 = vmatprep.subr.mxu0 0.0
    %422 = vmatpush1.msra.mxu0 0.0
    %423 = vmatprep.subr.mxu0 0.0
    %424 = vmatpush1.msra.mxu0 0.0
    %425 = vmatprep.subr.mxu0 %v389
    %426 = vmatpush1.msra.mxu0 %v388
    %427 = vmatprep.subr.mxu0 %v387
    %428 = vmatpush1.msra.mxu0 %v386
    %429 = vmatprep.subr.mxu0 %v385
    %430 = vmatpush1.msra.mxu0 %v384
    %431 = vmatprep.subr.mxu0 %v383
    %432 = vmatpush1.msra.mxu0 %v382
    %433 = vmatprep.subr.mxu0 %v381
    %434 = vmatpush1.msra.mxu0 %v380
    %435 = vmatprep.subr.mxu0 %v379
    %436 = vmatpush1.msra.mxu0 %v378
    %437 = vmatprep.subr.mxu0 %v377
    %438 = vmatpush1.msra.mxu0 %v376
    %439 = vmatprep.subr.mxu0 %v375
    %440 = vmatpush1.msra.mxu0 %v374
    %441 = vmatprep.subr.mxu0 0.0
    %442 = vmatpush2.msra.mxu0 0.0
    %443 = vmatprep.subr.mxu0 0.0
    %444 = vmatpush2.msra.mxu0 0.0
    %445 = vmatprep.subr.mxu0 0.0
    %446 = vmatpush2.msra.mxu0 0.0
    %447 = vmatprep.subr.mxu0 0.0
    %448 = vmatpush2.msra.mxu0 0.0
    %449 = vmatprep.subr.mxu0 0.0
    %450 = vmatpush2.msra.mxu0 0.0
    %451 = vmatprep.subr.mxu0 0.0
    %452 = vmatpush2.msra.mxu0 0.0
    %453 = vmatprep.subr.mxu0 0.0
    %454 = vmatpush2.msra.mxu0 0.0
    %455 = vmatprep.subr.mxu0 0.0
    %456 = vmatpush2.msra.mxu0 0.0
    %457 = vmatprep.subr.mxu0 0.0
    %458 = vmatpush2.msra.mxu0 0.0
    %459 = vmatprep.subr.mxu0 0.0
    %460 = vmatpush2.msra.mxu0 0.0
    %461 = vmatprep.subr.mxu0 0.0
    %462 = vmatpush2.msra.mxu0 0.0
    %463 = vmatprep.subr.mxu0 0.0
    %464 = vmatpush2.msra.mxu0 0.0
    %465 = vmatprep.subr.mxu0 0.0
    %466 = vmatpush2.msra.mxu0 0.0
    %467 = vmatprep.subr.mxu0 0.0
    %468 = vmatpush2.msra.mxu0 0.0
    %469 = vmatprep.subr.mxu0 0.0
    %470 = vmatpush2.msra.mxu0 0.0
    %471 = vmatprep.subr.mxu0 0.0
    %472 = vmatpush2.msra.mxu0 0.0
    %473 = vmatprep.mubr.f32.mxu0 0.0
    %474 = vmatmul.mubr.f32.gmra.mxu0 %v404
    %v475 = vpop.f32.mrf.mxu0
    %v476 = vadd.f32 %v395, %v475
    %v477 = vpop.f32.mrf.mxu0
    %v478 = vadd.f32 %v399, %v477
    %479 = vmatprep.mubr.f32.mxu0 0.0
    %480 = vmatmul.mubr.f32.gmra.mxu0 %v407
    %v481 = vpop.f32.mrf.mxu0
    %v482 = vadd.f32 %v395, %v481
    %v483 = vpop.f32.mrf.mxu0
    %v484 = vadd.f32 %v399, %v483
    %485 = vdwg.mxu0
    %v486 = vld [vmem:[%s6] sm:$0xff]
    %v487 = vld [vmem:[%s6 + $0x8] sm:$0xff]
    %v488 = vld [vmem:[%s6 + $0x10] sm:$0xff]
    %v489 = vld [vmem:[%s6 + $0x18] sm:$0xff]
    %v490 = vld [vmem:[%s6 + $0x20] sm:$0xff]
    %v491 = vld [vmem:[%s6 + $0x28] sm:$0xff]
    %v492 = vld [vmem:[%s6 + $0x30] sm:$0xff]
    %v493 = vld [vmem:[%s6 + $0x38] sm:$0xff]
    %v494 = vld [vmem:[%s6 + $0x40] sm:$0xff]
    %v495 = vld [vmem:[%s6 + $0x48] sm:$0xff]
    %v496 = vld [vmem:[%s6 + $0x50] sm:$0xff]
    %v497 = vld [vmem:[%s6 + $0x58] sm:$0xff]
    %v498 = vld [vmem:[%s6 + $0x60] sm:$0xff]
    %v499 = vld [vmem:[%s6 + $0x68] sm:$0xff]
    %v500 = vld [vmem:[%s6 + $0x70] sm:$0xff]
    %v501 = vld [vmem:[%s6 + $0x78] sm:$0xff]
    %v502 = vld [vmem:[#allocation10] sm:$0x3]
    %v503 = vld [vmem:[#allocation17] sm:$0x3]
    %v505 = vlaneseq
    %v506 = vshrl.u32 %v505, 7
    %v507 = vsub.s32 0, %v506
    %v508 = vrot.slane %v502, %v507
    %v509 = vlaneseq
    %v510 = vshrl.u32 %v509, 7
    %v511 = vsub.s32 1, %v510
    %v512 = vrot.slane %v502, %v511
    %v516 = vsel %vm402, %v503, 0
    %518 = vmatprep.subr.mxu0 0.0
    %519 = vmatpush1.msra.mxu0 0.0
    %520 = vmatprep.subr.mxu0 0.0
    %521 = vmatpush1.msra.mxu0 0.0
    %522 = vmatprep.subr.mxu0 0.0
    %523 = vmatpush1.msra.mxu0 0.0
    %524 = vmatprep.subr.mxu0 0.0
    %525 = vmatpush1.msra.mxu0 0.0
    %526 = vmatprep.subr.mxu0 0.0
    %527 = vmatpush1.msra.mxu0 0.0
    %528 = vmatprep.subr.mxu0 0.0
    %529 = vmatpush1.msra.mxu0 0.0
    %530 = vmatprep.subr.mxu0 0.0
    %531 = vmatpush1.msra.mxu0 0.0
    %532 = vmatprep.subr.mxu0 0.0
    %533 = vmatpush1.msra.mxu0 0.0
    %534 = vmatprep.subr.mxu0 %v501
    %535 = vmatpush1.msra.mxu0 %v500
    %536 = vmatprep.subr.mxu0 %v499
    %537 = vmatpush1.msra.mxu0 %v498
    %538 = vmatprep.subr.mxu0 %v497
    %539 = vmatpush1.msra.mxu0 %v496
    %540 = vmatprep.subr.mxu0 %v495
    %541 = vmatpush1.msra.mxu0 %v494
    %542 = vmatprep.subr.mxu0 %v493
    %543 = vmatpush1.msra.mxu0 %v492
    %544 = vmatprep.subr.mxu0 %v491
    %545 = vmatpush1.msra.mxu0 %v490
    %546 = vmatprep.subr.mxu0 %v489
    %547 = vmatpush1.msra.mxu0 %v488
    %548 = vmatprep.subr.mxu0 %v487
    %549 = vmatpush1.msra.mxu0 %v486
    %550 = vmatprep.subr.mxu0 0.0
    %551 = vmatpush2.msra.mxu0 0.0
    %552 = vmatprep.subr.mxu0 0.0
    %553 = vmatpush2.msra.mxu0 0.0
    %554 = vmatprep.subr.mxu0 0.0
    %555 = vmatpush2.msra.mxu0 0.0
    %556 = vmatprep.subr.mxu0 0.0
    %557 = vmatpush2.msra.mxu0 0.0
    %558 = vmatprep.subr.mxu0 0.0
    %559 = vmatpush2.msra.mxu0 0.0
    %560 = vmatprep.subr.mxu0 0.0
    %561 = vmatpush2.msra.mxu0 0.0
    %562 = vmatprep.subr.mxu0 0.0
    %563 = vmatpush2.msra.mxu0 0.0
    %564 = vmatprep.subr.mxu0 0.0
    %565 = vmatpush2.msra.mxu0 0.0
    %566 = vmatprep.subr.mxu0 0.0
    %567 = vmatpush2.msra.mxu0 0.0
    %568 = vmatprep.subr.mxu0 0.0
    %569 = vmatpush2.msra.mxu0 0.0
    %570 = vmatprep.subr.mxu0 0.0
    %571 = vmatpush2.msra.mxu0 0.0
    %572 = vmatprep.subr.mxu0 0.0
    %573 = vmatpush2.msra.mxu0 0.0
    %574 = vmatprep.subr.mxu0 0.0
    %575 = vmatpush2.msra.mxu0 0.0
    %576 = vmatprep.subr.mxu0 0.0
    %577 = vmatpush2.msra.mxu0 0.0
    %578 = vmatprep.subr.mxu0 0.0
    %579 = vmatpush2.msra.mxu0 0.0
    %580 = vmatprep.subr.mxu0 0.0
    %581 = vmatpush2.msra.mxu0 0.0
    %582 = vmatprep.mubr.f32.mxu0 0.0
    %583 = vmatmul.mubr.f32.gmra.mxu0 %v516
    %v584 = vpop.f32.mrf.mxu0
    %v585 = vadd.f32 %v508, %v584
    %v586 = vpop.f32.mrf.mxu0
    %v587 = vadd.f32 %v512, %v586
    %588 = vdwg.mxu0
    %v589 = vadd.f32 %v476, %v585
    %v590 = vxor.u32 %v589, 2147483648
    %v591 = vmul.f32 %v590, 1.442695
    %v592 = vpow.pop %v591
    %v593 = vadd.f32 %v592, 1.0
    %v594 = vrcp.pop %v593
    %v595 = vmul.f32 1.0, %v594
    %v596 = vmul.f32 %v595, %v587
    %v597 = vadd.f32 %v478, %v596
    %v598 = vtanh.pop %v597
    %v599 = vsub.f32 1.0, %v595
    %601 = vrot.lane.b32.xlu0 %v598, 64
    %v602 = vpop.permute.xlu0 %601
    %v604 = vmul.f32 %v599, %v602
    %605 = vrot.lane.b32.xlu0 %v503, 64
    %v606 = vpop.permute.xlu0 %605
    %v608 = vmul.f32 %v595, %v606
    %v609 = vadd.f32 %v604, %v608
    %611 = vrot.lane.b32.xlu0 %v609, 64
    %v612 = vpop.permute.xlu0 %611
    %v613 = vsel %vm402, %v612, 0
    %615 = vmatprep.subr.mxu0 0.0
    %616 = vmatpush1.msra.mxu0 0.0
    %617 = vmatprep.subr.mxu0 0.0
    %618 = vmatpush1.msra.mxu0 0.0
    %619 = vmatprep.subr.mxu0 0.0
    %620 = vmatpush1.msra.mxu0 0.0
    %621 = vmatprep.subr.mxu0 0.0
    %622 = vmatpush1.msra.mxu0 0.0
    %623 = vmatprep.subr.mxu0 0.0
    %624 = vmatpush1.msra.mxu0 0.0
    %625 = vmatprep.subr.mxu0 0.0
    %626 = vmatpush1.msra.mxu0 0.0
    %627 = vmatprep.subr.mxu0 0.0
    %628 = vmatpush1.msra.mxu0 0.0
    %629 = vmatprep.subr.mxu0 0.0
    %630 = vmatpush1.msra.mxu0 0.0
    %631 = vmatprep.subr.mxu0 %v501
    %632 = vmatpush1.msra.mxu0 %v500
    %633 = vmatprep.subr.mxu0 %v499
    %634 = vmatpush1.msra.mxu0 %v498
    %635 = vmatprep.subr.mxu0 %v497
    %636 = vmatpush1.msra.mxu0 %v496
    %637 = vmatprep.subr.mxu0 %v495
    %638 = vmatpush1.msra.mxu0 %v494
    %639 = vmatprep.subr.mxu0 %v493
    %640 = vmatpush1.msra.mxu0 %v492
    %641 = vmatprep.subr.mxu0 %v491
    %642 = vmatpush1.msra.mxu0 %v490
    %643 = vmatprep.subr.mxu0 %v489
    %644 = vmatpush1.msra.mxu0 %v488
    %645 = vmatprep.subr.mxu0 %v487
    %646 = vmatpush1.msra.mxu0 %v486
    %647 = vmatprep.subr.mxu0 0.0
    %648 = vmatpush2.msra.mxu0 0.0
    %649 = vmatprep.subr.mxu0 0.0
    %650 = vmatpush2.msra.mxu0 0.0
    %651 = vmatprep.subr.mxu0 0.0
    %652 = vmatpush2.msra.mxu0 0.0
    %653 = vmatprep.subr.mxu0 0.0
    %654 = vmatpush2.msra.mxu0 0.0
    %655 = vmatprep.subr.mxu0 0.0
    %656 = vmatpush2.msra.mxu0 0.0
    %657 = vmatprep.subr.mxu0 0.0
    %658 = vmatpush2.msra.mxu0 0.0
    %659 = vmatprep.subr.mxu0 0.0
    %660 = vmatpush2.msra.mxu0 0.0
    %661 = vmatprep.subr.mxu0 0.0
    %662 = vmatpush2.msra.mxu0 0.0
    %663 = vmatprep.subr.mxu0 0.0
    %664 = vmatpush2.msra.mxu0 0.0
    %665 = vmatprep.subr.mxu0 0.0
    %666 = vmatpush2.msra.mxu0 0.0
    %667 = vmatprep.subr.mxu0 0.0
    %668 = vmatpush2.msra.mxu0 0.0
    %669 = vmatprep.subr.mxu0 0.0
    %670 = vmatpush2.msra.mxu0 0.0
    %671 = vmatprep.subr.mxu0 0.0
    %672 = vmatpush2.msra.mxu0 0.0
    %673 = vmatprep.subr.mxu0 0.0
    %674 = vmatpush2.msra.mxu0 0.0
    %675 = vmatprep.subr.mxu0 0.0
    %676 = vmatpush2.msra.mxu0 0.0
    %677 = vmatprep.subr.mxu0 0.0
    %678 = vmatpush2.msra.mxu0 0.0
    %679 = vmatprep.mubr.f32.mxu0 0.0
    %680 = vmatmul.mubr.f32.gmra.mxu0 %v613
    %v681 = vpop.f32.mrf.mxu0
    %v682 = vadd.f32 %v508, %v681
    %v683 = vpop.f32.mrf.mxu0
    %v684 = vadd.f32 %v512, %v683
    %685 = vdwg.mxu0
    %v687 = vrot.slane %v682, 6
    %v689 = vadd.f32 %v476, %v687
    %v690 = vxor.u32 %v689, 2147483648
    %v691 = vmul.f32 %v690, 1.442695
    %v692 = vpow.pop %v691
    %v693 = vadd.f32 %v692, 1.0
    %v694 = vrcp.pop %v693
    %v695 = vmul.f32 1.0, %v694
    %v697 = vrot.slane %v684, 6
    %v699 = vmul.f32 %v695, %v697
    %v700 = vadd.f32 %v478, %v699
    %v701 = vtanh.pop %v700
    %v702 = vsub.f32 1.0, %v695
    %704 = vrot.lane.b32.xlu0 %v701, 64
    %v705 = vpop.permute.xlu0 %704
    %v707 = vmul.f32 %v702, %v705
    %v708 = vrot.slane %v609, 6
    %v710 = vmul.f32 %v695, %v708
    %v711 = vadd.f32 %v707, %v710
    %v713 = vrot.slane %v711, 2
    %714 = vrot.lane.b32.xlu0 %v713, 64
    %v715 = vpop.permute.xlu0 %714
    %v716 = vsel %vm402, %v715, 0
    %718 = vmatprep.subr.mxu0 0.0
    %719 = vmatpush1.msra.mxu0 0.0
    %720 = vmatprep.subr.mxu0 0.0
    %721 = vmatpush1.msra.mxu0 0.0
    %722 = vmatprep.subr.mxu0 0.0
    %723 = vmatpush1.msra.mxu0 0.0
    %724 = vmatprep.subr.mxu0 0.0
    %725 = vmatpush1.msra.mxu0 0.0
    %726 = vmatprep.subr.mxu0 0.0
    %727 = vmatpush1.msra.mxu0 0.0
    %728 = vmatprep.subr.mxu0 0.0
    %729 = vmatpush1.msra.mxu0 0.0
    %730 = vmatprep.subr.mxu0 0.0
    %731 = vmatpush1.msra.mxu0 0.0
    %732 = vmatprep.subr.mxu0 0.0
    %733 = vmatpush1.msra.mxu0 0.0
    %734 = vmatprep.subr.mxu0 %v501
    %735 = vmatpush1.msra.mxu0 %v500
    %736 = vmatprep.subr.mxu0 %v499
    %737 = vmatpush1.msra.mxu0 %v498
    %738 = vmatprep.subr.mxu0 %v497
    %739 = vmatpush1.msra.mxu0 %v496
    %740 = vmatprep.subr.mxu0 %v495
    %741 = vmatpush1.msra.mxu0 %v494
    %742 = vmatprep.subr.mxu0 %v493
    %743 = vmatpush1.msra.mxu0 %v492
    %744 = vmatprep.subr.mxu0 %v491
    %745 = vmatpush1.msra.mxu0 %v490
    %746 = vmatprep.subr.mxu0 %v489
    %747 = vmatpush1.msra.mxu0 %v488
    %748 = vmatprep.subr.mxu0 %v487
    %749 = vmatpush1.msra.mxu0 %v486
    %750 = vmatprep.subr.mxu0 0.0
    %751 = vmatpush2.msra.mxu0 0.0
    %752 = vmatprep.subr.mxu0 0.0
    %753 = vmatpush2.msra.mxu0 0.0
    %754 = vmatprep.subr.mxu0 0.0
    %755 = vmatpush2.msra.mxu0 0.0
    %756 = vmatprep.subr.mxu0 0.0
    %757 = vmatpush2.msra.mxu0 0.0
    %758 = vmatprep.subr.mxu0 0.0
    %759 = vmatpush2.msra.mxu0 0.0
    %760 = vmatprep.subr.mxu0 0.0
    %761 = vmatpush2.msra.mxu0 0.0
    %762 = vmatprep.subr.mxu0 0.0
    %763 = vmatpush2.msra.mxu0 0.0
    %764 = vmatprep.subr.mxu0 0.0
    %765 = vmatpush2.msra.mxu0 0.0
    %766 = vmatprep.subr.mxu0 0.0
    %767 = vmatpush2.msra.mxu0 0.0
    %768 = vmatprep.subr.mxu0 0.0
    %769 = vmatpush2.msra.mxu0 0.0
    %770 = vmatprep.subr.mxu0 0.0
    %771 = vmatpush2.msra.mxu0 0.0
    %772 = vmatprep.subr.mxu0 0.0
    %773 = vmatpush2.msra.mxu0 0.0
    %774 = vmatprep.subr.mxu0 0.0
    %775 = vmatpush2.msra.mxu0 0.0
    %776 = vmatprep.subr.mxu0 0.0
    %777 = vmatpush2.msra.mxu0 0.0
    %778 = vmatprep.subr.mxu0 0.0
    %779 = vmatpush2.msra.mxu0 0.0
    %780 = vmatprep.subr.mxu0 0.0
    %781 = vmatpush2.msra.mxu0 0.0
    %782 = vmatprep.mubr.f32.mxu0 0.0
    %783 = vmatmul.mubr.f32.gmra.mxu0 %v716
    %v784 = vpop.f32.mrf.mxu0
    %v785 = vadd.f32 %v508, %v784
    %v786 = vpop.f32.mrf.mxu0
    %v787 = vadd.f32 %v512, %v786
    %788 = vdwg.mxu0
    %v790 = vrot.slane %v785, 4
    %v792 = vadd.f32 %v476, %v790
    %v793 = vxor.u32 %v792, 2147483648
    %v794 = vmul.f32 %v793, 1.442695
    %v795 = vpow.pop %v794
    %v796 = vadd.f32 %v795, 1.0
    %v797 = vrcp.pop %v796
    %v798 = vmul.f32 1.0, %v797
    %v800 = vrot.slane %v787, 4
    %v802 = vmul.f32 %v798, %v800
    %v803 = vadd.f32 %v478, %v802
    %v804 = vtanh.pop %v803
    %v805 = vsub.f32 1.0, %v798
    %807 = vrot.lane.b32.xlu0 %v804, 64
    %v808 = vpop.permute.xlu0 %807
    %v810 = vmul.f32 %v805, %v808
    %v811 = vrot.slane %v711, 6
    %v813 = vmul.f32 %v798, %v811
    %v814 = vadd.f32 %v810, %v813
    %v816 = vrot.slane %v814, 4
    %817 = vrot.lane.b32.xlu0 %v816, 64
    %v818 = vpop.permute.xlu0 %817
    %v819 = vsel %vm402, %v818, 0
    %821 = vmatprep.subr.mxu0 0.0
    %822 = vmatpush1.msra.mxu0 0.0
    %823 = vmatprep.subr.mxu0 0.0
    %824 = vmatpush1.msra.mxu0 0.0
    %825 = vmatprep.subr.mxu0 0.0
    %826 = vmatpush1.msra.mxu0 0.0
    %827 = vmatprep.subr.mxu0 0.0
    %828 = vmatpush1.msra.mxu0 0.0
    %829 = vmatprep.subr.mxu0 0.0
    %830 = vmatpush1.msra.mxu0 0.0
    %831 = vmatprep.subr.mxu0 0.0
    %832 = vmatpush1.msra.mxu0 0.0
    %833 = vmatprep.subr.mxu0 0.0
    %834 = vmatpush1.msra.mxu0 0.0
    %835 = vmatprep.subr.mxu0 0.0
    %836 = vmatpush1.msra.mxu0 0.0
    %837 = vmatprep.subr.mxu0 %v501
    %838 = vmatpush1.msra.mxu0 %v500
    %839 = vmatprep.subr.mxu0 %v499
    %840 = vmatpush1.msra.mxu0 %v498
    %841 = vmatprep.subr.mxu0 %v497
    %842 = vmatpush1.msra.mxu0 %v496
    %843 = vmatprep.subr.mxu0 %v495
    %844 = vmatpush1.msra.mxu0 %v494
    %845 = vmatprep.subr.mxu0 %v493
    %846 = vmatpush1.msra.mxu0 %v492
    %847 = vmatprep.subr.mxu0 %v491
    %848 = vmatpush1.msra.mxu0 %v490
    %849 = vmatprep.subr.mxu0 %v489
    %850 = vmatpush1.msra.mxu0 %v488
    %851 = vmatprep.subr.mxu0 %v487
    %852 = vmatpush1.msra.mxu0 %v486
    %853 = vmatprep.subr.mxu0 0.0
    %854 = vmatpush2.msra.mxu0 0.0
    %855 = vmatprep.subr.mxu0 0.0
    %856 = vmatpush2.msra.mxu0 0.0
    %857 = vmatprep.subr.mxu0 0.0
    %858 = vmatpush2.msra.mxu0 0.0
    %859 = vmatprep.subr.mxu0 0.0
    %860 = vmatpush2.msra.mxu0 0.0
    %861 = vmatprep.subr.mxu0 0.0
    %862 = vmatpush2.msra.mxu0 0.0
    %863 = vmatprep.subr.mxu0 0.0
    %864 = vmatpush2.msra.mxu0 0.0
    %865 = vmatprep.subr.mxu0 0.0
    %866 = vmatpush2.msra.mxu0 0.0
    %867 = vmatprep.subr.mxu0 0.0
    %868 = vmatpush2.msra.mxu0 0.0
    %869 = vmatprep.subr.mxu0 0.0
    %870 = vmatpush2.msra.mxu0 0.0
    %871 = vmatprep.subr.mxu0 0.0
    %872 = vmatpush2.msra.mxu0 0.0
    %873 = vmatprep.subr.mxu0 0.0
    %874 = vmatpush2.msra.mxu0 0.0
    %875 = vmatprep.subr.mxu0 0.0
    %876 = vmatpush2.msra.mxu0 0.0
    %877 = vmatprep.subr.mxu0 0.0
    %878 = vmatpush2.msra.mxu0 0.0
    %879 = vmatprep.subr.mxu0 0.0
    %880 = vmatpush2.msra.mxu0 0.0
    %881 = vmatprep.subr.mxu0 0.0
    %882 = vmatpush2.msra.mxu0 0.0
    %883 = vmatprep.subr.mxu0 0.0
    %884 = vmatpush2.msra.mxu0 0.0
    %885 = vmatprep.mubr.f32.mxu0 0.0
    %886 = vmatmul.mubr.f32.gmra.mxu0 %v819
    %v887 = vpop.f32.mrf.mxu0
    %v888 = vadd.f32 %v508, %v887
    %v889 = vpop.f32.mrf.mxu0
    %v890 = vadd.f32 %v512, %v889
    %891 = vdwg.mxu0
    %v893 = vrot.slane %v888, 2
    %v895 = vadd.f32 %v476, %v893
    %v896 = vxor.u32 %v895, 2147483648
    %v897 = vmul.f32 %v896, 1.442695
    %v898 = vpow.pop %v897
    %v899 = vadd.f32 %v898, 1.0
    %v900 = vrcp.pop %v899
    %v901 = vmul.f32 1.0, %v900
    %v903 = vrot.slane %v890, 2
    %v905 = vmul.f32 %v901, %v903
    %v906 = vadd.f32 %v478, %v905
    %v907 = vtanh.pop %v906
    %v908 = vsub.f32 1.0, %v901
    %910 = vrot.lane.b32.xlu0 %v907, 64
    %v911 = vpop.permute.xlu0 %910
    %v913 = vmul.f32 %v908, %v911
    %v914 = vrot.slane %v814, 6
    %v916 = vmul.f32 %v901, %v914
    %v917 = vadd.f32 %v913, %v916
    %v919 = vrot.slane %v917, 6
    %920 = vrot.lane.b32.xlu0 %v919, 64
    %v921 = vpop.permute.xlu0 %920
    %v922 = vsel %vm402, %v921, 0
    %924 = vmatprep.subr.mxu0 0.0
    %925 = vmatpush1.msra.mxu0 0.0
    %926 = vmatprep.subr.mxu0 0.0
    %927 = vmatpush1.msra.mxu0 0.0
    %928 = vmatprep.subr.mxu0 0.0
    %929 = vmatpush1.msra.mxu0 0.0
    %930 = vmatprep.subr.mxu0 0.0
    %931 = vmatpush1.msra.mxu0 0.0
    %932 = vmatprep.subr.mxu0 0.0
    %933 = vmatpush1.msra.mxu0 0.0
    %934 = vmatprep.subr.mxu0 0.0
    %935 = vmatpush1.msra.mxu0 0.0
    %936 = vmatprep.subr.mxu0 0.0
    %937 = vmatpush1.msra.mxu0 0.0
    %938 = vmatprep.subr.mxu0 0.0
    %939 = vmatpush1.msra.mxu0 0.0
    %940 = vmatprep.subr.mxu0 %v501
    %941 = vmatpush1.msra.mxu0 %v500
    %942 = vmatprep.subr.mxu0 %v499
    %943 = vmatpush1.msra.mxu0 %v498
    %944 = vmatprep.subr.mxu0 %v497
    %945 = vmatpush1.msra.mxu0 %v496
    %946 = vmatprep.subr.mxu0 %v495
    %947 = vmatpush1.msra.mxu0 %v494
    %948 = vmatprep.subr.mxu0 %v493
    %949 = vmatpush1.msra.mxu0 %v492
    %950 = vmatprep.subr.mxu0 %v491
    %951 = vmatpush1.msra.mxu0 %v490
    %952 = vmatprep.subr.mxu0 %v489
    %953 = vmatpush1.msra.mxu0 %v488
    %954 = vmatprep.subr.mxu0 %v487
    %955 = vmatpush1.msra.mxu0 %v486
    %956 = vmatprep.subr.mxu0 0.0
    %957 = vmatpush2.msra.mxu0 0.0
    %958 = vmatprep.subr.mxu0 0.0
    %959 = vmatpush2.msra.mxu0 0.0
    %960 = vmatprep.subr.mxu0 0.0
    %961 = vmatpush2.msra.mxu0 0.0
    %962 = vmatprep.subr.mxu0 0.0
    %963 = vmatpush2.msra.mxu0 0.0
    %964 = vmatprep.subr.mxu0 0.0
    %965 = vmatpush2.msra.mxu0 0.0
    %966 = vmatprep.subr.mxu0 0.0
    %967 = vmatpush2.msra.mxu0 0.0
    %968 = vmatprep.subr.mxu0 0.0
    %969 = vmatpush2.msra.mxu0 0.0
    %970 = vmatprep.subr.mxu0 0.0
    %971 = vmatpush2.msra.mxu0 0.0
    %972 = vmatprep.subr.mxu0 0.0
    %973 = vmatpush2.msra.mxu0 0.0
    %974 = vmatprep.subr.mxu0 0.0
    %975 = vmatpush2.msra.mxu0 0.0
    %976 = vmatprep.subr.mxu0 0.0
    %977 = vmatpush2.msra.mxu0 0.0
    %978 = vmatprep.subr.mxu0 0.0
    %979 = vmatpush2.msra.mxu0 0.0
    %980 = vmatprep.subr.mxu0 0.0
    %981 = vmatpush2.msra.mxu0 0.0
    %982 = vmatprep.subr.mxu0 0.0
    %983 = vmatpush2.msra.mxu0 0.0
    %984 = vmatprep.subr.mxu0 0.0
    %985 = vmatpush2.msra.mxu0 0.0
    %986 = vmatprep.subr.mxu0 0.0
    %987 = vmatpush2.msra.mxu0 0.0
    %988 = vmatprep.mubr.f32.mxu0 0.0
    %989 = vmatmul.mubr.f32.gmra.mxu0 %v922
    %v990 = vpop.f32.mrf.mxu0
    %v991 = vadd.f32 %v508, %v990
    %v992 = vpop.f32.mrf.mxu0
    %v993 = vadd.f32 %v512, %v992
    %994 = vdwg.mxu0
    %v995 = vadd.f32 %v482, %v991
    %v996 = vxor.u32 %v995, 2147483648
    %v997 = vmul.f32 %v996, 1.442695
    %v998 = vpow.pop %v997
    %v999 = vadd.f32 %v998, 1.0
    %v1000 = vrcp.pop %v999
    %v1001 = vmul.f32 1.0, %v1000
    %v1002 = vmul.f32 %v1001, %v993
    %v1003 = vadd.f32 %v484, %v1002
    %v1004 = vtanh.pop %v1003
    %v1005 = vsub.f32 1.0, %v1001
    %1007 = vrot.lane.b32.xlu0 %v1004, 64
    %v1008 = vpop.permute.xlu0 %1007
    %v1010 = vmul.f32 %v1005, %v1008
    %v1012 = vmul.f32 %v1001, %v919
    %v1013 = vadd.f32 %v1010, %v1012
    %1015 = vrot.lane.b32.xlu0 %v1013, 64
    %v1016 = vpop.permute.xlu0 %1015
    %v1017 = vsel %vm402, %v1016, 0
    %1019 = vmatprep.subr.mxu0 0.0
    %1020 = vmatpush1.msra.mxu0 0.0
    %1021 = vmatprep.subr.mxu0 0.0
    %1022 = vmatpush1.msra.mxu0 0.0
    %1023 = vmatprep.subr.mxu0 0.0
    %1024 = vmatpush1.msra.mxu0 0.0
    %1025 = vmatprep.subr.mxu0 0.0
    %1026 = vmatpush1.msra.mxu0 0.0
    %1027 = vmatprep.subr.mxu0 0.0
    %1028 = vmatpush1.msra.mxu0 0.0
    %1029 = vmatprep.subr.mxu0 0.0
    %1030 = vmatpush1.msra.mxu0 0.0
    %1031 = vmatprep.subr.mxu0 0.0
    %1032 = vmatpush1.msra.mxu0 0.0
    %1033 = vmatprep.subr.mxu0 0.0
    %1034 = vmatpush1.msra.mxu0 0.0
    %1035 = vmatprep.subr.mxu0 %v501
    %1036 = vmatpush1.msra.mxu0 %v500
    %1037 = vmatprep.subr.mxu0 %v499
    %1038 = vmatpush1.msra.mxu0 %v498
    %1039 = vmatprep.subr.mxu0 %v497
    %1040 = vmatpush1.msra.mxu0 %v496
    %1041 = vmatprep.subr.mxu0 %v495
    %1042 = vmatpush1.msra.mxu0 %v494
    %1043 = vmatprep.subr.mxu0 %v493
    %1044 = vmatpush1.msra.mxu0 %v492
    %1045 = vmatprep.subr.mxu0 %v491
    %1046 = vmatpush1.msra.mxu0 %v490
    %1047 = vmatprep.subr.mxu0 %v489
    %1048 = vmatpush1.msra.mxu0 %v488
    %1049 = vmatprep.subr.mxu0 %v487
    %1050 = vmatpush1.msra.mxu0 %v486
    %1051 = vmatprep.subr.mxu0 0.0
    %1052 = vmatpush2.msra.mxu0 0.0
    %1053 = vmatprep.subr.mxu0 0.0
    %1054 = vmatpush2.msra.mxu0 0.0
    %1055 = vmatprep.subr.mxu0 0.0
    %1056 = vmatpush2.msra.mxu0 0.0
    %1057 = vmatprep.subr.mxu0 0.0
    %1058 = vmatpush2.msra.mxu0 0.0
    %1059 = vmatprep.subr.mxu0 0.0
    %1060 = vmatpush2.msra.mxu0 0.0
    %1061 = vmatprep.subr.mxu0 0.0
    %1062 = vmatpush2.msra.mxu0 0.0
    %1063 = vmatprep.subr.mxu0 0.0
    %1064 = vmatpush2.msra.mxu0 0.0
    %1065 = vmatprep.subr.mxu0 0.0
    %1066 = vmatpush2.msra.mxu0 0.0
    %1067 = vmatprep.subr.mxu0 0.0
    %1068 = vmatpush2.msra.mxu0 0.0
    %1069 = vmatprep.subr.mxu0 0.0
    %1070 = vmatpush2.msra.mxu0 0.0
    %1071 = vmatprep.subr.mxu0 0.0
    %1072 = vmatpush2.msra.mxu0 0.0
    %1073 = vmatprep.subr.mxu0 0.0
    %1074 = vmatpush2.msra.mxu0 0.0
    %1075 = vmatprep.subr.mxu0 0.0
    %1076 = vmatpush2.msra.mxu0 0.0
    %1077 = vmatprep.subr.mxu0 0.0
    %1078 = vmatpush2.msra.mxu0 0.0
    %1079 = vmatprep.subr.mxu0 0.0
    %1080 = vmatpush2.msra.mxu0 0.0
    %1081 = vmatprep.subr.mxu0 0.0
    %1082 = vmatpush2.msra.mxu0 0.0
    %1083 = vmatprep.mubr.f32.mxu0 0.0
    %1084 = vmatmul.mubr.f32.gmra.mxu0 %v1017
    %v1085 = vpop.f32.mrf.mxu0
    %v1086 = vadd.f32 %v508, %v1085
    %v1087 = vpop.f32.mrf.mxu0
    %v1088 = vadd.f32 %v512, %v1087
    %1089 = vdwg.mxu0
    %v1091 = vrot.slane %v1086, 6
    %v1093 = vadd.f32 %v482, %v1091
    %v1094 = vxor.u32 %v1093, 2147483648
    %v1095 = vmul.f32 %v1094, 1.442695
    %v1096 = vpow.pop %v1095
    %v1097 = vadd.f32 %v1096, 1.0
    %v1098 = vrcp.pop %v1097
    %v1099 = vmul.f32 1.0, %v1098
    %v1101 = vrot.slane %v1088, 6
    %v1103 = vmul.f32 %v1099, %v1101
    %v1104 = vadd.f32 %v484, %v1103
    %v1105 = vtanh.pop %v1104
    %v1106 = vsub.f32 1.0, %v1099
    %1108 = vrot.lane.b32.xlu0 %v1105, 64
    %v1109 = vpop.permute.xlu0 %1108
    %v1111 = vmul.f32 %v1106, %v1109
    %v1112 = vrot.slane %v1013, 6
    %v1114 = vmul.f32 %v1099, %v1112
    %v1115 = vadd.f32 %v1111, %v1114
    %v1117 = vrot.slane %v1115, 2
    %1118 = vrot.lane.b32.xlu0 %v1117, 64
    %v1119 = vpop.permute.xlu0 %1118
    %v1120 = vsel %vm402, %v1119, 0
    %1122 = vmatprep.subr.mxu0 0.0
    %1123 = vmatpush1.msra.mxu0 0.0
    %1124 = vmatprep.subr.mxu0 0.0
    %1125 = vmatpush1.msra.mxu0 0.0
    %1126 = vmatprep.subr.mxu0 0.0
    %1127 = vmatpush1.msra.mxu0 0.0
    %1128 = vmatprep.subr.mxu0 0.0
    %1129 = vmatpush1.msra.mxu0 0.0
    %1130 = vmatprep.subr.mxu0 0.0
    %1131 = vmatpush1.msra.mxu0 0.0
    %1132 = vmatprep.subr.mxu0 0.0
    %1133 = vmatpush1.msra.mxu0 0.0
    %1134 = vmatprep.subr.mxu0 0.0
    %1135 = vmatpush1.msra.mxu0 0.0
    %1136 = vmatprep.subr.mxu0 0.0
    %1137 = vmatpush1.msra.mxu0 0.0
    %1138 = vmatprep.subr.mxu0 %v501
    %1139 = vmatpush1.msra.mxu0 %v500
    %1140 = vmatprep.subr.mxu0 %v499
    %1141 = vmatpush1.msra.mxu0 %v498
    %1142 = vmatprep.subr.mxu0 %v497
    %1143 = vmatpush1.msra.mxu0 %v496
    %1144 = vmatprep.subr.mxu0 %v495
    %1145 = vmatpush1.msra.mxu0 %v494
    %1146 = vmatprep.subr.mxu0 %v493
    %1147 = vmatpush1.msra.mxu0 %v492
    %1148 = vmatprep.subr.mxu0 %v491
    %1149 = vmatpush1.msra.mxu0 %v490
    %1150 = vmatprep.subr.mxu0 %v489
    %1151 = vmatpush1.msra.mxu0 %v488
    %1152 = vmatprep.subr.mxu0 %v487
    %1153 = vmatpush1.msra.mxu0 %v486
    %1154 = vmatprep.subr.mxu0 0.0
    %1155 = vmatpush2.msra.mxu0 0.0
    %1156 = vmatprep.subr.mxu0 0.0
    %1157 = vmatpush2.msra.mxu0 0.0
    %1158 = vmatprep.subr.mxu0 0.0
    %1159 = vmatpush2.msra.mxu0 0.0
    %1160 = vmatprep.subr.mxu0 0.0
    %1161 = vmatpush2.msra.mxu0 0.0
    %1162 = vmatprep.subr.mxu0 0.0
    %1163 = vmatpush2.msra.mxu0 0.0
    %1164 = vmatprep.subr.mxu0 0.0
    %1165 = vmatpush2.msra.mxu0 0.0
    %1166 = vmatprep.subr.mxu0 0.0
    %1167 = vmatpush2.msra.mxu0 0.0
    %1168 = vmatprep.subr.mxu0 0.0
    %1169 = vmatpush2.msra.mxu0 0.0
    %1170 = vmatprep.subr.mxu0 0.0
    %1171 = vmatpush2.msra.mxu0 0.0
    %1172 = vmatprep.subr.mxu0 0.0
    %1173 = vmatpush2.msra.mxu0 0.0
    %1174 = vmatprep.subr.mxu0 0.0
    %1175 = vmatpush2.msra.mxu0 0.0
    %1176 = vmatprep.subr.mxu0 0.0
    %1177 = vmatpush2.msra.mxu0 0.0
    %1178 = vmatprep.subr.mxu0 0.0
    %1179 = vmatpush2.msra.mxu0 0.0
    %1180 = vmatprep.subr.mxu0 0.0
    %1181 = vmatpush2.msra.mxu0 0.0
    %1182 = vmatprep.subr.mxu0 0.0
    %1183 = vmatpush2.msra.mxu0 0.0
    %1184 = vmatprep.subr.mxu0 0.0
    %1185 = vmatpush2.msra.mxu0 0.0
    %1186 = vmatprep.mubr.f32.mxu0 0.0
    %1187 = vmatmul.mubr.f32.gmra.mxu0 %v1120
    %v1188 = vpop.f32.mrf.mxu0
    %v1189 = vadd.f32 %v508, %v1188
    %v1190 = vpop.f32.mrf.mxu0
    %v1191 = vadd.f32 %v512, %v1190
    %1192 = vdwg.mxu0
    %v1194 = vrot.slane %v1189, 4
    %v1196 = vadd.f32 %v482, %v1194
    %v1197 = vxor.u32 %v1196, 2147483648
    %v1198 = vmul.f32 %v1197, 1.442695
    %v1199 = vpow.pop %v1198
    %v1200 = vadd.f32 %v1199, 1.0
    %v1201 = vrcp.pop %v1200
    %v1202 = vmul.f32 1.0, %v1201
    %v1204 = vrot.slane %v1191, 4
    %v1206 = vmul.f32 %v1202, %v1204
    %v1207 = vadd.f32 %v484, %v1206
    %v1208 = vtanh.pop %v1207
    %v1209 = vsub.f32 1.0, %v1202
    %1211 = vrot.lane.b32.xlu0 %v1208, 64
    %v1212 = vpop.permute.xlu0 %1211
    %v1214 = vmul.f32 %v1209, %v1212
    %v1215 = vrot.slane %v1115, 6
    %v1217 = vmul.f32 %v1202, %v1215
    %v1218 = vadd.f32 %v1214, %v1217
    %v1220 = vrot.slane %v1218, 4
    %1221 = vrot.lane.b32.xlu0 %v1220, 64
    %v1222 = vpop.permute.xlu0 %1221
    %v1223 = vsel %vm402, %v1222, 0
    %1225 = vmatprep.subr.mxu0 0.0
    %1226 = vmatpush1.msra.mxu0 0.0
    %1227 = vmatprep.subr.mxu0 0.0
    %1228 = vmatpush1.msra.mxu0 0.0
    %1229 = vmatprep.subr.mxu0 0.0
    %1230 = vmatpush1.msra.mxu0 0.0
    %1231 = vmatprep.subr.mxu0 0.0
    %1232 = vmatpush1.msra.mxu0 0.0
    %1233 = vmatprep.subr.mxu0 0.0
    %1234 = vmatpush1.msra.mxu0 0.0
    %1235 = vmatprep.subr.mxu0 0.0
    %1236 = vmatpush1.msra.mxu0 0.0
    %1237 = vmatprep.subr.mxu0 0.0
    %1238 = vmatpush1.msra.mxu0 0.0
    %1239 = vmatprep.subr.mxu0 0.0
    %1240 = vmatpush1.msra.mxu0 0.0
    %1241 = vmatprep.subr.mxu0 %v501
    %1242 = vmatpush1.msra.mxu0 %v500
    %1243 = vmatprep.subr.mxu0 %v499
    %1244 = vmatpush1.msra.mxu0 %v498
    %1245 = vmatprep.subr.mxu0 %v497
    %1246 = vmatpush1.msra.mxu0 %v496
    %1247 = vmatprep.subr.mxu0 %v495
    %1248 = vmatpush1.msra.mxu0 %v494
    %1249 = vmatprep.subr.mxu0 %v493
    %1250 = vmatpush1.msra.mxu0 %v492
    %1251 = vmatprep.subr.mxu0 %v491
    %1252 = vmatpush1.msra.mxu0 %v490
    %1253 = vmatprep.subr.mxu0 %v489
    %1254 = vmatpush1.msra.mxu0 %v488
    %1255 = vmatprep.subr.mxu0 %v487
    %1256 = vmatpush1.msra.mxu0 %v486
    %1257 = vmatprep.subr.mxu0 0.0
    %1258 = vmatpush2.msra.mxu0 0.0
    %1259 = vmatprep.subr.mxu0 0.0
    %1260 = vmatpush2.msra.mxu0 0.0
    %1261 = vmatprep.subr.mxu0 0.0
    %1262 = vmatpush2.msra.mxu0 0.0
    %1263 = vmatprep.subr.mxu0 0.0
    %1264 = vmatpush2.msra.mxu0 0.0
    %1265 = vmatprep.subr.mxu0 0.0
    %1266 = vmatpush2.msra.mxu0 0.0
    %1267 = vmatprep.subr.mxu0 0.0
    %1268 = vmatpush2.msra.mxu0 0.0
    %1269 = vmatprep.subr.mxu0 0.0
    %1270 = vmatpush2.msra.mxu0 0.0
    %1271 = vmatprep.subr.mxu0 0.0
    %1272 = vmatpush2.msra.mxu0 0.0
    %1273 = vmatprep.subr.mxu0 0.0
    %1274 = vmatpush2.msra.mxu0 0.0
    %1275 = vmatprep.subr.mxu0 0.0
    %1276 = vmatpush2.msra.mxu0 0.0
    %1277 = vmatprep.subr.mxu0 0.0
    %1278 = vmatpush2.msra.mxu0 0.0
    %1279 = vmatprep.subr.mxu0 0.0
    %1280 = vmatpush2.msra.mxu0 0.0
    %1281 = vmatprep.subr.mxu0 0.0
    %1282 = vmatpush2.msra.mxu0 0.0
    %1283 = vmatprep.subr.mxu0 0.0
    %1284 = vmatpush2.msra.mxu0 0.0
    %1285 = vmatprep.subr.mxu0 0.0
    %1286 = vmatpush2.msra.mxu0 0.0
    %1287 = vmatprep.subr.mxu0 0.0
    %1288 = vmatpush2.msra.mxu0 0.0
    %1289 = vmatprep.mubr.f32.mxu0 0.0
    %1290 = vmatmul.mubr.f32.gmra.mxu0 %v1223
    %v1291 = vpop.f32.mrf.mxu0
    %v1292 = vadd.f32 %v508, %v1291
    %v1293 = vpop.f32.mrf.mxu0
    %v1294 = vadd.f32 %v512, %v1293
    %1295 = vdwg.mxu0
    %v1297 = vrot.slane %v1292, 2
    %v1299 = vadd.f32 %v482, %v1297
    %v1300 = vxor.u32 %v1299, 2147483648
    %v1301 = vmul.f32 %v1300, 1.442695
    %v1302 = vpow.pop %v1301
    %v1303 = vadd.f32 %v1302, 1.0
    %v1304 = vrcp.pop %v1303
    %v1305 = vmul.f32 1.0, %v1304
    %v1307 = vrot.slane %v1294, 2
    %v1309 = vmul.f32 %v1305, %v1307
    %v1310 = vadd.f32 %v484, %v1309
    %v1311 = vtanh.pop %v1310
    %v1312 = vsub.f32 1.0, %v1305
    %1314 = vrot.lane.b32.xlu0 %v1311, 64
    %v1315 = vpop.permute.xlu0 %1314
    %v1317 = vmul.f32 %v1312, %v1315
    %v1318 = vrot.slane %v1218, 6
    %v1320 = vmul.f32 %v1305, %v1318
    %v1321 = vadd.f32 %v1317, %v1320
    %vm1322 = vcmask 1041408
    %v1323 = vsel %vm1322, %v609, %v711
    %vm1324 = vcmask 1043456
    %v1325 = vsel %vm1324, %v1323, %v814
    %vm1326 = vcmask 1045504
    %v1327 = vsel %vm1326, %v1325, %v917
    %v1328 = vsel %vm1322, %v1013, %v1115
    %v1329 = vsel %vm1324, %v1328, %v1218
    %v1330 = vsel %vm1326, %v1329, %v1321
    %v1331 = vld [vmem:[#allocation11] sm:$0xff]
    %v1332 = vld [vmem:[#allocation11 + $0x8] sm:$0xff]
    %v1333 = vld [vmem:[#allocation11 + $0x10] sm:$0xff]
    %v1334 = vld [vmem:[#allocation11 + $0x18] sm:$0xff]
    %v1335 = vld [vmem:[#allocation11 + $0x20] sm:$0xff]
    %v1336 = vld [vmem:[#allocation11 + $0x28] sm:$0xff]
    %v1337 = vld [vmem:[#allocation11 + $0x30] sm:$0xff]
    %v1338 = vld [vmem:[#allocation11 + $0x38] sm:$0xff]
    %v1339 = vld [vmem:[#allocation11 + $0x40] sm:$0xff]
    %v1340 = vld [vmem:[#allocation11 + $0x48] sm:$0xff]
    %v1341 = vld [vmem:[#allocation11 + $0x50] sm:$0xff]
    %v1342 = vld [vmem:[#allocation11 + $0x58] sm:$0xff]
    %v1343 = vld [vmem:[#allocation11 + $0x60] sm:$0xff]
    %v1344 = vld [vmem:[#allocation11 + $0x68] sm:$0xff]
    %v1345 = vld [vmem:[#allocation11 + $0x70] sm:$0xff]
    %v1346 = vld [vmem:[#allocation11 + $0x78] sm:$0xff]
    %v1347 = vld [vmem:[%s11] sm:$0x3]
    %v1349 = vlaneseq
    %v1350 = vshrl.u32 %v1349, 7
    %v1351 = vsub.s32 0, %v1350
    %v1352 = vrot.slane %v1347, %v1351
    %v1353 = vlaneseq
    %v1354 = vshrl.u32 %v1353, 7
    %v1355 = vsub.s32 1, %v1354
    %v1356 = vrot.slane %v1347, %v1355
    %1361 = vrot.lane.b32.xlu0 %v1327, 64
    %v1362 = vpop.permute.xlu0 %1361
    %1363 = vrot.lane.b32.xlu0 %v1330, 64
    %v1364 = vpop.permute.xlu0 %1363
    %v1365 = vsel %vm402, %v1362, 0
    %v1367 = vsel %vm402, %v1364, 0
    %1369 = vmatprep.subr.mxu0 0.0
    %1370 = vmatpush1.msra.mxu0 0.0
    %1371 = vmatprep.subr.mxu0 0.0
    %1372 = vmatpush1.msra.mxu0 0.0
    %1373 = vmatprep.subr.mxu0 0.0
    %1374 = vmatpush1.msra.mxu0 0.0
    %1375 = vmatprep.subr.mxu0 0.0
    %1376 = vmatpush1.msra.mxu0 0.0
    %1377 = vmatprep.subr.mxu0 0.0
    %1378 = vmatpush1.msra.mxu0 0.0
    %1379 = vmatprep.subr.mxu0 0.0
    %1380 = vmatpush1.msra.mxu0 0.0
    %1381 = vmatprep.subr.mxu0 0.0
    %1382 = vmatpush1.msra.mxu0 0.0
    %1383 = vmatprep.subr.mxu0 0.0
    %1384 = vmatpush1.msra.mxu0 0.0
    %1385 = vmatprep.subr.mxu0 %v1346
    %1386 = vmatpush1.msra.mxu0 %v1345
    %1387 = vmatprep.subr.mxu0 %v1344
    %1388 = vmatpush1.msra.mxu0 %v1343
    %1389 = vmatprep.subr.mxu0 %v1342
    %1390 = vmatpush1.msra.mxu0 %v1341
    %1391 = vmatprep.subr.mxu0 %v1340
    %1392 = vmatpush1.msra.mxu0 %v1339
    %1393 = vmatprep.subr.mxu0 %v1338
    %1394 = vmatpush1.msra.mxu0 %v1337
    %1395 = vmatprep.subr.mxu0 %v1336
    %1396 = vmatpush1.msra.mxu0 %v1335
    %1397 = vmatprep.subr.mxu0 %v1334
    %1398 = vmatpush1.msra.mxu0 %v1333
    %1399 = vmatprep.subr.mxu0 %v1332
    %1400 = vmatpush1.msra.mxu0 %v1331
    %1401 = vmatprep.subr.mxu0 0.0
    %1402 = vmatpush2.msra.mxu0 0.0
    %1403 = vmatprep.subr.mxu0 0.0
    %1404 = vmatpush2.msra.mxu0 0.0
    %1405 = vmatprep.subr.mxu0 0.0
    %1406 = vmatpush2.msra.mxu0 0.0
    %1407 = vmatprep.subr.mxu0 0.0
    %1408 = vmatpush2.msra.mxu0 0.0
    %1409 = vmatprep.subr.mxu0 0.0
    %1410 = vmatpush2.msra.mxu0 0.0
    %1411 = vmatprep.subr.mxu0 0.0
    %1412 = vmatpush2.msra.mxu0 0.0
    %1413 = vmatprep.subr.mxu0 0.0
    %1414 = vmatpush2.msra.mxu0 0.0
    %1415 = vmatprep.subr.mxu0 0.0
    %1416 = vmatpush2.msra.mxu0 0.0
    %1417 = vmatprep.subr.mxu0 0.0
    %1418 = vmatpush2.msra.mxu0 0.0
    %1419 = vmatprep.subr.mxu0 0.0
    %1420 = vmatpush2.msra.mxu0 0.0
    %1421 = vmatprep.subr.mxu0 0.0
    %1422 = vmatpush2.msra.mxu0 0.0
    %1423 = vmatprep.subr.mxu0 0.0
    %1424 = vmatpush2.msra.mxu0 0.0
    %1425 = vmatprep.subr.mxu0 0.0
    %1426 = vmatpush2.msra.mxu0 0.0
    %1427 = vmatprep.subr.mxu0 0.0
    %1428 = vmatpush2.msra.mxu0 0.0
    %1429 = vmatprep.subr.mxu0 0.0
    %1430 = vmatpush2.msra.mxu0 0.0
    %1431 = vmatprep.subr.mxu0 0.0
    %1432 = vmatpush2.msra.mxu0 0.0
    %1433 = vmatprep.mubr.f32.mxu0 0.0
    %1434 = vmatmul.mubr.f32.gmra.mxu0 %v1365
    %v1435 = vpop.f32.mrf.mxu0
    %v1436 = vadd.f32 %v1352, %v1435
    %v1437 = vpop.f32.mrf.mxu0
    %v1438 = vadd.f32 %v1356, %v1437
    %1439 = vmatprep.mubr.f32.mxu0 0.0
    %1440 = vmatmul.mubr.f32.gmra.mxu0 %v1367
    %v1441 = vpop.f32.mrf.mxu0
    %v1442 = vadd.f32 %v1352, %v1441
    %v1443 = vpop.f32.mrf.mxu0
    %v1444 = vadd.f32 %v1356, %v1443
    %1445 = vdwg.mxu0
    %v1446 = vld [vmem:[#allocation13] sm:$0xff]
    %v1447 = vld [vmem:[#allocation13 + $0x8] sm:$0xff]
    %v1448 = vld [vmem:[#allocation13 + $0x10] sm:$0xff]
    %v1449 = vld [vmem:[#allocation13 + $0x18] sm:$0xff]
    %v1450 = vld [vmem:[#allocation13 + $0x20] sm:$0xff]
    %v1451 = vld [vmem:[#allocation13 + $0x28] sm:$0xff]
    %v1452 = vld [vmem:[#allocation13 + $0x30] sm:$0xff]
    %v1453 = vld [vmem:[#allocation13 + $0x38] sm:$0xff]
    %v1454 = vld [vmem:[#allocation13 + $0x40] sm:$0xff]
    %v1455 = vld [vmem:[#allocation13 + $0x48] sm:$0xff]
    %v1456 = vld [vmem:[#allocation13 + $0x50] sm:$0xff]
    %v1457 = vld [vmem:[#allocation13 + $0x58] sm:$0xff]
    %v1458 = vld [vmem:[#allocation13 + $0x60] sm:$0xff]
    %v1459 = vld [vmem:[#allocation13 + $0x68] sm:$0xff]
    %v1460 = vld [vmem:[#allocation13 + $0x70] sm:$0xff]
    %v1461 = vld [vmem:[#allocation13 + $0x78] sm:$0xff]
    %v1462 = vld [vmem:[#allocation14] sm:$0x3]
    %s1463 = scalar_lea.vmem [#allocation17], 2
    %v1464 = vld [vmem:[%s1463] sm:$0x3]
    %v1466 = vlaneseq
    %v1467 = vshrl.u32 %v1466, 7
    %v1468 = vsub.s32 0, %v1467
    %v1469 = vrot.slane %v1462, %v1468
    %v1470 = vlaneseq
    %v1471 = vshrl.u32 %v1470, 7
    %v1472 = vsub.s32 1, %v1471
    %v1473 = vrot.slane %v1462, %v1472
    %v1477 = vsel %vm402, %v1464, 0
    %1479 = vmatprep.subr.mxu0 0.0
    %1480 = vmatpush1.msra.mxu0 0.0
    %1481 = vmatprep.subr.mxu0 0.0
    %1482 = vmatpush1.msra.mxu0 0.0
    %1483 = vmatprep.subr.mxu0 0.0
    %1484 = vmatpush1.msra.mxu0 0.0
    %1485 = vmatprep.subr.mxu0 0.0
    %1486 = vmatpush1.msra.mxu0 0.0
    %1487 = vmatprep.subr.mxu0 0.0
    %1488 = vmatpush1.msra.mxu0 0.0
    %1489 = vmatprep.subr.mxu0 0.0
    %1490 = vmatpush1.msra.mxu0 0.0
    %1491 = vmatprep.subr.mxu0 0.0
    %1492 = vmatpush1.msra.mxu0 0.0
    %1493 = vmatprep.subr.mxu0 0.0
    %1494 = vmatpush1.msra.mxu0 0.0
    %1495 = vmatprep.subr.mxu0 %v1461
    %1496 = vmatpush1.msra.mxu0 %v1460
    %1497 = vmatprep.subr.mxu0 %v1459
    %1498 = vmatpush1.msra.mxu0 %v1458
    %1499 = vmatprep.subr.mxu0 %v1457
    %1500 = vmatpush1.msra.mxu0 %v1456
    %1501 = vmatprep.subr.mxu0 %v1455
    %1502 = vmatpush1.msra.mxu0 %v1454
    %1503 = vmatprep.subr.mxu0 %v1453
    %1504 = vmatpush1.msra.mxu0 %v1452
    %1505 = vmatprep.subr.mxu0 %v1451
    %1506 = vmatpush1.msra.mxu0 %v1450
    %1507 = vmatprep.subr.mxu0 %v1449
    %1508 = vmatpush1.msra.mxu0 %v1448
    %1509 = vmatprep.subr.mxu0 %v1447
    %1510 = vmatpush1.msra.mxu0 %v1446
    %1511 = vmatprep.subr.mxu0 0.0
    %1512 = vmatpush2.msra.mxu0 0.0
    %1513 = vmatprep.subr.mxu0 0.0
    %1514 = vmatpush2.msra.mxu0 0.0
    %1515 = vmatprep.subr.mxu0 0.0
    %1516 = vmatpush2.msra.mxu0 0.0
    %1517 = vmatprep.subr.mxu0 0.0
    %1518 = vmatpush2.msra.mxu0 0.0
    %1519 = vmatprep.subr.mxu0 0.0
    %1520 = vmatpush2.msra.mxu0 0.0
    %1521 = vmatprep.subr.mxu0 0.0
    %1522 = vmatpush2.msra.mxu0 0.0
    %1523 = vmatprep.subr.mxu0 0.0
    %1524 = vmatpush2.msra.mxu0 0.0
    %1525 = vmatprep.subr.mxu0 0.0
    %1526 = vmatpush2.msra.mxu0 0.0
    %1527 = vmatprep.subr.mxu0 0.0
    %1528 = vmatpush2.msra.mxu0 0.0
    %1529 = vmatprep.subr.mxu0 0.0
    %1530 = vmatpush2.msra.mxu0 0.0
    %1531 = vmatprep.subr.mxu0 0.0
    %1532 = vmatpush2.msra.mxu0 0.0
    %1533 = vmatprep.subr.mxu0 0.0
    %1534 = vmatpush2.msra.mxu0 0.0
    %1535 = vmatprep.subr.mxu0 0.0
    %1536 = vmatpush2.msra.mxu0 0.0
    %1537 = vmatprep.subr.mxu0 0.0
    %1538 = vmatpush2.msra.mxu0 0.0
    %1539 = vmatprep.subr.mxu0 0.0
    %1540 = vmatpush2.msra.mxu0 0.0
    %1541 = vmatprep.subr.mxu0 0.0
    %1542 = vmatpush2.msra.mxu0 0.0
    %1543 = vmatprep.mubr.f32.mxu0 0.0
    %1544 = vmatmul.mubr.f32.gmra.mxu0 %v1477
    %v1545 = vpop.f32.mrf.mxu0
    %v1546 = vadd.f32 %v1469, %v1545
    %v1547 = vpop.f32.mrf.mxu0
    %v1548 = vadd.f32 %v1473, %v1547
    %1549 = vdwg.mxu0
    %v1550 = vadd.f32 %v1436, %v1546
    %v1551 = vxor.u32 %v1550, 2147483648
    %v1552 = vmul.f32 %v1551, 1.442695
    %v1553 = vpow.pop %v1552
    %v1554 = vadd.f32 %v1553, 1.0
    %v1555 = vrcp.pop %v1554
    %v1556 = vmul.f32 1.0, %v1555
    %v1557 = vmul.f32 %v1556, %v1548
    %v1558 = vadd.f32 %v1438, %v1557
    %v1559 = vtanh.pop %v1558
    %v1560 = vsub.f32 1.0, %v1556
    %1562 = vrot.lane.b32.xlu0 %v1559, 64
    %v1563 = vpop.permute.xlu0 %1562
    %v1565 = vmul.f32 %v1560, %v1563
    %1566 = vrot.lane.b32.xlu0 %v1464, 64
    %v1567 = vpop.permute.xlu0 %1566
    %v1569 = vmul.f32 %v1556, %v1567
    %v1570 = vadd.f32 %v1565, %v1569
    %1572 = vrot.lane.b32.xlu0 %v1570, 64
    %v1573 = vpop.permute.xlu0 %1572
    %v1574 = vsel %vm402, %v1573, 0
    %1576 = vmatprep.subr.mxu0 0.0
    %1577 = vmatpush1.msra.mxu0 0.0
    %1578 = vmatprep.subr.mxu0 0.0
    %1579 = vmatpush1.msra.mxu0 0.0
    %1580 = vmatprep.subr.mxu0 0.0
    %1581 = vmatpush1.msra.mxu0 0.0
    %1582 = vmatprep.subr.mxu0 0.0
    %1583 = vmatpush1.msra.mxu0 0.0
    %1584 = vmatprep.subr.mxu0 0.0
    %1585 = vmatpush1.msra.mxu0 0.0
    %1586 = vmatprep.subr.mxu0 0.0
    %1587 = vmatpush1.msra.mxu0 0.0
    %1588 = vmatprep.subr.mxu0 0.0
    %1589 = vmatpush1.msra.mxu0 0.0
    %1590 = vmatprep.subr.mxu0 0.0
    %1591 = vmatpush1.msra.mxu0 0.0
    %1592 = vmatprep.subr.mxu0 %v1461
    %1593 = vmatpush1.msra.mxu0 %v1460
    %1594 = vmatprep.subr.mxu0 %v1459
    %1595 = vmatpush1.msra.mxu0 %v1458
    %1596 = vmatprep.subr.mxu0 %v1457
    %1597 = vmatpush1.msra.mxu0 %v1456
    %1598 = vmatprep.subr.mxu0 %v1455
    %1599 = vmatpush1.msra.mxu0 %v1454
    %1600 = vmatprep.subr.mxu0 %v1453
    %1601 = vmatpush1.msra.mxu0 %v1452
    %1602 = vmatprep.subr.mxu0 %v1451
    %1603 = vmatpush1.msra.mxu0 %v1450
    %1604 = vmatprep.subr.mxu0 %v1449
    %1605 = vmatpush1.msra.mxu0 %v1448
    %1606 = vmatprep.subr.mxu0 %v1447
    %1607 = vmatpush1.msra.mxu0 %v1446
    %1608 = vmatprep.subr.mxu0 0.0
    %1609 = vmatpush2.msra.mxu0 0.0
    %1610 = vmatprep.subr.mxu0 0.0
    %1611 = vmatpush2.msra.mxu0 0.0
    %1612 = vmatprep.subr.mxu0 0.0
    %1613 = vmatpush2.msra.mxu0 0.0
    %1614 = vmatprep.subr.mxu0 0.0
    %1615 = vmatpush2.msra.mxu0 0.0
    %1616 = vmatprep.subr.mxu0 0.0
    %1617 = vmatpush2.msra.mxu0 0.0
    %1618 = vmatprep.subr.mxu0 0.0
    %1619 = vmatpush2.msra.mxu0 0.0
    %1620 = vmatprep.subr.mxu0 0.0
    %1621 = vmatpush2.msra.mxu0 0.0
    %1622 = vmatprep.subr.mxu0 0.0
    %1623 = vmatpush2.msra.mxu0 0.0
    %1624 = vmatprep.subr.mxu0 0.0
    %1625 = vmatpush2.msra.mxu0 0.0
    %1626 = vmatprep.subr.mxu0 0.0
    %1627 = vmatpush2.msra.mxu0 0.0
    %1628 = vmatprep.subr.mxu0 0.0
    %1629 = vmatpush2.msra.mxu0 0.0
    %1630 = vmatprep.subr.mxu0 0.0
    %1631 = vmatpush2.msra.mxu0 0.0
    %1632 = vmatprep.subr.mxu0 0.0
    %1633 = vmatpush2.msra.mxu0 0.0
    %1634 = vmatprep.subr.mxu0 0.0
    %1635 = vmatpush2.msra.mxu0 0.0
    %1636 = vmatprep.subr.mxu0 0.0
    %1637 = vmatpush2.msra.mxu0 0.0
    %1638 = vmatprep.subr.mxu0 0.0
    %1639 = vmatpush2.msra.mxu0 0.0
    %1640 = vmatprep.mubr.f32.mxu0 0.0
    %1641 = vmatmul.mubr.f32.gmra.mxu0 %v1574
    %v1642 = vpop.f32.mrf.mxu0
    %v1643 = vadd.f32 %v1469, %v1642
    %v1644 = vpop.f32.mrf.mxu0
    %v1645 = vadd.f32 %v1473, %v1644
    %1646 = vdwg.mxu0
    %v1648 = vrot.slane %v1643, 6
    %v1650 = vadd.f32 %v1436, %v1648
    %v1651 = vxor.u32 %v1650, 2147483648
    %v1652 = vmul.f32 %v1651, 1.442695
    %v1653 = vpow.pop %v1652
    %v1654 = vadd.f32 %v1653, 1.0
    %v1655 = vrcp.pop %v1654
    %v1656 = vmul.f32 1.0, %v1655
    %v1658 = vrot.slane %v1645, 6
    %v1660 = vmul.f32 %v1656, %v1658
    %v1661 = vadd.f32 %v1438, %v1660
    %v1662 = vtanh.pop %v1661
    %v1663 = vsub.f32 1.0, %v1656
    %1665 = vrot.lane.b32.xlu0 %v1662, 64
    %v1666 = vpop.permute.xlu0 %1665
    %v1668 = vmul.f32 %v1663, %v1666
    %v1669 = vrot.slane %v1570, 6
    %v1671 = vmul.f32 %v1656, %v1669
    %v1672 = vadd.f32 %v1668, %v1671
    %v1674 = vrot.slane %v1672, 2
    %1675 = vrot.lane.b32.xlu0 %v1674, 64
    %v1676 = vpop.permute.xlu0 %1675
    %v1677 = vsel %vm402, %v1676, 0
    %1679 = vmatprep.subr.mxu0 0.0
    %1680 = vmatpush1.msra.mxu0 0.0
    %1681 = vmatprep.subr.mxu0 0.0
    %1682 = vmatpush1.msra.mxu0 0.0
    %1683 = vmatprep.subr.mxu0 0.0
    %1684 = vmatpush1.msra.mxu0 0.0
    %1685 = vmatprep.subr.mxu0 0.0
    %1686 = vmatpush1.msra.mxu0 0.0
    %1687 = vmatprep.subr.mxu0 0.0
    %1688 = vmatpush1.msra.mxu0 0.0
    %1689 = vmatprep.subr.mxu0 0.0
    %1690 = vmatpush1.msra.mxu0 0.0
    %1691 = vmatprep.subr.mxu0 0.0
    %1692 = vmatpush1.msra.mxu0 0.0
    %1693 = vmatprep.subr.mxu0 0.0
    %1694 = vmatpush1.msra.mxu0 0.0
    %1695 = vmatprep.subr.mxu0 %v1461
    %1696 = vmatpush1.msra.mxu0 %v1460
    %1697 = vmatprep.subr.mxu0 %v1459
    %1698 = vmatpush1.msra.mxu0 %v1458
    %1699 = vmatprep.subr.mxu0 %v1457
    %1700 = vmatpush1.msra.mxu0 %v1456
    %1701 = vmatprep.subr.mxu0 %v1455
    %1702 = vmatpush1.msra.mxu0 %v1454
    %1703 = vmatprep.subr.mxu0 %v1453
    %1704 = vmatpush1.msra.mxu0 %v1452
    %1705 = vmatprep.subr.mxu0 %v1451
    %1706 = vmatpush1.msra.mxu0 %v1450
    %1707 = vmatprep.subr.mxu0 %v1449
    %1708 = vmatpush1.msra.mxu0 %v1448
    %1709 = vmatprep.subr.mxu0 %v1447
    %1710 = vmatpush1.msra.mxu0 %v1446
    %1711 = vmatprep.subr.mxu0 0.0
    %1712 = vmatpush2.msra.mxu0 0.0
    %1713 = vmatprep.subr.mxu0 0.0
    %1714 = vmatpush2.msra.mxu0 0.0
    %1715 = vmatprep.subr.mxu0 0.0
    %1716 = vmatpush2.msra.mxu0 0.0
    %1717 = vmatprep.subr.mxu0 0.0
    %1718 = vmatpush2.msra.mxu0 0.0
    %1719 = vmatprep.subr.mxu0 0.0
    %1720 = vmatpush2.msra.mxu0 0.0
    %1721 = vmatprep.subr.mxu0 0.0
    %1722 = vmatpush2.msra.mxu0 0.0
    %1723 = vmatprep.subr.mxu0 0.0
    %1724 = vmatpush2.msra.mxu0 0.0
    %1725 = vmatprep.subr.mxu0 0.0
    %1726 = vmatpush2.msra.mxu0 0.0
    %1727 = vmatprep.subr.mxu0 0.0
    %1728 = vmatpush2.msra.mxu0 0.0
    %1729 = vmatprep.subr.mxu0 0.0
    %1730 = vmatpush2.msra.mxu0 0.0
    %1731 = vmatprep.subr.mxu0 0.0
    %1732 = vmatpush2.msra.mxu0 0.0
    %1733 = vmatprep.subr.mxu0 0.0
    %1734 = vmatpush2.msra.mxu0 0.0
    %1735 = vmatprep.subr.mxu0 0.0
    %1736 = vmatpush2.msra.mxu0 0.0
    %1737 = vmatprep.subr.mxu0 0.0
    %1738 = vmatpush2.msra.mxu0 0.0
    %1739 = vmatprep.subr.mxu0 0.0
    %1740 = vmatpush2.msra.mxu0 0.0
    %1741 = vmatprep.subr.mxu0 0.0
    %1742 = vmatpush2.msra.mxu0 0.0
    %1743 = vmatprep.mubr.f32.mxu0 0.0
    %1744 = vmatmul.mubr.f32.gmra.mxu0 %v1677
    %v1745 = vpop.f32.mrf.mxu0
    %v1746 = vadd.f32 %v1469, %v1745
    %v1747 = vpop.f32.mrf.mxu0
    %v1748 = vadd.f32 %v1473, %v1747
    %1749 = vdwg.mxu0
    %v1751 = vrot.slane %v1746, 4
    %v1753 = vadd.f32 %v1436, %v1751
    %v1754 = vxor.u32 %v1753, 2147483648
    %v1755 = vmul.f32 %v1754, 1.442695
    %v1756 = vpow.pop %v1755
    %v1757 = vadd.f32 %v1756, 1.0
    %v1758 = vrcp.pop %v1757
    %v1759 = vmul.f32 1.0, %v1758
    %v1761 = vrot.slane %v1748, 4
    %v1763 = vmul.f32 %v1759, %v1761
    %v1764 = vadd.f32 %v1438, %v1763
    %v1765 = vtanh.pop %v1764
    %v1766 = vsub.f32 1.0, %v1759
    %1768 = vrot.lane.b32.xlu0 %v1765, 64
    %v1769 = vpop.permute.xlu0 %1768
    %v1771 = vmul.f32 %v1766, %v1769
    %v1772 = vrot.slane %v1672, 6
    %v1774 = vmul.f32 %v1759, %v1772
    %v1775 = vadd.f32 %v1771, %v1774
    %v1777 = vrot.slane %v1775, 4
    %1778 = vrot.lane.b32.xlu0 %v1777, 64
    %v1779 = vpop.permute.xlu0 %1778
    %v1780 = vsel %vm402, %v1779, 0
    %1782 = vmatprep.subr.mxu0 0.0
    %1783 = vmatpush1.msra.mxu0 0.0
    %1784 = vmatprep.subr.mxu0 0.0
    %1785 = vmatpush1.msra.mxu0 0.0
    %1786 = vmatprep.subr.mxu0 0.0
    %1787 = vmatpush1.msra.mxu0 0.0
    %1788 = vmatprep.subr.mxu0 0.0
    %1789 = vmatpush1.msra.mxu0 0.0
    %1790 = vmatprep.subr.mxu0 0.0
    %1791 = vmatpush1.msra.mxu0 0.0
    %1792 = vmatprep.subr.mxu0 0.0
    %1793 = vmatpush1.msra.mxu0 0.0
    %1794 = vmatprep.subr.mxu0 0.0
    %1795 = vmatpush1.msra.mxu0 0.0
    %1796 = vmatprep.subr.mxu0 0.0
    %1797 = vmatpush1.msra.mxu0 0.0
    %1798 = vmatprep.subr.mxu0 %v1461
    %1799 = vmatpush1.msra.mxu0 %v1460
    %1800 = vmatprep.subr.mxu0 %v1459
    %1801 = vmatpush1.msra.mxu0 %v1458
    %1802 = vmatprep.subr.mxu0 %v1457
    %1803 = vmatpush1.msra.mxu0 %v1456
    %1804 = vmatprep.subr.mxu0 %v1455
    %1805 = vmatpush1.msra.mxu0 %v1454
    %1806 = vmatprep.subr.mxu0 %v1453
    %1807 = vmatpush1.msra.mxu0 %v1452
    %1808 = vmatprep.subr.mxu0 %v1451
    %1809 = vmatpush1.msra.mxu0 %v1450
    %1810 = vmatprep.subr.mxu0 %v1449
    %1811 = vmatpush1.msra.mxu0 %v1448
    %1812 = vmatprep.subr.mxu0 %v1447
    %1813 = vmatpush1.msra.mxu0 %v1446
    %1814 = vmatprep.subr.mxu0 0.0
    %1815 = vmatpush2.msra.mxu0 0.0
    %1816 = vmatprep.subr.mxu0 0.0
    %1817 = vmatpush2.msra.mxu0 0.0
    %1818 = vmatprep.subr.mxu0 0.0
    %1819 = vmatpush2.msra.mxu0 0.0
    %1820 = vmatprep.subr.mxu0 0.0
    %1821 = vmatpush2.msra.mxu0 0.0
    %1822 = vmatprep.subr.mxu0 0.0
    %1823 = vmatpush2.msra.mxu0 0.0
    %1824 = vmatprep.subr.mxu0 0.0
    %1825 = vmatpush2.msra.mxu0 0.0
    %1826 = vmatprep.subr.mxu0 0.0
    %1827 = vmatpush2.msra.mxu0 0.0
    %1828 = vmatprep.subr.mxu0 0.0
    %1829 = vmatpush2.msra.mxu0 0.0
    %1830 = vmatprep.subr.mxu0 0.0
    %1831 = vmatpush2.msra.mxu0 0.0
    %1832 = vmatprep.subr.mxu0 0.0
    %1833 = vmatpush2.msra.mxu0 0.0
    %1834 = vmatprep.subr.mxu0 0.0
    %1835 = vmatpush2.msra.mxu0 0.0
    %1836 = vmatprep.subr.mxu0 0.0
    %1837 = vmatpush2.msra.mxu0 0.0
    %1838 = vmatprep.subr.mxu0 0.0
    %1839 = vmatpush2.msra.mxu0 0.0
    %1840 = vmatprep.subr.mxu0 0.0
    %1841 = vmatpush2.msra.mxu0 0.0
    %1842 = vmatprep.subr.mxu0 0.0
    %1843 = vmatpush2.msra.mxu0 0.0
    %1844 = vmatprep.subr.mxu0 0.0
    %1845 = vmatpush2.msra.mxu0 0.0
    %1846 = vmatprep.mubr.f32.mxu0 0.0
    %1847 = vmatmul.mubr.f32.gmra.mxu0 %v1780
    %v1848 = vpop.f32.mrf.mxu0
    %v1849 = vadd.f32 %v1469, %v1848
    %v1850 = vpop.f32.mrf.mxu0
    %v1851 = vadd.f32 %v1473, %v1850
    %1852 = vdwg.mxu0
    %v1854 = vrot.slane %v1849, 2
    %v1856 = vadd.f32 %v1436, %v1854
    %v1857 = vxor.u32 %v1856, 2147483648
    %v1858 = vmul.f32 %v1857, 1.442695
    %v1859 = vpow.pop %v1858
    %v1860 = vadd.f32 %v1859, 1.0
    %v1861 = vrcp.pop %v1860
    %v1862 = vmul.f32 1.0, %v1861
    %v1864 = vrot.slane %v1851, 2
    %v1866 = vmul.f32 %v1862, %v1864
    %v1867 = vadd.f32 %v1438, %v1866
    %v1868 = vtanh.pop %v1867
    %v1869 = vsub.f32 1.0, %v1862
    %1871 = vrot.lane.b32.xlu0 %v1868, 64
    %v1872 = vpop.permute.xlu0 %1871
    %v1874 = vmul.f32 %v1869, %v1872
    %v1875 = vrot.slane %v1775, 6
    %v1877 = vmul.f32 %v1862, %v1875
    %v1878 = vadd.f32 %v1874, %v1877
    %v1880 = vrot.slane %v1878, 6
    %1881 = vrot.lane.b32.xlu0 %v1880, 64
    %v1882 = vpop.permute.xlu0 %1881
    %v1883 = vsel %vm402, %v1882, 0
    %1885 = vmatprep.subr.mxu0 0.0
    %1886 = vmatpush1.msra.mxu0 0.0
    %1887 = vmatprep.subr.mxu0 0.0
    %1888 = vmatpush1.msra.mxu0 0.0
    %1889 = vmatprep.subr.mxu0 0.0
    %1890 = vmatpush1.msra.mxu0 0.0
    %1891 = vmatprep.subr.mxu0 0.0
    %1892 = vmatpush1.msra.mxu0 0.0
    %1893 = vmatprep.subr.mxu0 0.0
    %1894 = vmatpush1.msra.mxu0 0.0
    %1895 = vmatprep.subr.mxu0 0.0
    %1896 = vmatpush1.msra.mxu0 0.0
    %1897 = vmatprep.subr.mxu0 0.0
    %1898 = vmatpush1.msra.mxu0 0.0
    %1899 = vmatprep.subr.mxu0 0.0
    %1900 = vmatpush1.msra.mxu0 0.0
    %1901 = vmatprep.subr.mxu0 %v1461
    %1902 = vmatpush1.msra.mxu0 %v1460
    %1903 = vmatprep.subr.mxu0 %v1459
    %1904 = vmatpush1.msra.mxu0 %v1458
    %1905 = vmatprep.subr.mxu0 %v1457
    %1906 = vmatpush1.msra.mxu0 %v1456
    %1907 = vmatprep.subr.mxu0 %v1455
    %1908 = vmatpush1.msra.mxu0 %v1454
    %1909 = vmatprep.subr.mxu0 %v1453
    %1910 = vmatpush1.msra.mxu0 %v1452
    %1911 = vmatprep.subr.mxu0 %v1451
    %1912 = vmatpush1.msra.mxu0 %v1450
    %1913 = vmatprep.subr.mxu0 %v1449
    %1914 = vmatpush1.msra.mxu0 %v1448
    %1915 = vmatprep.subr.mxu0 %v1447
    %1916 = vmatpush1.msra.mxu0 %v1446
    %1917 = vmatprep.subr.mxu0 0.0
    %1918 = vmatpush2.msra.mxu0 0.0
    %1919 = vmatprep.subr.mxu0 0.0
    %1920 = vmatpush2.msra.mxu0 0.0
    %1921 = vmatprep.subr.mxu0 0.0
    %1922 = vmatpush2.msra.mxu0 0.0
    %1923 = vmatprep.subr.mxu0 0.0
    %1924 = vmatpush2.msra.mxu0 0.0
    %1925 = vmatprep.subr.mxu0 0.0
    %1926 = vmatpush2.msra.mxu0 0.0
    %1927 = vmatprep.subr.mxu0 0.0
    %1928 = vmatpush2.msra.mxu0 0.0
    %1929 = vmatprep.subr.mxu0 0.0
    %1930 = vmatpush2.msra.mxu0 0.0
    %1931 = vmatprep.subr.mxu0 0.0
    %1932 = vmatpush2.msra.mxu0 0.0
    %1933 = vmatprep.subr.mxu0 0.0
    %1934 = vmatpush2.msra.mxu0 0.0
    %1935 = vmatprep.subr.mxu0 0.0
    %1936 = vmatpush2.msra.mxu0 0.0
    %1937 = vmatprep.subr.mxu0 0.0
    %1938 = vmatpush2.msra.mxu0 0.0
    %1939 = vmatprep.subr.mxu0 0.0
    %1940 = vmatpush2.msra.mxu0 0.0
    %1941 = vmatprep.subr.mxu0 0.0
    %1942 = vmatpush2.msra.mxu0 0.0
    %1943 = vmatprep.subr.mxu0 0.0
    %1944 = vmatpush2.msra.mxu0 0.0
    %1945 = vmatprep.subr.mxu0 0.0
    %1946 = vmatpush2.msra.mxu0 0.0
    %1947 = vmatprep.subr.mxu0 0.0
    %1948 = vmatpush2.msra.mxu0 0.0
    %1949 = vmatprep.mubr.f32.mxu0 0.0
    %1950 = vmatmul.mubr.f32.gmra.mxu0 %v1883
    %v1951 = vpop.f32.mrf.mxu0
    %v1952 = vadd.f32 %v1469, %v1951
    %v1953 = vpop.f32.mrf.mxu0
    %v1954 = vadd.f32 %v1473, %v1953
    %1955 = vdwg.mxu0
    %v1956 = vadd.f32 %v1442, %v1952
    %v1957 = vxor.u32 %v1956, 2147483648
    %v1958 = vmul.f32 %v1957, 1.442695
    %v1959 = vpow.pop %v1958
    %v1960 = vadd.f32 %v1959, 1.0
    %v1961 = vrcp.pop %v1960
    %v1962 = vmul.f32 1.0, %v1961
    %v1963 = vmul.f32 %v1962, %v1954
    %v1964 = vadd.f32 %v1444, %v1963
    %v1965 = vtanh.pop %v1964
    %v1966 = vsub.f32 1.0, %v1962
    %1968 = vrot.lane.b32.xlu0 %v1965, 64
    %v1969 = vpop.permute.xlu0 %1968
    %v1971 = vmul.f32 %v1966, %v1969
    %v1973 = vmul.f32 %v1962, %v1880
    %v1974 = vadd.f32 %v1971, %v1973
    %1976 = vrot.lane.b32.xlu0 %v1974, 64
    %v1977 = vpop.permute.xlu0 %1976
    %v1978 = vsel %vm402, %v1977, 0
    %1980 = vmatprep.subr.mxu0 0.0
    %1981 = vmatpush1.msra.mxu0 0.0
    %1982 = vmatprep.subr.mxu0 0.0
    %1983 = vmatpush1.msra.mxu0 0.0
    %1984 = vmatprep.subr.mxu0 0.0
    %1985 = vmatpush1.msra.mxu0 0.0
    %1986 = vmatprep.subr.mxu0 0.0
    %1987 = vmatpush1.msra.mxu0 0.0
    %1988 = vmatprep.subr.mxu0 0.0
    %1989 = vmatpush1.msra.mxu0 0.0
    %1990 = vmatprep.subr.mxu0 0.0
    %1991 = vmatpush1.msra.mxu0 0.0
    %1992 = vmatprep.subr.mxu0 0.0
    %1993 = vmatpush1.msra.mxu0 0.0
    %1994 = vmatprep.subr.mxu0 0.0
    %1995 = vmatpush1.msra.mxu0 0.0
    %1996 = vmatprep.subr.mxu0 %v1461
    %1997 = vmatpush1.msra.mxu0 %v1460
    %1998 = vmatprep.subr.mxu0 %v1459
    %1999 = vmatpush1.msra.mxu0 %v1458
    %2000 = vmatprep.subr.mxu0 %v1457
    %2001 = vmatpush1.msra.mxu0 %v1456
    %2002 = vmatprep.subr.mxu0 %v1455
    %2003 = vmatpush1.msra.mxu0 %v1454
    %2004 = vmatprep.subr.mxu0 %v1453
    %2005 = vmatpush1.msra.mxu0 %v1452
    %2006 = vmatprep.subr.mxu0 %v1451
    %2007 = vmatpush1.msra.mxu0 %v1450
    %2008 = vmatprep.subr.mxu0 %v1449
    %2009 = vmatpush1.msra.mxu0 %v1448
    %2010 = vmatprep.subr.mxu0 %v1447
    %2011 = vmatpush1.msra.mxu0 %v1446
    %2012 = vmatprep.subr.mxu0 0.0
    %2013 = vmatpush2.msra.mxu0 0.0
    %2014 = vmatprep.subr.mxu0 0.0
    %2015 = vmatpush2.msra.mxu0 0.0
    %2016 = vmatprep.subr.mxu0 0.0
    %2017 = vmatpush2.msra.mxu0 0.0
    %2018 = vmatprep.subr.mxu0 0.0
    %2019 = vmatpush2.msra.mxu0 0.0
    %2020 = vmatprep.subr.mxu0 0.0
    %2021 = vmatpush2.msra.mxu0 0.0
    %2022 = vmatprep.subr.mxu0 0.0
    %2023 = vmatpush2.msra.mxu0 0.0
    %2024 = vmatprep.subr.mxu0 0.0
    %2025 = vmatpush2.msra.mxu0 0.0
    %2026 = vmatprep.subr.mxu0 0.0
    %2027 = vmatpush2.msra.mxu0 0.0
    %2028 = vmatprep.subr.mxu0 0.0
    %2029 = vmatpush2.msra.mxu0 0.0
    %2030 = vmatprep.subr.mxu0 0.0
    %2031 = vmatpush2.msra.mxu0 0.0
    %2032 = vmatprep.subr.mxu0 0.0
    %2033 = vmatpush2.msra.mxu0 0.0
    %2034 = vmatprep.subr.mxu0 0.0
    %2035 = vmatpush2.msra.mxu0 0.0
    %2036 = vmatprep.subr.mxu0 0.0
    %2037 = vmatpush2.msra.mxu0 0.0
    %2038 = vmatprep.subr.mxu0 0.0
    %2039 = vmatpush2.msra.mxu0 0.0
    %2040 = vmatprep.subr.mxu0 0.0
    %2041 = vmatpush2.msra.mxu0 0.0
    %2042 = vmatprep.subr.mxu0 0.0
    %2043 = vmatpush2.msra.mxu0 0.0
    %2044 = vmatprep.mubr.f32.mxu0 0.0
    %2045 = vmatmul.mubr.f32.gmra.mxu0 %v1978
    %v2046 = vpop.f32.mrf.mxu0
    %v2047 = vadd.f32 %v1469, %v2046
    %v2048 = vpop.f32.mrf.mxu0
    %v2049 = vadd.f32 %v1473, %v2048
    %2050 = vdwg.mxu0
    %v2052 = vrot.slane %v2047, 6
    %v2054 = vadd.f32 %v1442, %v2052
    %v2055 = vxor.u32 %v2054, 2147483648
    %v2056 = vmul.f32 %v2055, 1.442695
    %v2057 = vpow.pop %v2056
    %v2058 = vadd.f32 %v2057, 1.0
    %v2059 = vrcp.pop %v2058
    %v2060 = vmul.f32 1.0, %v2059
    %v2062 = vrot.slane %v2049, 6
    %v2064 = vmul.f32 %v2060, %v2062
    %v2065 = vadd.f32 %v1444, %v2064
    %v2066 = vtanh.pop %v2065
    %v2067 = vsub.f32 1.0, %v2060
    %2069 = vrot.lane.b32.xlu0 %v2066, 64
    %v2070 = vpop.permute.xlu0 %2069
    %v2072 = vmul.f32 %v2067, %v2070
    %v2073 = vrot.slane %v1974, 6
    %v2075 = vmul.f32 %v2060, %v2073
    %v2076 = vadd.f32 %v2072, %v2075
    %v2078 = vrot.slane %v2076, 2
    %2079 = vrot.lane.b32.xlu0 %v2078, 64
    %v2080 = vpop.permute.xlu0 %2079
    %v2081 = vsel %vm402, %v2080, 0
    %2083 = vmatprep.subr.mxu0 0.0
    %2084 = vmatpush1.msra.mxu0 0.0
    %2085 = vmatprep.subr.mxu0 0.0
    %2086 = vmatpush1.msra.mxu0 0.0
    %2087 = vmatprep.subr.mxu0 0.0
    %2088 = vmatpush1.msra.mxu0 0.0
    %2089 = vmatprep.subr.mxu0 0.0
    %2090 = vmatpush1.msra.mxu0 0.0
    %2091 = vmatprep.subr.mxu0 0.0
    %2092 = vmatpush1.msra.mxu0 0.0
    %2093 = vmatprep.subr.mxu0 0.0
    %2094 = vmatpush1.msra.mxu0 0.0
    %2095 = vmatprep.subr.mxu0 0.0
    %2096 = vmatpush1.msra.mxu0 0.0
    %2097 = vmatprep.subr.mxu0 0.0
    %2098 = vmatpush1.msra.mxu0 0.0
    %2099 = vmatprep.subr.mxu0 %v1461
    %2100 = vmatpush1.msra.mxu0 %v1460
    %2101 = vmatprep.subr.mxu0 %v1459
    %2102 = vmatpush1.msra.mxu0 %v1458
    %2103 = vmatprep.subr.mxu0 %v1457
    %2104 = vmatpush1.msra.mxu0 %v1456
    %2105 = vmatprep.subr.mxu0 %v1455
    %2106 = vmatpush1.msra.mxu0 %v1454
    %2107 = vmatprep.subr.mxu0 %v1453
    %2108 = vmatpush1.msra.mxu0 %v1452
    %2109 = vmatprep.subr.mxu0 %v1451
    %2110 = vmatpush1.msra.mxu0 %v1450
    %2111 = vmatprep.subr.mxu0 %v1449
    %2112 = vmatpush1.msra.mxu0 %v1448
    %2113 = vmatprep.subr.mxu0 %v1447
    %2114 = vmatpush1.msra.mxu0 %v1446
    %2115 = vmatprep.subr.mxu0 0.0
    %2116 = vmatpush2.msra.mxu0 0.0
    %2117 = vmatprep.subr.mxu0 0.0
    %2118 = vmatpush2.msra.mxu0 0.0
    %2119 = vmatprep.subr.mxu0 0.0
    %2120 = vmatpush2.msra.mxu0 0.0
    %2121 = vmatprep.subr.mxu0 0.0
    %2122 = vmatpush2.msra.mxu0 0.0
    %2123 = vmatprep.subr.mxu0 0.0
    %2124 = vmatpush2.msra.mxu0 0.0
    %2125 = vmatprep.subr.mxu0 0.0
    %2126 = vmatpush2.msra.mxu0 0.0
    %2127 = vmatprep.subr.mxu0 0.0
    %2128 = vmatpush2.msra.mxu0 0.0
    %2129 = vmatprep.subr.mxu0 0.0
    %2130 = vmatpush2.msra.mxu0 0.0
    %2131 = vmatprep.subr.mxu0 0.0
    %2132 = vmatpush2.msra.mxu0 0.0
    %2133 = vmatprep.subr.mxu0 0.0
    %2134 = vmatpush2.msra.mxu0 0.0
    %2135 = vmatprep.subr.mxu0 0.0
    %2136 = vmatpush2.msra.mxu0 0.0
    %2137 = vmatprep.subr.mxu0 0.0
    %2138 = vmatpush2.msra.mxu0 0.0
    %2139 = vmatprep.subr.mxu0 0.0
    %2140 = vmatpush2.msra.mxu0 0.0
    %2141 = vmatprep.subr.mxu0 0.0
    %2142 = vmatpush2.msra.mxu0 0.0
    %2143 = vmatprep.subr.mxu0 0.0
    %2144 = vmatpush2.msra.mxu0 0.0
    %2145 = vmatprep.subr.mxu0 0.0
    %2146 = vmatpush2.msra.mxu0 0.0
    %2147 = vmatprep.mubr.f32.mxu0 0.0
    %2148 = vmatmul.mubr.f32.gmra.mxu0 %v2081
    %v2149 = vpop.f32.mrf.mxu0
    %v2150 = vadd.f32 %v1469, %v2149
    %v2151 = vpop.f32.mrf.mxu0
    %v2152 = vadd.f32 %v1473, %v2151
    %2153 = vdwg.mxu0
    %v2155 = vrot.slane %v2150, 4
    %v2157 = vadd.f32 %v1442, %v2155
    %v2158 = vxor.u32 %v2157, 2147483648
    %v2159 = vmul.f32 %v2158, 1.442695
    %v2160 = vpow.pop %v2159
    %v2161 = vadd.f32 %v2160, 1.0
    %v2162 = vrcp.pop %v2161
    %v2163 = vmul.f32 1.0, %v2162
    %v2165 = vrot.slane %v2152, 4
    %v2167 = vmul.f32 %v2163, %v2165
    %v2168 = vadd.f32 %v1444, %v2167
    %v2169 = vtanh.pop %v2168
    %v2170 = vsub.f32 1.0, %v2163
    %2172 = vrot.lane.b32.xlu0 %v2169, 64
    %v2173 = vpop.permute.xlu0 %2172
    %v2175 = vmul.f32 %v2170, %v2173
    %v2176 = vrot.slane %v2076, 6
    %v2178 = vmul.f32 %v2163, %v2176
    %v2179 = vadd.f32 %v2175, %v2178
    %v2181 = vrot.slane %v2179, 4
    %2182 = vrot.lane.b32.xlu0 %v2181, 64
    %v2183 = vpop.permute.xlu0 %2182
    %v2184 = vsel %vm402, %v2183, 0
    %2186 = vmatprep.subr.mxu0 0.0
    %2187 = vmatpush1.msra.mxu0 0.0
    %2188 = vmatprep.subr.mxu0 0.0
    %2189 = vmatpush1.msra.mxu0 0.0
    %2190 = vmatprep.subr.mxu0 0.0
    %2191 = vmatpush1.msra.mxu0 0.0
    %2192 = vmatprep.subr.mxu0 0.0
    %2193 = vmatpush1.msra.mxu0 0.0
    %2194 = vmatprep.subr.mxu0 0.0
    %2195 = vmatpush1.msra.mxu0 0.0
    %2196 = vmatprep.subr.mxu0 0.0
    %2197 = vmatpush1.msra.mxu0 0.0
    %2198 = vmatprep.subr.mxu0 0.0
    %2199 = vmatpush1.msra.mxu0 0.0
    %2200 = vmatprep.subr.mxu0 0.0
    %2201 = vmatpush1.msra.mxu0 0.0
    %2202 = vmatprep.subr.mxu0 %v1461
    %2203 = vmatpush1.msra.mxu0 %v1460
    %2204 = vmatprep.subr.mxu0 %v1459
    %2205 = vmatpush1.msra.mxu0 %v1458
    %2206 = vmatprep.subr.mxu0 %v1457
    %2207 = vmatpush1.msra.mxu0 %v1456
    %2208 = vmatprep.subr.mxu0 %v1455
    %2209 = vmatpush1.msra.mxu0 %v1454
    %2210 = vmatprep.subr.mxu0 %v1453
    %2211 = vmatpush1.msra.mxu0 %v1452
    %2212 = vmatprep.subr.mxu0 %v1451
    %2213 = vmatpush1.msra.mxu0 %v1450
    %2214 = vmatprep.subr.mxu0 %v1449
    %2215 = vmatpush1.msra.mxu0 %v1448
    %2216 = vmatprep.subr.mxu0 %v1447
    %2217 = vmatpush1.msra.mxu0 %v1446
    %2218 = vmatprep.subr.mxu0 0.0
    %2219 = vmatpush2.msra.mxu0 0.0
    %2220 = vmatprep.subr.mxu0 0.0
    %2221 = vmatpush2.msra.mxu0 0.0
    %2222 = vmatprep.subr.mxu0 0.0
    %2223 = vmatpush2.msra.mxu0 0.0
    %2224 = vmatprep.subr.mxu0 0.0
    %2225 = vmatpush2.msra.mxu0 0.0
    %2226 = vmatprep.subr.mxu0 0.0
    %2227 = vmatpush2.msra.mxu0 0.0
    %2228 = vmatprep.subr.mxu0 0.0
    %2229 = vmatpush2.msra.mxu0 0.0
    %2230 = vmatprep.subr.mxu0 0.0
    %2231 = vmatpush2.msra.mxu0 0.0
    %2232 = vmatprep.subr.mxu0 0.0
    %2233 = vmatpush2.msra.mxu0 0.0
    %2234 = vmatprep.subr.mxu0 0.0
    %2235 = vmatpush2.msra.mxu0 0.0
    %2236 = vmatprep.subr.mxu0 0.0
    %2237 = vmatpush2.msra.mxu0 0.0
    %2238 = vmatprep.subr.mxu0 0.0
    %2239 = vmatpush2.msra.mxu0 0.0
    %2240 = vmatprep.subr.mxu0 0.0
    %2241 = vmatpush2.msra.mxu0 0.0
    %2242 = vmatprep.subr.mxu0 0.0
    %2243 = vmatpush2.msra.mxu0 0.0
    %2244 = vmatprep.subr.mxu0 0.0
    %2245 = vmatpush2.msra.mxu0 0.0
    %2246 = vmatprep.subr.mxu0 0.0
    %2247 = vmatpush2.msra.mxu0 0.0
    %2248 = vmatprep.subr.mxu0 0.0
    %2249 = vmatpush2.msra.mxu0 0.0
    %2250 = vmatprep.mubr.f32.mxu0 0.0
    %2251 = vmatmul.mubr.f32.gmra.mxu0 %v2184
    %v2252 = vpop.f32.mrf.mxu0
    %v2253 = vadd.f32 %v1469, %v2252
    %v2254 = vpop.f32.mrf.mxu0
    %v2255 = vadd.f32 %v1473, %v2254
    %2256 = vdwg.mxu0
    %v2258 = vrot.slane %v2253, 2
    %v2260 = vadd.f32 %v1442, %v2258
    %v2261 = vxor.u32 %v2260, 2147483648
    %v2262 = vmul.f32 %v2261, 1.442695
    %v2263 = vpow.pop %v2262
    %v2264 = vadd.f32 %v2263, 1.0
    %v2265 = vrcp.pop %v2264
    %v2266 = vmul.f32 1.0, %v2265
    %v2268 = vrot.slane %v2255, 2
    %v2270 = vmul.f32 %v2266, %v2268
    %v2271 = vadd.f32 %v1444, %v2270
    %v2272 = vtanh.pop %v2271
    %v2273 = vsub.f32 1.0, %v2266
    %2275 = vrot.lane.b32.xlu0 %v2272, 64
    %v2276 = vpop.permute.xlu0 %2275
    %v2278 = vmul.f32 %v2273, %v2276
    %v2279 = vrot.slane %v2179, 6
    %v2281 = vmul.f32 %v2266, %v2279
    %v2282 = vadd.f32 %v2278, %v2281
    %2284 = vrot.lane.b32.xlu0 %v1321, 64
    %v2285 = vpop.permute.xlu0 %2284
    %vm2287 = vcmask 523270
    %2288 = vst.msk [vmem:[#allocation20 - $0x6] sm:$0xc0] %vm2287, %v2285
    %2290 = vrot.lane.b32.xlu0 %v2282, 64
    %v2291 = vpop.permute.xlu0 %2290
    %s2293 = scalar_lea.vmem [#allocation20], 2
    %2294 = vst.msk [vmem:[%s2293 - $0x6] sm:$0xc0] %vm2287, %v2291
    %v2295 = vld [vmem:[%s13] sm:$0xff]
    %v2296 = vld [vmem:[%s13 + $0x8] sm:$0xff]
    %v2297 = vld [vmem:[%s13 + $0x10] sm:$0xff]
    %v2298 = vld [vmem:[%s13 + $0x18] sm:$0xff]
    %v2299 = vld [vmem:[%s13 + $0x20] sm:$0xff]
    %v2300 = vld [vmem:[%s13 + $0x28] sm:$0xff]
    %v2301 = vld [vmem:[%s13 + $0x30] sm:$0xff]
    %v2302 = vld [vmem:[%s13 + $0x38] sm:$0xff]
    %v2303 = vld [vmem:[#allocation16] sm:$0x1]
    %v2305 = vlaneseq
    %v2306 = vshrl.u32 %v2305, 7
    %v2307 = vsub.s32 0, %v2306
    %v2308 = vrot.slane %v2303, %v2307
    %v2310 = vrot.slane %v2282, 6
    %2311 = vrot.lane.b32.xlu0 %v2310, 64
    %v2312 = vpop.permute.xlu0 %2311
    %v2313 = vsel %vm402, %v2312, 0
    %2315 = vmatprep.subr.mxu0 0.0
    %2316 = vmatpush1.msra.mxu0 0.0
    %2317 = vmatprep.subr.mxu0 0.0
    %2318 = vmatpush1.msra.mxu0 0.0
    %2319 = vmatprep.subr.mxu0 0.0
    %2320 = vmatpush1.msra.mxu0 0.0
    %2321 = vmatprep.subr.mxu0 0.0
    %2322 = vmatpush1.msra.mxu0 0.0
    %2323 = vmatprep.subr.mxu0 0.0
    %2324 = vmatpush1.msra.mxu0 0.0
    %2325 = vmatprep.subr.mxu0 0.0
    %2326 = vmatpush1.msra.mxu0 0.0
    %2327 = vmatprep.subr.mxu0 0.0
    %2328 = vmatpush1.msra.mxu0 0.0
    %2329 = vmatprep.subr.mxu0 0.0
    %2330 = vmatpush1.msra.mxu0 0.0
    %2331 = vmatprep.subr.mxu0 0.0
    %2332 = vmatpush1.msra.mxu0 %v2302
    %2333 = vmatprep.subr.mxu0 0.0
    %2334 = vmatpush1.msra.mxu0 %v2301
    %2335 = vmatprep.subr.mxu0 0.0
    %2336 = vmatpush1.msra.mxu0 %v2300
    %2337 = vmatprep.subr.mxu0 0.0
    %2338 = vmatpush1.msra.mxu0 %v2299
    %2339 = vmatprep.subr.mxu0 0.0
    %2340 = vmatpush1.msra.mxu0 %v2298
    %2341 = vmatprep.subr.mxu0 0.0
    %2342 = vmatpush1.msra.mxu0 %v2297
    %2343 = vmatprep.subr.mxu0 0.0
    %2344 = vmatpush1.msra.mxu0 %v2296
    %2345 = vmatprep.subr.mxu0 0.0
    %2346 = vmatpush1.msra.mxu0 %v2295
    %2347 = vmatprep.subr.mxu0 0.0
    %2348 = vmatpush2.msra.mxu0 0.0
    %2349 = vmatprep.subr.mxu0 0.0
    %2350 = vmatpush2.msra.mxu0 0.0
    %2351 = vmatprep.subr.mxu0 0.0
    %2352 = vmatpush2.msra.mxu0 0.0
    %2353 = vmatprep.subr.mxu0 0.0
    %2354 = vmatpush2.msra.mxu0 0.0
    %2355 = vmatprep.subr.mxu0 0.0
    %2356 = vmatpush2.msra.mxu0 0.0
    %2357 = vmatprep.subr.mxu0 0.0
    %2358 = vmatpush2.msra.mxu0 0.0
    %2359 = vmatprep.subr.mxu0 0.0
    %2360 = vmatpush2.msra.mxu0 0.0
    %2361 = vmatprep.subr.mxu0 0.0
    %2362 = vmatpush2.msra.mxu0 0.0
    %2363 = vmatprep.subr.mxu0 0.0
    %2364 = vmatpush2.msra.mxu0 0.0
    %2365 = vmatprep.subr.mxu0 0.0
    %2366 = vmatpush2.msra.mxu0 0.0
    %2367 = vmatprep.subr.mxu0 0.0
    %2368 = vmatpush2.msra.mxu0 0.0
    %2369 = vmatprep.subr.mxu0 0.0
    %2370 = vmatpush2.msra.mxu0 0.0
    %2371 = vmatprep.subr.mxu0 0.0
    %2372 = vmatpush2.msra.mxu0 0.0
    %2373 = vmatprep.subr.mxu0 0.0
    %2374 = vmatpush2.msra.mxu0 0.0
    %2375 = vmatprep.subr.mxu0 0.0
    %2376 = vmatpush2.msra.mxu0 0.0
    %2377 = vmatprep.subr.mxu0 0.0
    %2378 = vmatpush2.msra.mxu0 0.0
    %2379 = vmatprep.mubr.f32.mxu0 0.0
    %2380 = vmatmul.mubr.f32.gmra.mxu0 %v2313
    %v2381 = vpop.f32.mrf.mxu0
    %v2382 = vadd.f32 %v2308, %v2381
    %v2383 = vpop.f32.mrf.mxu0
    %2384 = vdwg.mxu0
    %vm2385 = vcmask 25600
    %2386 = vst.msk [vmem:[#allocation19] sm:$0x3] %vm2385, %v2382
    // Predicated region
    $region106: #{gru_model_forward.1} parent=1 // pred_check
      _
    $region107: #{gru_model_forward.1} parent=1 // pred_check_branch
      %2388 = sbr.rel (0) target = $region109
    $region108: #{gru_model_forward.1} parent=1 // pred_region
      %s2390 = ssub.s32 32, 32
      %2391 = vsyncadd [#allocation4], %s2390
      %s2393 = sshll.u32 [#allocation19], 4
      %s2394 = int_to_ptr.vmem [resolvable:$true] %s2393
      %2396 = dma.vmem_to_hbm [thread:$0]  %s2394, 32, %s16, [#allocation4]
    $region109: #{gru_model_forward.1} parent=1 // pred_fallthru
      _
    // Predicated region
    $region110: #{gru_model_forward.1} parent=1 // pred_check
      _
    $region111: #{gru_model_forward.1} parent=1 // pred_check_branch
      %2398 = sbr.rel (0) target = $region113
    $region112: #{gru_model_forward.1} parent=1 // pred_region
      %s2400 = ssub.s32 64, 64
      %2401 = vsyncadd [#allocation21], %s2400
      %s2402 = sshll.u32 [#allocation20], 4
      %s2403 = int_to_ptr.vmem [resolvable:$true] %s2402
      %2408 = dma.vmem_to_hbm [thread:$0]  %s2403, 64, %s17, [#allocation21], 32, 32, 2
    $region113: #{gru_model_forward.1} parent=1 // pred_fallthru
      _
    // Predicated region
    $region114: #{gru_model_forward.1} parent=1 // pred_check
      _
    $region115: #{gru_model_forward.1} parent=1 // pred_check_branch
      %2410 = sbr.rel (0) target = $region117
    $region116: #{gru_model_forward.1} parent=1 // pred_region
      %2411 = dma.done [#allocation4], 32
    $region117: #{gru_model_forward.1} parent=1 // pred_fallthru
      _
    // Predicated region
    $region118: #{gru_model_forward.1} parent=1 // pred_check
      _
    $region119: #{gru_model_forward.1} parent=1 // pred_check_branch
      %2413 = sbr.rel (0) target = $region121
    $region120: #{gru_model_forward.1} parent=1 // pred_region
      %2414 = dma.done [#allocation21], 64
    $region121: #{gru_model_forward.1} parent=1 // pred_fallthru
      _
    %2415 = vsyncpa [#allocation3], 1
    %2416 = vsyncpa [#allocation6], 1
    %2417 = vsyncpa [#allocation9], 1
    %2418 = vsyncpa [#allocation12], 1
    %2419 = vsyncpa [#allocation15], 1
    %2420 = vsyncpa [#allocation18], 1
    %2421 = vsyncpa [#allocation4], 1
    %2422 = vsyncpa [#allocation21], 1

</llo_original>
